<compile_context>
chip_gen: v7x
topology: tpu7x:2x2x1
jax: 0.10.0
libtpu: 0.0.40
codegen_flags: <defaults>
</compile_context>

<pallas_src>
import functools

import jax
import jax.numpy as jnp
from jax.experimental import pallas as pl
from jax.experimental.pallas import tpu as pltpu


# Double-buffered (in + out) tile budget plus one intermediate, and the
# scoped-VMEM request.  Sized for the smallest VMEM of the three targets
# (v7x: 64 MiB physical); on v5e/v6e this is still far past the tile-size
# knee where a mem-bound kernel reaches ~85% of HBM roofline.
_VMEM_TILE_BUDGET = 24 * 1024 * 1024
_VMEM_LIMIT_BYTES = 40 * 1024 * 1024


def _nearest_upsample_kernel(x_ref, o_ref, *, sh, sw):
    # x_ref: (C_BLK, H_BLK, W) VMEM tile, o_ref: (C_BLK, H_BLK*sh, W*sw) tile.
    x = x_ref[...]
    c, h, w = x.shape
    # Nearest-neighbour = pure replication: broadcast each element sh times
    # along rows (sublanes) and sw times along columns (lanes), then merge the
    # (H, sh) and (W, sw) pairs.  This exact pattern is the hardware-validated
    # lowering from the previous revision; the XLU shuffle work it implies
    # hides under the output DMA (the kernel is purely memory bound).
    y = jnp.broadcast_to(x[:, :, None, :, None], (c, h, sh, w, sw))
    o_ref[...] = y.reshape(c, h * sh, w * sw)


def _divisors_desc(n):
    return [d for d in range(n, 0, -1) if n % d == 0]


def _choose_blocks(nc, h, w, sh, sw, itemsize, budget=_VMEM_TILE_BUDGET):
    """Pick (C_BLK, H_BLK) so the working set fits the VMEM `budget`."""

    # Packed sublane count: 8 rows for 32-bit, 16 for 16-bit, 32 for 8-bit.
    sub = 8 * max(1, 4 // itemsize)

    def footprint(c_blk, h_blk):
        in_b = c_blk * h_blk * w * itemsize
        out_b = c_blk * (h_blk * sh) * (w * sw) * itemsize
        # x2: Pallas double-buffers each operand.  +out_b: the broadcast
        # intermediate inside the kernel is roughly one output tile.
        return 2 * (in_b + out_b) + out_b

    # H tiling: prefer the full plane; otherwise sublane-multiple divisors of
    # H (keeps the (sublane, 128) layout rule satisfied for in and out blocks).
    h_divs = sorted((d for d in range(sub, h, sub) if h % d == 0), reverse=True)
    h_cands = [h] + h_divs
    h_blk = h_cands[-1]
    for cand in h_cands:
        if footprint(1, cand) <= budget:
            h_blk = cand
            break
    h_steps = h // h_blk

    # Channel batching (the big lever): largest divisor of N*C fitting the
    # budget.  Only force a split over N*C (>= 2 grid steps for v7x's two
    # TensorCores on the "parallel" axes) when H tiling does not already
    # provide multiple steps.
    c_cap = nc if (nc < 2 or h_steps >= 2) else max(1, nc // 2)
    c_blk = 1
    for d in _divisors_desc(nc):
        if d <= c_cap and footprint(d, h_blk) <= budget:
            c_blk = d
            break
    return c_blk, h_blk


def upsample_nearest(x, scale_factor=2):
    """Equivalent of Upsample(scale_factor=s, mode='nearest')(x) for NCHW x."""
    if isinstance(scale_factor, (tuple, list)):
        assert len(scale_factor) == 2, "expected per-spatial-axis (sh, sw)"
        sh_f, sw_f = scale_factor
    else:
        sh_f = sw_f = scale_factor
    sh, sw = int(sh_f), int(sw_f)
    # Non-integer scales follow a floor(out_idx / scale) rule that is NOT pure
    # replication -- reject instead of silently truncating.
    assert float(sh_f) == float(sh) and float(sw_f) == float(sw) \
        and sh >= 1 and sw >= 1, \
        "only positive integer nearest-neighbour scale factors are supported"

    if sh == 1 and sw == 1:          # identity: no data movement needed
        return x

    N, C, H, W = x.shape
    NC = N * C
    itemsize = jnp.dtype(x.dtype).itemsize
    c_blk, h_blk = _choose_blocks(NC, H, W, sh, sw, itemsize)

    x2 = x.reshape(NC, H, W)            # metadata-only reshape at JAX level
    grid = (NC // c_blk, H // h_blk)
    bytes_accessed = NC * H * W * itemsize * (1 + sh * sw)

    out = pl.pallas_call(
        functools.partial(_nearest_upsample_kernel, sh=sh, sw=sw),
        out_shape=jax.ShapeDtypeStruct((NC, H * sh, W * sw), x.dtype),
        grid=grid,
        in_specs=[pl.BlockSpec((c_blk, h_blk, W), lambda i, j: (i, j, 0))],
        out_specs=pl.BlockSpec((c_blk, h_blk * sh, W * sw),
                               lambda i, j: (i, j, 0)),
        compiler_params=pltpu.CompilerParams(
            dimension_semantics=("parallel", "parallel"),
            vmem_limit_bytes=_VMEM_LIMIT_BYTES),
        cost_estimate=pl.CostEstimate(
            flops=0, transcendentals=0, bytes_accessed=bytes_accessed),
    )(x2)
    return out.reshape(N, C, H * sh, W * sw)


if __name__ == "__main__":
    key = jax.random.PRNGKey(0)
    N, C, H, W = 2, 4, 16, 16
    scale = 2
    x = jax.random.normal(key, (N, C, H, W), dtype=jnp.float32)

    y = upsample_nearest(x, scale_factor=scale)
    y = jax.block_until_ready(y)

    # Reference: pure-JAX nearest upsample (== torch F.interpolate 'nearest'
    # with integer scale factor).
    ref = jnp.repeat(jnp.repeat(x, scale, axis=2), scale, axis=3)

    assert y.shape == (N, C, H * scale, W * scale), y.shape
    assert y.dtype == x.dtype, y.dtype
    assert jnp.array_equal(y, ref), "mismatch vs reference nearest upsample"

    print("KERNEL_OK")
</pallas_src>

<mosaic_0001>
module attributes {stable_mosaic.version = 11 : i64} {
  func.func @_nearest_upsample_kernel(%arg0: i32, %arg1: i32, %arg2: memref<4x16x16xf32, #tpu.memory_space<vmem>>, %arg3: memref<4x32x32xf32, #tpu.memory_space<vmem>>) attributes {dimension_semantics = [#tpu.dimension_semantics<parallel>, #tpu.dimension_semantics<parallel>], iteration_bounds = array<i64: 2, 1>, scalar_prefetch = 0 : i64, scratch_operands = 0 : i64, tpu.core_type = #tpu.core_type<tc>, window_params = [{transform_indices = @transform_0, window_bounds = array<i64: 4, 16, 16>}, {transform_indices = @transform_1, window_bounds = array<i64: 4, 32, 32>}]} {
    %c0 = arith.constant 0 : index
    %c0_0 = arith.constant 0 : index
    %c0_1 = arith.constant 0 : index
    %0 = vector.load %arg2[%c0, %c0_0, %c0_1] : memref<4x16x16xf32, #tpu.memory_space<vmem>>, vector<4x16x16xf32>
    %1 = vector.shape_cast %0 : vector<4x16x16xf32> to vector<4x16x1x16x1xf32>
    %2 = vector.shape_cast %1 : vector<4x16x1x16x1xf32> to vector<4x16x1x16x1xf32>
    %3 = vector.broadcast %2 : vector<4x16x1x16x1xf32> to vector<4x16x2x16x2xf32>
    %4 = vector.shape_cast %3 : vector<4x16x2x16x2xf32> to vector<4x32x32xf32>
    %c0_2 = arith.constant 0 : index
    %c0_3 = arith.constant 0 : index
    %c0_4 = arith.constant 0 : index
    %5 = vector.load %arg3[%c0_2, %c0_3, %c0_4] : memref<4x32x32xf32, #tpu.memory_space<vmem>>, vector<4x32x32xf32>
    tpu.vector_store %arg3[%c0_2, %c0_3, %c0_4], %4 {strides = array<i32>} : memref<4x32x32xf32, #tpu.memory_space<vmem>>, vector<4x32x32xf32>,
    return
  }
  func.func @transform_0(%arg0: i32, %arg1: i32) -> (i32, i32, i32) {
    %c0_i32 = arith.constant 0 : i32
    %c0_i32_0 = arith.constant 0 : i32
    return %arg0, %arg1, %c0_i32 : i32, i32, i32
  }
  func.func @transform_1(%arg0: i32, %arg1: i32) -> (i32, i32, i32) {
    %c0_i32 = arith.constant 0 : i32
    %c0_i32_0 = arith.constant 0 : i32
    return %arg0, %arg1, %c0_i32 : i32, i32, i32
  }
}

</mosaic_0001>

<llo_original>
// kernel: tpu_custom_call.1
$region0: #{tpu_custom_call.1}
  #allocation0 [shape = 'u32[]', space=smem, size = 0x4, offset = 0x4, fixed_abs, tag = 'smem constant byte address 0x4 - core index']
  #allocation1 [shape = 'u32[144,128]{1,0:T(1,128)}', space=vmem, size = 0x12000, scoped, tag = 'internal scratch']
  %s0 = inlined_call_operand.hbm [shape: f32[8,16,16], index: 0, kind: input, shape index: {}]
  %s1 = inlined_call_operand.hbm [shape: f32[8,32,32], index: 1, kind: output, shape index: {}]
  %s2 = sld [smem:[#allocation0]]
  $region41: #{tpu_custom_call.1} parent=0
    _
  %s4 = ssub.s32 1, %s2
  %s5 = scalar_select 0, %s4, %s2
  $region1: #{tpu_custom_call.1} parent=0
    #allocation2 [shape = 'u8[65536]{0}', space=vmem, size = 0x10000, scoped, tag = 'input window, operand 0']
    #allocation3 [shape = 's32[2]{0}', space=sflag, size = 0x8, scoped, tag = 'scoped memory for tpu_custom_call.1']
    #allocation4 [shape = 's32[2]{0}', space=sflag, size = 0x8, scoped, tag = 'scoped memory for tpu_custom_call.1']
    #allocation5 [shape = 'u8[131072]{0}', space=vmem, size = 0x20000, scoped, tag = 'output window, operand 0']
    %6 = vsyncpa [#allocation3], 0
    %s7 = scalar_lea.sflag [#allocation3], 1
    %8 = vsyncpa %s7, 0
    %9 = vsyncpa [#allocation4], 0
    %s10 = scalar_lea.sflag [#allocation4], 1
    %11 = vsyncpa %s10, 0
    loop: start=0, step=1, limit=4
    $region2: #{tpu_custom_call.1} parent=1 // loop_pre_header
      _
    $region3: #{tpu_custom_call.1} parent=1 // loop_header
      %s13 = sphi 0, %s17
      %p14 = scmp.ge.s32.totalorder %s13, 4
      %s20 = sphi 0, %s32
      %s21 = sphi 0, %s28
      %s22 = sphi 0, %s20
      %s23 = sphi 0, %s21
      %s24 = sphi 0, %s22
      %s25 = sphi 0, %s23
      %s37 = sphi 0, %s39
      %s40 = sphi 0, %s37
      %s41 = sphi 0, %s40
      %s57 = sphi 0, %s41
      %s65 = sphi 0, %s67
      %s68 = sphi 0, %s65
      %s69 = sphi 0, %s68
      %s85 = sphi 0, %s69
    $region4: #{tpu_custom_call.1} parent=1 // loop_header_branch
      %16 = sbr.rel (%p14) target = $region8
    $region5: #{tpu_custom_call.1} parent=1 // loop_body
      %s18 = ssub.s32 %s13, 1
      %s19 = ssub.s32 %s13, 2
      %s26 = sadd.s32 1, %s21
      %p27 = scmp.ge.s32.totalorder %s26, 1
      %s28 = scalar_select %p27, 0, %s26
      %s29 = sadd.s32 1, %s20
      %s30 = scalar_select %p27, %s29, %s20
      %p31 = scmp.ge.s32.totalorder %s30, 2
      %s32 = scalar_select %p31, 0, %s30
      %s33 = ssub.s32 %s20, %s32
      %s34 = ssub.s32 %s21, %s28
      %s35 = sor.u32 %s33, %s34
      %p36 = scmp.eq.s32.totalorder %s35, 0
      %s38 = sadd.s32 %s37, 1
      %s39 = scalar_select %p36, %s37, %s38
      %p42 = pneg %p36
      %p43 = scmp.eq.s32.totalorder %s13, 1
      %p44 = por %p42, %p43
      %p45 = scmp.ne.s32.totalorder %s37, %s40
      %p46 = scmp.eq.s32.totalorder %s13, 0
      %p47 = por %p45, %p46
      %p48 = scmp.ne.s32.totalorder %s37, %s40
      %p49 = scmp.eq.s32.totalorder %s18, 1
      %p50 = por %p48, %p49
      %p51 = scmp.ne.s32.totalorder %s40, %s41
      %p52 = scmp.eq.s32.totalorder %s18, 0
      %p53 = por %p51, %p52
      %p54 = scmp.ne.s32.totalorder %s40, %s41
      %p55 = scmp.eq.s32.totalorder %s19, 1
      %p56 = por %p54, %p55
      %p58 = scmp.ne.s32.totalorder %s41, %s57
      %p59 = scmp.eq.s32.totalorder %s19, 0
      %p60 = por %p58, %p59
      %s61 = ssub.s32 %s20, %s32
      %s62 = ssub.s32 %s21, %s28
      %s63 = sor.u32 %s61, %s62
      %p64 = scmp.eq.s32.totalorder %s63, 0
      %s66 = sadd.s32 %s65, 1
      %s67 = scalar_select %p64, %s65, %s66
      %p70 = pneg %p64
      %p71 = scmp.eq.s32.totalorder %s13, 1
      %p72 = por %p70, %p71
      %p73 = scmp.ne.s32.totalorder %s65, %s68
      %p74 = scmp.eq.s32.totalorder %s13, 0
      %p75 = por %p73, %p74
      %p76 = scmp.ne.s32.totalorder %s65, %s68
      %p77 = scmp.eq.s32.totalorder %s18, 1
      %p78 = por %p76, %p77
      %p79 = scmp.ne.s32.totalorder %s68, %s69
      %p80 = scmp.eq.s32.totalorder %s18, 0
      %p81 = por %p79, %p80
      %p82 = scmp.ne.s32.totalorder %s68, %s69
      %p83 = scmp.eq.s32.totalorder %s19, 1
      %p84 = por %p82, %p83
      %p86 = scmp.ne.s32.totalorder %s69, %s85
      %p87 = scmp.eq.s32.totalorder %s19, 0
      %p88 = por %p86, %p87
      %p89 = scmp.le.s32.totalorder 1, %s13
      %p90 = scmp.lt.s32.totalorder %s13, 3
      %p91 = pnand %p89, %p90
      %p92 = pneg %p91
      // Predicated region
      $region9: #{tpu_custom_call.1} parent=5 // pred_check
        _
      $region10: #{tpu_custom_call.1} parent=5 // pred_check_branch
        %94 = sbr.rel (%p91) target = $region12
      $region11: #{tpu_custom_call.1} parent=5 // pred_region
        %s95 = ssub.s32 %s13, 1
      $region12: #{tpu_custom_call.1} parent=5 // pred_fallthru
        _
      %p96 = scmp.lt.s32.totalorder %s13, 2
      // Predicated region
      $region13: #{tpu_custom_call.1} parent=5 // pred_check
        %p97 = pneg %p96
      $region14: #{tpu_custom_call.1} parent=5 // pred_check_branch
        %99 = sbr.rel (%p97) target = $region16
      $region15: #{tpu_custom_call.1} parent=5 // pred_region
        // Predicated region
        $region17: #{tpu_custom_call.1} parent=15 // pred_check
          %p100 = pneg %p47
        $region18: #{tpu_custom_call.1} parent=15 // pred_check_branch
          %102 = sbr.rel (%p100) target = $region20
        $region19: #{tpu_custom_call.1} parent=15 // pred_region
          %s103 = sand.u32 %s37, 1
          %s104 = scalar_lea.sflag [#allocation3], %s103
          %s105 = sand.u32 %s37, 1
          %s106 = smul.addr %s105, 64
          %s107 = scalar_lea.vmem [#allocation2], %s106
          %s108 = smul.u32 4, %s20
          %s109 = smul.u32 2, %s21
          %s111 = ssub.s32 1024, 1024
          %112 = vsyncadd %s104, %s111
          %s113 = smul.addr %s108, 2
          %s114 = sadd.s32 %s109, %s113
          %s115 = smul.addr %s114, 128
          %s116 = scalar_lea.hbm %s0, %s115
          %s117 = sshll.u32 %s107, 4
          %s118 = int_to_ptr.vmem [resolvable:$true] %s117
          %123 = dma.hbm_to_vmem [thread:$0]  %s116, 1024, %s118, %s104, 128, 128, 8
        $region20: #{tpu_custom_call.1} parent=15 // pred_fallthru
          _
      $region16: #{tpu_custom_call.1} parent=5 // pred_fallthru
        _
      %p124 = scmp.le.s32.totalorder 1, %s13
      %p125 = scmp.lt.s32.totalorder %s13, 3
      %p126 = pnand %p124, %p125
      %p127 = pneg %p126
      // Predicated region
      $region21: #{tpu_custom_call.1} parent=5 // pred_check
        _
      $region22: #{tpu_custom_call.1} parent=5 // pred_check_branch
        %129 = sbr.rel (%p126) target = $region24
      $region23: #{tpu_custom_call.1} parent=5 // pred_region
        %s130 = ssub.s32 %s13, 1
        %s131 = sand.u32 %s40, 1
        %s132 = scalar_lea.sflag [#allocation3], %s131
        %s133 = sand.u32 %s40, 1
        %s134 = smul.addr %s133, 64
        %s135 = scalar_lea.vmem [#allocation2], %s134
        // Predicated region
        $region25: #{tpu_custom_call.1} parent=23 // pred_check
          %p136 = pneg %p53
        $region26: #{tpu_custom_call.1} parent=23 // pred_check_branch
          %138 = sbr.rel (%p136) target = $region28
        $region27: #{tpu_custom_call.1} parent=23 // pred_region
          %139 = dma.done %s132, 1024
        $region28: #{tpu_custom_call.1} parent=23 // pred_fallthru
          _
        %s140 = sand.u32 %s40, 1
        %s141 = scalar_lea.sflag [#allocation3], %s140
        %s142 = sand.u32 %s40, 1
        %s143 = smul.addr %s142, 64
        %s144 = scalar_lea.vmem [#allocation2], %s143
        %p145 = pneg %p53
        %p146 = pneg %p50
        %p147 = pneg %p81
        %p148 = pneg %p78
        %s149 = sand.u32 %s68, 1
        %s150 = scalar_lea.sflag [#allocation4], %s149
        %s151 = sand.u32 %s68, 1
        %s152 = smul.addr %s151, 128
        %s153 = scalar_lea.vmem [#allocation5], %s152
        %s154 = smul.u32 4, %s22
        %s155 = smul.u32 2, %s23
        %s156 = smul.u32 4, %s22
        %s157 = smul.u32 4, %s23
        %v158 = vld [vmem:[%s135] sm:$0xff]
        %v159 = vld [vmem:[%s135 + $0x8] sm:$0xff]
        %v160 = vld [vmem:[%s135 + $0x10] sm:$0xff]
        %v161 = vld [vmem:[%s135 + $0x18] sm:$0xff]
        %v162 = vld [vmem:[%s135 + $0x20] sm:$0xff]
        %v163 = vld [vmem:[%s135 + $0x28] sm:$0xff]
        %v164 = vld [vmem:[%s135 + $0x30] sm:$0xff]
        %v165 = vld [vmem:[%s135 + $0x38] sm:$0xff]
        %v166 = vlaneseq
        %v167 = vshrl.u32 %v166, 7
        %v168 = vsub.s32 0, %v167
        %v169 = vrot.slane %v158, %v168
        %171 = vbcast.lane.b32.xlu0 %v169, 256
        %v172 = vpop.permute.xlu0 %171
        %s174 = sor.u32 256, 8
        %175 = vbcast.lane.b32.xlu0 %v169, %s174
        %v176 = vpop.permute.xlu0 %175
        %v177 = vlaneseq
        %v178 = vshrl.u32 %v177, 7
        %v179 = vsub.s32 1, %v178
        %v180 = vrot.slane %v158, %v179
        %182 = vbcast.lane.b32.xlu0 %v180, 256
        %v183 = vpop.permute.xlu0 %182
        %s185 = sor.u32 256, 8
        %186 = vbcast.lane.b32.xlu0 %v180, %s185
        %v187 = vpop.permute.xlu0 %186
        %v188 = vlaneseq
        %v189 = vshrl.u32 %v188, 7
        %v190 = vsub.s32 2, %v189
        %v191 = vrot.slane %v158, %v190
        %193 = vbcast.lane.b32.xlu0 %v191, 256
        %v194 = vpop.permute.xlu0 %193
        %s196 = sor.u32 256, 8
        %197 = vbcast.lane.b32.xlu0 %v191, %s196
        %v198 = vpop.permute.xlu0 %197
        %v199 = vlaneseq
        %v200 = vshrl.u32 %v199, 7
        %v201 = vsub.s32 3, %v200
        %v202 = vrot.slane %v158, %v201
        %204 = vbcast.lane.b32.xlu0 %v202, 256
        %v205 = vpop.permute.xlu0 %204
        %s207 = sor.u32 256, 8
        %208 = vbcast.lane.b32.xlu0 %v202, %s207
        %v209 = vpop.permute.xlu0 %208
        %v210 = vlaneseq
        %v211 = vshrl.u32 %v210, 7
        %v212 = vsub.s32 4, %v211
        %v213 = vrot.slane %v158, %v212
        %215 = vbcast.lane.b32.xlu0 %v213, 256
        %v216 = vpop.permute.xlu0 %215
        %s218 = sor.u32 256, 8
        %219 = vbcast.lane.b32.xlu0 %v213, %s218
        %v220 = vpop.permute.xlu0 %219
        %v221 = vlaneseq
        %v222 = vshrl.u32 %v221, 7
        %v223 = vsub.s32 5, %v222
        %v224 = vrot.slane %v158, %v223
        %226 = vbcast.lane.b32.xlu0 %v224, 256
        %v227 = vpop.permute.xlu0 %226
        %s229 = sor.u32 256, 8
        %230 = vbcast.lane.b32.xlu0 %v224, %s229
        %v231 = vpop.permute.xlu0 %230
        %v232 = vlaneseq
        %v233 = vshrl.u32 %v232, 7
        %v234 = vsub.s32 6, %v233
        %v235 = vrot.slane %v158, %v234
        %237 = vbcast.lane.b32.xlu0 %v235, 256
        %v238 = vpop.permute.xlu0 %237
        %s240 = sor.u32 256, 8
        %241 = vbcast.lane.b32.xlu0 %v235, %s240
        %v242 = vpop.permute.xlu0 %241
        %v243 = vlaneseq
        %v244 = vshrl.u32 %v243, 7
        %v245 = vsub.s32 7, %v244
        %v246 = vrot.slane %v158, %v245
        %248 = vbcast.lane.b32.xlu0 %v246, 256
        %v249 = vpop.permute.xlu0 %248
        %s251 = sor.u32 256, 8
        %252 = vbcast.lane.b32.xlu0 %v246, %s251
        %v253 = vpop.permute.xlu0 %252
        %v254 = vlaneseq
        %v255 = vshrl.u32 %v254, 7
        %v256 = vsub.s32 0, %v255
        %v257 = vrot.slane %v159, %v256
        %259 = vbcast.lane.b32.xlu0 %v257, 256
        %v260 = vpop.permute.xlu0 %259
        %s262 = sor.u32 256, 8
        %263 = vbcast.lane.b32.xlu0 %v257, %s262
        %v264 = vpop.permute.xlu0 %263
        %v265 = vlaneseq
        %v266 = vshrl.u32 %v265, 7
        %v267 = vsub.s32 1, %v266
        %v268 = vrot.slane %v159, %v267
        %270 = vbcast.lane.b32.xlu0 %v268, 256
        %v271 = vpop.permute.xlu0 %270
        %s273 = sor.u32 256, 8
        %274 = vbcast.lane.b32.xlu0 %v268, %s273
        %v275 = vpop.permute.xlu0 %274
        %v276 = vlaneseq
        %v277 = vshrl.u32 %v276, 7
        %v278 = vsub.s32 2, %v277
        %v279 = vrot.slane %v159, %v278
        %281 = vbcast.lane.b32.xlu0 %v279, 256
        %v282 = vpop.permute.xlu0 %281
        %s284 = sor.u32 256, 8
        %285 = vbcast.lane.b32.xlu0 %v279, %s284
        %v286 = vpop.permute.xlu0 %285
        %v287 = vlaneseq
        %v288 = vshrl.u32 %v287, 7
        %v289 = vsub.s32 3, %v288
        %v290 = vrot.slane %v159, %v289
        %292 = vbcast.lane.b32.xlu0 %v290, 256
        %v293 = vpop.permute.xlu0 %292
        %s295 = sor.u32 256, 8
        %296 = vbcast.lane.b32.xlu0 %v290, %s295
        %v297 = vpop.permute.xlu0 %296
        %v298 = vlaneseq
        %v299 = vshrl.u32 %v298, 7
        %v300 = vsub.s32 4, %v299
        %v301 = vrot.slane %v159, %v300
        %303 = vbcast.lane.b32.xlu0 %v301, 256
        %v304 = vpop.permute.xlu0 %303
        %s306 = sor.u32 256, 8
        %307 = vbcast.lane.b32.xlu0 %v301, %s306
        %v308 = vpop.permute.xlu0 %307
        %v309 = vlaneseq
        %v310 = vshrl.u32 %v309, 7
        %v311 = vsub.s32 5, %v310
        %v312 = vrot.slane %v159, %v311
        %314 = vbcast.lane.b32.xlu0 %v312, 256
        %v315 = vpop.permute.xlu0 %314
        %s317 = sor.u32 256, 8
        %318 = vbcast.lane.b32.xlu0 %v312, %s317
        %v319 = vpop.permute.xlu0 %318
        %v320 = vlaneseq
        %v321 = vshrl.u32 %v320, 7
        %v322 = vsub.s32 6, %v321
        %v323 = vrot.slane %v159, %v322
        %325 = vbcast.lane.b32.xlu0 %v323, 256
        %v326 = vpop.permute.xlu0 %325
        %s328 = sor.u32 256, 8
        %329 = vbcast.lane.b32.xlu0 %v323, %s328
        %v330 = vpop.permute.xlu0 %329
        %v331 = vlaneseq
        %v332 = vshrl.u32 %v331, 7
        %v333 = vsub.s32 7, %v332
        %v334 = vrot.slane %v159, %v333
        %336 = vbcast.lane.b32.xlu0 %v334, 256
        %v337 = vpop.permute.xlu0 %336
        %s339 = sor.u32 256, 8
        %340 = vbcast.lane.b32.xlu0 %v334, %s339
        %v341 = vpop.permute.xlu0 %340
        %v342 = vlaneseq
        %v343 = vshrl.u32 %v342, 7
        %v344 = vsub.s32 0, %v343
        %v345 = vrot.slane %v160, %v344
        %347 = vbcast.lane.b32.xlu0 %v345, 256
        %v348 = vpop.permute.xlu0 %347
        %s350 = sor.u32 256, 8
        %351 = vbcast.lane.b32.xlu0 %v345, %s350
        %v352 = vpop.permute.xlu0 %351
        %v353 = vlaneseq
        %v354 = vshrl.u32 %v353, 7
        %v355 = vsub.s32 1, %v354
        %v356 = vrot.slane %v160, %v355
        %358 = vbcast.lane.b32.xlu0 %v356, 256
        %v359 = vpop.permute.xlu0 %358
        %s361 = sor.u32 256, 8
        %362 = vbcast.lane.b32.xlu0 %v356, %s361
        %v363 = vpop.permute.xlu0 %362
        %v364 = vlaneseq
        %v365 = vshrl.u32 %v364, 7
        %v366 = vsub.s32 2, %v365
        %v367 = vrot.slane %v160, %v366
        %369 = vbcast.lane.b32.xlu0 %v367, 256
        %v370 = vpop.permute.xlu0 %369
        %s372 = sor.u32 256, 8
        %373 = vbcast.lane.b32.xlu0 %v367, %s372
        %v374 = vpop.permute.xlu0 %373
        %v375 = vlaneseq
        %v376 = vshrl.u32 %v375, 7
        %v377 = vsub.s32 3, %v376
        %v378 = vrot.slane %v160, %v377
        %380 = vbcast.lane.b32.xlu0 %v378, 256
        %v381 = vpop.permute.xlu0 %380
        %s383 = sor.u32 256, 8
        %384 = vbcast.lane.b32.xlu0 %v378, %s383
        %v385 = vpop.permute.xlu0 %384
        %v386 = vlaneseq
        %v387 = vshrl.u32 %v386, 7
        %v388 = vsub.s32 4, %v387
        %v389 = vrot.slane %v160, %v388
        %391 = vbcast.lane.b32.xlu0 %v389, 256
        %v392 = vpop.permute.xlu0 %391
        %s394 = sor.u32 256, 8
        %395 = vbcast.lane.b32.xlu0 %v389, %s394
        %v396 = vpop.permute.xlu0 %395
        %v397 = vlaneseq
        %v398 = vshrl.u32 %v397, 7
        %v399 = vsub.s32 5, %v398
        %v400 = vrot.slane %v160, %v399
        %402 = vbcast.lane.b32.xlu0 %v400, 256
        %v403 = vpop.permute.xlu0 %402
        %s405 = sor.u32 256, 8
        %406 = vbcast.lane.b32.xlu0 %v400, %s405
        %v407 = vpop.permute.xlu0 %406
        %v408 = vlaneseq
        %v409 = vshrl.u32 %v408, 7
        %v410 = vsub.s32 6, %v409
        %v411 = vrot.slane %v160, %v410
        %413 = vbcast.lane.b32.xlu0 %v411, 256
        %v414 = vpop.permute.xlu0 %413
        %s416 = sor.u32 256, 8
        %417 = vbcast.lane.b32.xlu0 %v411, %s416
        %v418 = vpop.permute.xlu0 %417
        %v419 = vlaneseq
        %v420 = vshrl.u32 %v419, 7
        %v421 = vsub.s32 7, %v420
        %v422 = vrot.slane %v160, %v421
        %424 = vbcast.lane.b32.xlu0 %v422, 256
        %v425 = vpop.permute.xlu0 %424
        %s427 = sor.u32 256, 8
        %428 = vbcast.lane.b32.xlu0 %v422, %s427
        %v429 = vpop.permute.xlu0 %428
        %v430 = vlaneseq
        %v431 = vshrl.u32 %v430, 7
        %v432 = vsub.s32 0, %v431
        %v433 = vrot.slane %v161, %v432
        %435 = vbcast.lane.b32.xlu0 %v433, 256
        %v436 = vpop.permute.xlu0 %435
        %s438 = sor.u32 256, 8
        %439 = vbcast.lane.b32.xlu0 %v433, %s438
        %v440 = vpop.permute.xlu0 %439
        %v441 = vlaneseq
        %v442 = vshrl.u32 %v441, 7
        %v443 = vsub.s32 1, %v442
        %v444 = vrot.slane %v161, %v443
        %446 = vbcast.lane.b32.xlu0 %v444, 256
        %v447 = vpop.permute.xlu0 %446
        %s449 = sor.u32 256, 8
        %450 = vbcast.lane.b32.xlu0 %v444, %s449
        %v451 = vpop.permute.xlu0 %450
        %v452 = vlaneseq
        %v453 = vshrl.u32 %v452, 7
        %v454 = vsub.s32 2, %v453
        %v455 = vrot.slane %v161, %v454
        %457 = vbcast.lane.b32.xlu0 %v455, 256
        %v458 = vpop.permute.xlu0 %457
        %s460 = sor.u32 256, 8
        %461 = vbcast.lane.b32.xlu0 %v455, %s460
        %v462 = vpop.permute.xlu0 %461
        %v463 = vlaneseq
        %v464 = vshrl.u32 %v463, 7
        %v465 = vsub.s32 3, %v464
        %v466 = vrot.slane %v161, %v465
        %468 = vbcast.lane.b32.xlu0 %v466, 256
        %v469 = vpop.permute.xlu0 %468
        %s471 = sor.u32 256, 8
        %472 = vbcast.lane.b32.xlu0 %v466, %s471
        %v473 = vpop.permute.xlu0 %472
        %v474 = vlaneseq
        %v475 = vshrl.u32 %v474, 7
        %v476 = vsub.s32 4, %v475
        %v477 = vrot.slane %v161, %v476
        %479 = vbcast.lane.b32.xlu0 %v477, 256
        %v480 = vpop.permute.xlu0 %479
        %s482 = sor.u32 256, 8
        %483 = vbcast.lane.b32.xlu0 %v477, %s482
        %v484 = vpop.permute.xlu0 %483
        %v485 = vlaneseq
        %v486 = vshrl.u32 %v485, 7
        %v487 = vsub.s32 5, %v486
        %v488 = vrot.slane %v161, %v487
        %490 = vbcast.lane.b32.xlu0 %v488, 256
        %v491 = vpop.permute.xlu0 %490
        %s493 = sor.u32 256, 8
        %494 = vbcast.lane.b32.xlu0 %v488, %s493
        %v495 = vpop.permute.xlu0 %494
        %v496 = vlaneseq
        %v497 = vshrl.u32 %v496, 7
        %v498 = vsub.s32 6, %v497
        %v499 = vrot.slane %v161, %v498
        %501 = vbcast.lane.b32.xlu0 %v499, 256
        %v502 = vpop.permute.xlu0 %501
        %s504 = sor.u32 256, 8
        %505 = vbcast.lane.b32.xlu0 %v499, %s504
        %v506 = vpop.permute.xlu0 %505
        %v507 = vlaneseq
        %v508 = vshrl.u32 %v507, 7
        %v509 = vsub.s32 7, %v508
        %v510 = vrot.slane %v161, %v509
        %512 = vbcast.lane.b32.xlu0 %v510, 256
        %v513 = vpop.permute.xlu0 %512
        %s515 = sor.u32 256, 8
        %516 = vbcast.lane.b32.xlu0 %v510, %s515
        %v517 = vpop.permute.xlu0 %516
        %v518 = vlaneseq
        %v519 = vshrl.u32 %v518, 7
        %v520 = vsub.s32 0, %v519
        %v521 = vrot.slane %v162, %v520
        %523 = vbcast.lane.b32.xlu0 %v521, 256
        %v524 = vpop.permute.xlu0 %523
        %s526 = sor.u32 256, 8
        %527 = vbcast.lane.b32.xlu0 %v521, %s526
        %v528 = vpop.permute.xlu0 %527
        %v529 = vlaneseq
        %v530 = vshrl.u32 %v529, 7
        %v531 = vsub.s32 1, %v530
        %v532 = vrot.slane %v162, %v531
        %534 = vbcast.lane.b32.xlu0 %v532, 256
        %v535 = vpop.permute.xlu0 %534
        %s537 = sor.u32 256, 8
        %538 = vbcast.lane.b32.xlu0 %v532, %s537
        %v539 = vpop.permute.xlu0 %538
        %v540 = vlaneseq
        %v541 = vshrl.u32 %v540, 7
        %v542 = vsub.s32 2, %v541
        %v543 = vrot.slane %v162, %v542
        %545 = vbcast.lane.b32.xlu0 %v543, 256
        %v546 = vpop.permute.xlu0 %545
        %s548 = sor.u32 256, 8
        %549 = vbcast.lane.b32.xlu0 %v543, %s548
        %v550 = vpop.permute.xlu0 %549
        %v551 = vlaneseq
        %v552 = vshrl.u32 %v551, 7
        %v553 = vsub.s32 3, %v552
        %v554 = vrot.slane %v162, %v553
        %556 = vbcast.lane.b32.xlu0 %v554, 256
        %v557 = vpop.permute.xlu0 %556
        %s559 = sor.u32 256, 8
        %560 = vbcast.lane.b32.xlu0 %v554, %s559
        %v561 = vpop.permute.xlu0 %560
        %v562 = vlaneseq
        %v563 = vshrl.u32 %v562, 7
        %v564 = vsub.s32 4, %v563
        %v565 = vrot.slane %v162, %v564
        %567 = vbcast.lane.b32.xlu0 %v565, 256
        %v568 = vpop.permute.xlu0 %567
        %s570 = sor.u32 256, 8
        %571 = vbcast.lane.b32.xlu0 %v565, %s570
        %v572 = vpop.permute.xlu0 %571
        %v573 = vlaneseq
        %v574 = vshrl.u32 %v573, 7
        %v575 = vsub.s32 5, %v574
        %v576 = vrot.slane %v162, %v575
        %578 = vbcast.lane.b32.xlu0 %v576, 256
        %v579 = vpop.permute.xlu0 %578
        %s581 = sor.u32 256, 8
        %582 = vbcast.lane.b32.xlu0 %v576, %s581
        %v583 = vpop.permute.xlu0 %582
        %v584 = vlaneseq
        %v585 = vshrl.u32 %v584, 7
        %v586 = vsub.s32 6, %v585
        %v587 = vrot.slane %v162, %v586
        %589 = vbcast.lane.b32.xlu0 %v587, 256
        %v590 = vpop.permute.xlu0 %589
        %s592 = sor.u32 256, 8
        %593 = vbcast.lane.b32.xlu0 %v587, %s592
        %v594 = vpop.permute.xlu0 %593
        %v595 = vlaneseq
        %v596 = vshrl.u32 %v595, 7
        %v597 = vsub.s32 7, %v596
        %v598 = vrot.slane %v162, %v597
        %600 = vbcast.lane.b32.xlu0 %v598, 256
        %v601 = vpop.permute.xlu0 %600
        %s603 = sor.u32 256, 8
        %604 = vbcast.lane.b32.xlu0 %v598, %s603
        %v605 = vpop.permute.xlu0 %604
        %v606 = vlaneseq
        %v607 = vshrl.u32 %v606, 7
        %v608 = vsub.s32 0, %v607
        %v609 = vrot.slane %v163, %v608
        %611 = vbcast.lane.b32.xlu0 %v609, 256
        %v612 = vpop.permute.xlu0 %611
        %s614 = sor.u32 256, 8
        %615 = vbcast.lane.b32.xlu0 %v609, %s614
        %v616 = vpop.permute.xlu0 %615
        %v617 = vlaneseq
        %v618 = vshrl.u32 %v617, 7
        %v619 = vsub.s32 1, %v618
        %v620 = vrot.slane %v163, %v619
        %622 = vbcast.lane.b32.xlu0 %v620, 256
        %v623 = vpop.permute.xlu0 %622
        %s625 = sor.u32 256, 8
        %626 = vbcast.lane.b32.xlu0 %v620, %s625
        %v627 = vpop.permute.xlu0 %626
        %v628 = vlaneseq
        %v629 = vshrl.u32 %v628, 7
        %v630 = vsub.s32 2, %v629
        %v631 = vrot.slane %v163, %v630
        %633 = vbcast.lane.b32.xlu0 %v631, 256
        %v634 = vpop.permute.xlu0 %633
        %s636 = sor.u32 256, 8
        %637 = vbcast.lane.b32.xlu0 %v631, %s636
        %v638 = vpop.permute.xlu0 %637
        %v639 = vlaneseq
        %v640 = vshrl.u32 %v639, 7
        %v641 = vsub.s32 3, %v640
        %v642 = vrot.slane %v163, %v641
        %644 = vbcast.lane.b32.xlu0 %v642, 256
        %v645 = vpop.permute.xlu0 %644
        %s647 = sor.u32 256, 8
        %648 = vbcast.lane.b32.xlu0 %v642, %s647
        %v649 = vpop.permute.xlu0 %648
        %v650 = vlaneseq
        %v651 = vshrl.u32 %v650, 7
        %v652 = vsub.s32 4, %v651
        %v653 = vrot.slane %v163, %v652
        %655 = vbcast.lane.b32.xlu0 %v653, 256
        %v656 = vpop.permute.xlu0 %655
        %s658 = sor.u32 256, 8
        %659 = vbcast.lane.b32.xlu0 %v653, %s658
        %v660 = vpop.permute.xlu0 %659
        %v661 = vlaneseq
        %v662 = vshrl.u32 %v661, 7
        %v663 = vsub.s32 5, %v662
        %v664 = vrot.slane %v163, %v663
        %666 = vbcast.lane.b32.xlu0 %v664, 256
        %v667 = vpop.permute.xlu0 %666
        %s669 = sor.u32 256, 8
        %670 = vbcast.lane.b32.xlu0 %v664, %s669
        %v671 = vpop.permute.xlu0 %670
        %v672 = vlaneseq
        %v673 = vshrl.u32 %v672, 7
        %v674 = vsub.s32 6, %v673
        %v675 = vrot.slane %v163, %v674
        %677 = vbcast.lane.b32.xlu0 %v675, 256
        %v678 = vpop.permute.xlu0 %677
        %s680 = sor.u32 256, 8
        %681 = vbcast.lane.b32.xlu0 %v675, %s680
        %v682 = vpop.permute.xlu0 %681
        %v683 = vlaneseq
        %v684 = vshrl.u32 %v683, 7
        %v685 = vsub.s32 7, %v684
        %v686 = vrot.slane %v163, %v685
        %688 = vbcast.lane.b32.xlu0 %v686, 256
        %v689 = vpop.permute.xlu0 %688
        %s691 = sor.u32 256, 8
        %692 = vbcast.lane.b32.xlu0 %v686, %s691
        %v693 = vpop.permute.xlu0 %692
        %v694 = vlaneseq
        %v695 = vshrl.u32 %v694, 7
        %v696 = vsub.s32 0, %v695
        %v697 = vrot.slane %v164, %v696
        %699 = vbcast.lane.b32.xlu0 %v697, 256
        %v700 = vpop.permute.xlu0 %699
        %s702 = sor.u32 256, 8
        %703 = vbcast.lane.b32.xlu0 %v697, %s702
        %v704 = vpop.permute.xlu0 %703
        %v705 = vlaneseq
        %v706 = vshrl.u32 %v705, 7
        %v707 = vsub.s32 1, %v706
        %v708 = vrot.slane %v164, %v707
        %710 = vbcast.lane.b32.xlu0 %v708, 256
        %v711 = vpop.permute.xlu0 %710
        %s713 = sor.u32 256, 8
        %714 = vbcast.lane.b32.xlu0 %v708, %s713
        %v715 = vpop.permute.xlu0 %714
        %v716 = vlaneseq
        %v717 = vshrl.u32 %v716, 7
        %v718 = vsub.s32 2, %v717
        %v719 = vrot.slane %v164, %v718
        %721 = vbcast.lane.b32.xlu0 %v719, 256
        %v722 = vpop.permute.xlu0 %721
        %s724 = sor.u32 256, 8
        %725 = vbcast.lane.b32.xlu0 %v719, %s724
        %v726 = vpop.permute.xlu0 %725
        %v727 = vlaneseq
        %v728 = vshrl.u32 %v727, 7
        %v729 = vsub.s32 3, %v728
        %v730 = vrot.slane %v164, %v729
        %732 = vbcast.lane.b32.xlu0 %v730, 256
        %v733 = vpop.permute.xlu0 %732
        %s735 = sor.u32 256, 8
        %736 = vbcast.lane.b32.xlu0 %v730, %s735
        %v737 = vpop.permute.xlu0 %736
        %v738 = vlaneseq
        %v739 = vshrl.u32 %v738, 7
        %v740 = vsub.s32 4, %v739
        %v741 = vrot.slane %v164, %v740
        %743 = vbcast.lane.b32.xlu0 %v741, 256
        %v744 = vpop.permute.xlu0 %743
        %s746 = sor.u32 256, 8
        %747 = vbcast.lane.b32.xlu0 %v741, %s746
        %v748 = vpop.permute.xlu0 %747
        %v749 = vlaneseq
        %v750 = vshrl.u32 %v749, 7
        %v751 = vsub.s32 5, %v750
        %v752 = vrot.slane %v164, %v751
        %754 = vbcast.lane.b32.xlu0 %v752, 256
        %v755 = vpop.permute.xlu0 %754
        %s757 = sor.u32 256, 8
        %758 = vbcast.lane.b32.xlu0 %v752, %s757
        %v759 = vpop.permute.xlu0 %758
        %v760 = vlaneseq
        %v761 = vshrl.u32 %v760, 7
        %v762 = vsub.s32 6, %v761
        %v763 = vrot.slane %v164, %v762
        %765 = vbcast.lane.b32.xlu0 %v763, 256
        %v766 = vpop.permute.xlu0 %765
        %s768 = sor.u32 256, 8
        %769 = vbcast.lane.b32.xlu0 %v763, %s768
        %v770 = vpop.permute.xlu0 %769
        %v771 = vlaneseq
        %v772 = vshrl.u32 %v771, 7
        %v773 = vsub.s32 7, %v772
        %v774 = vrot.slane %v164, %v773
        %776 = vbcast.lane.b32.xlu0 %v774, 256
        %v777 = vpop.permute.xlu0 %776
        %s779 = sor.u32 256, 8
        %780 = vbcast.lane.b32.xlu0 %v774, %s779
        %v781 = vpop.permute.xlu0 %780
        %v782 = vlaneseq
        %v783 = vshrl.u32 %v782, 7
        %v784 = vsub.s32 0, %v783
        %v785 = vrot.slane %v165, %v784
        %787 = vbcast.lane.b32.xlu0 %v785, 256
        %v788 = vpop.permute.xlu0 %787
        %s790 = sor.u32 256, 8
        %791 = vbcast.lane.b32.xlu0 %v785, %s790
        %v792 = vpop.permute.xlu0 %791
        %v793 = vlaneseq
        %v794 = vshrl.u32 %v793, 7
        %v795 = vsub.s32 1, %v794
        %v796 = vrot.slane %v165, %v795
        %798 = vbcast.lane.b32.xlu0 %v796, 256
        %v799 = vpop.permute.xlu0 %798
        %s801 = sor.u32 256, 8
        %802 = vbcast.lane.b32.xlu0 %v796, %s801
        %v803 = vpop.permute.xlu0 %802
        %v804 = vlaneseq
        %v805 = vshrl.u32 %v804, 7
        %v806 = vsub.s32 2, %v805
        %v807 = vrot.slane %v165, %v806
        %809 = vbcast.lane.b32.xlu0 %v807, 256
        %v810 = vpop.permute.xlu0 %809
        %s812 = sor.u32 256, 8
        %813 = vbcast.lane.b32.xlu0 %v807, %s812
        %v814 = vpop.permute.xlu0 %813
        %v815 = vlaneseq
        %v816 = vshrl.u32 %v815, 7
        %v817 = vsub.s32 3, %v816
        %v818 = vrot.slane %v165, %v817
        %820 = vbcast.lane.b32.xlu0 %v818, 256
        %v821 = vpop.permute.xlu0 %820
        %s823 = sor.u32 256, 8
        %824 = vbcast.lane.b32.xlu0 %v818, %s823
        %v825 = vpop.permute.xlu0 %824
        %v826 = vlaneseq
        %v827 = vshrl.u32 %v826, 7
        %v828 = vsub.s32 4, %v827
        %v829 = vrot.slane %v165, %v828
        %831 = vbcast.lane.b32.xlu0 %v829, 256
        %v832 = vpop.permute.xlu0 %831
        %s834 = sor.u32 256, 8
        %835 = vbcast.lane.b32.xlu0 %v829, %s834
        %v836 = vpop.permute.xlu0 %835
        %v837 = vlaneseq
        %v838 = vshrl.u32 %v837, 7
        %v839 = vsub.s32 5, %v838
        %v840 = vrot.slane %v165, %v839
        %842 = vbcast.lane.b32.xlu0 %v840, 256
        %v843 = vpop.permute.xlu0 %842
        %s845 = sor.u32 256, 8
        %846 = vbcast.lane.b32.xlu0 %v840, %s845
        %v847 = vpop.permute.xlu0 %846
        %v848 = vlaneseq
        %v849 = vshrl.u32 %v848, 7
        %v850 = vsub.s32 6, %v849
        %v851 = vrot.slane %v165, %v850
        %853 = vbcast.lane.b32.xlu0 %v851, 256
        %v854 = vpop.permute.xlu0 %853
        %s856 = sor.u32 256, 8
        %857 = vbcast.lane.b32.xlu0 %v851, %s856
        %v858 = vpop.permute.xlu0 %857
        %v859 = vlaneseq
        %v860 = vshrl.u32 %v859, 7
        %v861 = vsub.s32 7, %v860
        %v862 = vrot.slane %v165, %v861
        %864 = vbcast.lane.b32.xlu0 %v862, 256
        %v865 = vpop.permute.xlu0 %864
        %s867 = sor.u32 256, 8
        %868 = vbcast.lane.b32.xlu0 %v862, %s867
        %v869 = vpop.permute.xlu0 %868
        %v870 = vcombine.low %v172, %v183
        %v871 = vcombine.high %v172, %v183
        %v873 = vunpack.c.l.s4 1983009808
        %v874 = vunpack.c.0.s8 %v873
        %v875 = vlaneseq
        %v876 = vshrl.u32 %v875, 7
        %v877 = vsub.s32 %v874, %v876
        %v878 = vrot.slane %v870, %v877
        %v880 = vunpack.c.l.s4 1983009808
        %v881 = vunpack.c.0.s8 %v880
        %v882 = vlaneseq
        %v883 = vshrl.u32 %v882, 7
        %v884 = vsub.s32 %v881, %v883
        %v885 = vrot.slane %v871, %v884
        %v886 = vcombine.low %v194, %v205
        %v887 = vcombine.high %v194, %v205
        %v889 = vunpack.c.l.s4 1983009808
        %v890 = vunpack.c.0.s8 %v889
        %v891 = vlaneseq
        %v892 = vshrl.u32 %v891, 7
        %v893 = vsub.s32 %v890, %v892
        %v894 = vrot.slane %v886, %v893
        %v896 = vunpack.c.l.s4 1983009808
        %v897 = vunpack.c.0.s8 %v896
        %v898 = vlaneseq
        %v899 = vshrl.u32 %v898, 7
        %v900 = vsub.s32 %v897, %v899
        %v901 = vrot.slane %v887, %v900
        %v902 = vcombine.low %v878, %v878
        %v903 = vcombine.high %v878, %v878
        %v905 = vunpack.c.l.s4 1934713408
        %v906 = vunpack.c.0.s8 %v905
        %v907 = vlaneseq
        %v908 = vshrl.u32 %v907, 7
        %v909 = vsub.s32 %v906, %v908
        %v910 = vrot.slane %v902, %v909
        %v912 = vunpack.c.l.s4 1934713408
        %v913 = vunpack.c.0.s8 %v912
        %v914 = vlaneseq
        %v915 = vshrl.u32 %v914, 7
        %v916 = vsub.s32 %v913, %v915
        %v917 = vrot.slane %v903, %v916
        %v918 = vcombine.low %v885, %v885
        %v919 = vcombine.high %v885, %v885
        %v921 = vunpack.c.l.s4 1934713408
        %v922 = vunpack.c.0.s8 %v921
        %v923 = vlaneseq
        %v924 = vshrl.u32 %v923, 7
        %v925 = vsub.s32 %v922, %v924
        %v926 = vrot.slane %v918, %v925
        %v928 = vunpack.c.l.s4 1934713408
        %v929 = vunpack.c.0.s8 %v928
        %v930 = vlaneseq
        %v931 = vshrl.u32 %v930, 7
        %v932 = vsub.s32 %v929, %v931
        %v933 = vrot.slane %v919, %v932
        %v934 = vcombine.low %v894, %v894
        %v935 = vcombine.high %v894, %v894
        %v937 = vunpack.c.l.s4 1934713408
        %v938 = vunpack.c.0.s8 %v937
        %v939 = vlaneseq
        %v940 = vshrl.u32 %v939, 7
        %v941 = vsub.s32 %v938, %v940
        %v942 = vrot.slane %v934, %v941
        %v944 = vunpack.c.l.s4 1934713408
        %v945 = vunpack.c.0.s8 %v944
        %v946 = vlaneseq
        %v947 = vshrl.u32 %v946, 7
        %v948 = vsub.s32 %v945, %v947
        %v949 = vrot.slane %v935, %v948
        %v950 = vcombine.low %v901, %v901
        %v951 = vcombine.high %v901, %v901
        %v953 = vunpack.c.l.s4 1934713408
        %v954 = vunpack.c.0.s8 %v953
        %v955 = vlaneseq
        %v956 = vshrl.u32 %v955, 7
        %v957 = vsub.s32 %v954, %v956
        %v958 = vrot.slane %v950, %v957
        %v960 = vunpack.c.l.s4 1934713408
        %v961 = vunpack.c.0.s8 %v960
        %v962 = vlaneseq
        %v963 = vshrl.u32 %v962, 7
        %v964 = vsub.s32 %v961, %v963
        %v965 = vrot.slane %v951, %v964
        %v966 = vcombine.low %v910, %v942
        %v967 = vcombine.high %v910, %v942
        %v968 = vcombine.low %v917, %v949
        %v969 = vcombine.high %v917, %v949
        %v970 = vcombine.low %v926, %v958
        %v971 = vcombine.high %v926, %v958
        %v972 = vcombine.low %v933, %v965
        %v973 = vcombine.high %v933, %v965
        %v974 = vcombine.low %v216, %v227
        %v975 = vcombine.high %v216, %v227
        %v977 = vunpack.c.l.s4 1983009808
        %v978 = vunpack.c.0.s8 %v977
        %v979 = vlaneseq
        %v980 = vshrl.u32 %v979, 7
        %v981 = vsub.s32 %v978, %v980
        %v982 = vrot.slane %v974, %v981
        %v984 = vunpack.c.l.s4 1983009808
        %v985 = vunpack.c.0.s8 %v984
        %v986 = vlaneseq
        %v987 = vshrl.u32 %v986, 7
        %v988 = vsub.s32 %v985, %v987
        %v989 = vrot.slane %v975, %v988
        %v990 = vcombine.low %v238, %v249
        %v991 = vcombine.high %v238, %v249
        %v993 = vunpack.c.l.s4 1983009808
        %v994 = vunpack.c.0.s8 %v993
        %v995 = vlaneseq
        %v996 = vshrl.u32 %v995, 7
        %v997 = vsub.s32 %v994, %v996
        %v998 = vrot.slane %v990, %v997
        %v1000 = vunpack.c.l.s4 1983009808
        %v1001 = vunpack.c.0.s8 %v1000
        %v1002 = vlaneseq
        %v1003 = vshrl.u32 %v1002, 7
        %v1004 = vsub.s32 %v1001, %v1003
        %v1005 = vrot.slane %v991, %v1004
        %v1006 = vcombine.low %v982, %v982
        %v1007 = vcombine.high %v982, %v982
        %v1009 = vunpack.c.l.s4 1934713408
        %v1010 = vunpack.c.0.s8 %v1009
        %v1011 = vlaneseq
        %v1012 = vshrl.u32 %v1011, 7
        %v1013 = vsub.s32 %v1010, %v1012
        %v1014 = vrot.slane %v1006, %v1013
        %v1016 = vunpack.c.l.s4 1934713408
        %v1017 = vunpack.c.0.s8 %v1016
        %v1018 = vlaneseq
        %v1019 = vshrl.u32 %v1018, 7
        %v1020 = vsub.s32 %v1017, %v1019
        %v1021 = vrot.slane %v1007, %v1020
        %v1022 = vcombine.low %v989, %v989
        %v1023 = vcombine.high %v989, %v989
        %v1025 = vunpack.c.l.s4 1934713408
        %v1026 = vunpack.c.0.s8 %v1025
        %v1027 = vlaneseq
        %v1028 = vshrl.u32 %v1027, 7
        %v1029 = vsub.s32 %v1026, %v1028
        %v1030 = vrot.slane %v1022, %v1029
        %v1032 = vunpack.c.l.s4 1934713408
        %v1033 = vunpack.c.0.s8 %v1032
        %v1034 = vlaneseq
        %v1035 = vshrl.u32 %v1034, 7
        %v1036 = vsub.s32 %v1033, %v1035
        %v1037 = vrot.slane %v1023, %v1036
        %v1038 = vcombine.low %v998, %v998
        %v1039 = vcombine.high %v998, %v998
        %v1041 = vunpack.c.l.s4 1934713408
        %v1042 = vunpack.c.0.s8 %v1041
        %v1043 = vlaneseq
        %v1044 = vshrl.u32 %v1043, 7
        %v1045 = vsub.s32 %v1042, %v1044
        %v1046 = vrot.slane %v1038, %v1045
        %v1048 = vunpack.c.l.s4 1934713408
        %v1049 = vunpack.c.0.s8 %v1048
        %v1050 = vlaneseq
        %v1051 = vshrl.u32 %v1050, 7
        %v1052 = vsub.s32 %v1049, %v1051
        %v1053 = vrot.slane %v1039, %v1052
        %v1054 = vcombine.low %v1005, %v1005
        %v1055 = vcombine.high %v1005, %v1005
        %v1057 = vunpack.c.l.s4 1934713408
        %v1058 = vunpack.c.0.s8 %v1057
        %v1059 = vlaneseq
        %v1060 = vshrl.u32 %v1059, 7
        %v1061 = vsub.s32 %v1058, %v1060
        %v1062 = vrot.slane %v1054, %v1061
        %v1064 = vunpack.c.l.s4 1934713408
        %v1065 = vunpack.c.0.s8 %v1064
        %v1066 = vlaneseq
        %v1067 = vshrl.u32 %v1066, 7
        %v1068 = vsub.s32 %v1065, %v1067
        %v1069 = vrot.slane %v1055, %v1068
        %v1070 = vcombine.low %v1014, %v1046
        %v1071 = vcombine.high %v1014, %v1046
        %v1072 = vcombine.low %v1021, %v1053
        %v1073 = vcombine.high %v1021, %v1053
        %v1074 = vcombine.low %v1030, %v1062
        %v1075 = vcombine.high %v1030, %v1062
        %v1076 = vcombine.low %v1037, %v1069
        %v1077 = vcombine.high %v1037, %v1069
        %v1078 = vcombine.low %v260, %v271
        %v1079 = vcombine.high %v260, %v271
        %v1081 = vunpack.c.l.s4 1983009808
        %v1082 = vunpack.c.0.s8 %v1081
        %v1083 = vlaneseq
        %v1084 = vshrl.u32 %v1083, 7
        %v1085 = vsub.s32 %v1082, %v1084
        %v1086 = vrot.slane %v1078, %v1085
        %v1088 = vunpack.c.l.s4 1983009808
        %v1089 = vunpack.c.0.s8 %v1088
        %v1090 = vlaneseq
        %v1091 = vshrl.u32 %v1090, 7
        %v1092 = vsub.s32 %v1089, %v1091
        %v1093 = vrot.slane %v1079, %v1092
        %v1094 = vcombine.low %v282, %v293
        %v1095 = vcombine.high %v282, %v293
        %v1097 = vunpack.c.l.s4 1983009808
        %v1098 = vunpack.c.0.s8 %v1097
        %v1099 = vlaneseq
        %v1100 = vshrl.u32 %v1099, 7
        %v1101 = vsub.s32 %v1098, %v1100
        %v1102 = vrot.slane %v1094, %v1101
        %v1104 = vunpack.c.l.s4 1983009808
        %v1105 = vunpack.c.0.s8 %v1104
        %v1106 = vlaneseq
        %v1107 = vshrl.u32 %v1106, 7
        %v1108 = vsub.s32 %v1105, %v1107
        %v1109 = vrot.slane %v1095, %v1108
        %v1110 = vcombine.low %v1086, %v1086
        %v1111 = vcombine.high %v1086, %v1086
        %v1113 = vunpack.c.l.s4 1934713408
        %v1114 = vunpack.c.0.s8 %v1113
        %v1115 = vlaneseq
        %v1116 = vshrl.u32 %v1115, 7
        %v1117 = vsub.s32 %v1114, %v1116
        %v1118 = vrot.slane %v1110, %v1117
        %v1120 = vunpack.c.l.s4 1934713408
        %v1121 = vunpack.c.0.s8 %v1120
        %v1122 = vlaneseq
        %v1123 = vshrl.u32 %v1122, 7
        %v1124 = vsub.s32 %v1121, %v1123
        %v1125 = vrot.slane %v1111, %v1124
        %v1126 = vcombine.low %v1093, %v1093
        %v1127 = vcombine.high %v1093, %v1093
        %v1129 = vunpack.c.l.s4 1934713408
        %v1130 = vunpack.c.0.s8 %v1129
        %v1131 = vlaneseq
        %v1132 = vshrl.u32 %v1131, 7
        %v1133 = vsub.s32 %v1130, %v1132
        %v1134 = vrot.slane %v1126, %v1133
        %v1136 = vunpack.c.l.s4 1934713408
        %v1137 = vunpack.c.0.s8 %v1136
        %v1138 = vlaneseq
        %v1139 = vshrl.u32 %v1138, 7
        %v1140 = vsub.s32 %v1137, %v1139
        %v1141 = vrot.slane %v1127, %v1140
        %v1142 = vcombine.low %v1102, %v1102
        %v1143 = vcombine.high %v1102, %v1102
        %v1145 = vunpack.c.l.s4 1934713408
        %v1146 = vunpack.c.0.s8 %v1145
        %v1147 = vlaneseq
        %v1148 = vshrl.u32 %v1147, 7
        %v1149 = vsub.s32 %v1146, %v1148
        %v1150 = vrot.slane %v1142, %v1149
        %v1152 = vunpack.c.l.s4 1934713408
        %v1153 = vunpack.c.0.s8 %v1152
        %v1154 = vlaneseq
        %v1155 = vshrl.u32 %v1154, 7
        %v1156 = vsub.s32 %v1153, %v1155
        %v1157 = vrot.slane %v1143, %v1156
        %v1158 = vcombine.low %v1109, %v1109
        %v1159 = vcombine.high %v1109, %v1109
        %v1161 = vunpack.c.l.s4 1934713408
        %v1162 = vunpack.c.0.s8 %v1161
        %v1163 = vlaneseq
        %v1164 = vshrl.u32 %v1163, 7
        %v1165 = vsub.s32 %v1162, %v1164
        %v1166 = vrot.slane %v1158, %v1165
        %v1168 = vunpack.c.l.s4 1934713408
        %v1169 = vunpack.c.0.s8 %v1168
        %v1170 = vlaneseq
        %v1171 = vshrl.u32 %v1170, 7
        %v1172 = vsub.s32 %v1169, %v1171
        %v1173 = vrot.slane %v1159, %v1172
        %v1174 = vcombine.low %v1118, %v1150
        %v1175 = vcombine.high %v1118, %v1150
        %v1176 = vcombine.low %v1125, %v1157
        %v1177 = vcombine.high %v1125, %v1157
        %v1178 = vcombine.low %v1134, %v1166
        %v1179 = vcombine.high %v1134, %v1166
        %v1180 = vcombine.low %v1141, %v1173
        %v1181 = vcombine.high %v1141, %v1173
        %v1182 = vcombine.low %v304, %v315
        %v1183 = vcombine.high %v304, %v315
        %v1185 = vunpack.c.l.s4 1983009808
        %v1186 = vunpack.c.0.s8 %v1185
        %v1187 = vlaneseq
        %v1188 = vshrl.u32 %v1187, 7
        %v1189 = vsub.s32 %v1186, %v1188
        %v1190 = vrot.slane %v1182, %v1189
        %v1192 = vunpack.c.l.s4 1983009808
        %v1193 = vunpack.c.0.s8 %v1192
        %v1194 = vlaneseq
        %v1195 = vshrl.u32 %v1194, 7
        %v1196 = vsub.s32 %v1193, %v1195
        %v1197 = vrot.slane %v1183, %v1196
        %v1198 = vcombine.low %v326, %v337
        %v1199 = vcombine.high %v326, %v337
        %v1201 = vunpack.c.l.s4 1983009808
        %v1202 = vunpack.c.0.s8 %v1201
        %v1203 = vlaneseq
        %v1204 = vshrl.u32 %v1203, 7
        %v1205 = vsub.s32 %v1202, %v1204
        %v1206 = vrot.slane %v1198, %v1205
        %v1208 = vunpack.c.l.s4 1983009808
        %v1209 = vunpack.c.0.s8 %v1208
        %v1210 = vlaneseq
        %v1211 = vshrl.u32 %v1210, 7
        %v1212 = vsub.s32 %v1209, %v1211
        %v1213 = vrot.slane %v1199, %v1212
        %v1214 = vcombine.low %v1190, %v1190
        %v1215 = vcombine.high %v1190, %v1190
        %v1217 = vunpack.c.l.s4 1934713408
        %v1218 = vunpack.c.0.s8 %v1217
        %v1219 = vlaneseq
        %v1220 = vshrl.u32 %v1219, 7
        %v1221 = vsub.s32 %v1218, %v1220
        %v1222 = vrot.slane %v1214, %v1221
        %v1224 = vunpack.c.l.s4 1934713408
        %v1225 = vunpack.c.0.s8 %v1224
        %v1226 = vlaneseq
        %v1227 = vshrl.u32 %v1226, 7
        %v1228 = vsub.s32 %v1225, %v1227
        %v1229 = vrot.slane %v1215, %v1228
        %v1230 = vcombine.low %v1197, %v1197
        %v1231 = vcombine.high %v1197, %v1197
        %v1233 = vunpack.c.l.s4 1934713408
        %v1234 = vunpack.c.0.s8 %v1233
        %v1235 = vlaneseq
        %v1236 = vshrl.u32 %v1235, 7
        %v1237 = vsub.s32 %v1234, %v1236
        %v1238 = vrot.slane %v1230, %v1237
        %v1240 = vunpack.c.l.s4 1934713408
        %v1241 = vunpack.c.0.s8 %v1240
        %v1242 = vlaneseq
        %v1243 = vshrl.u32 %v1242, 7
        %v1244 = vsub.s32 %v1241, %v1243
        %v1245 = vrot.slane %v1231, %v1244
        %v1246 = vcombine.low %v1206, %v1206
        %v1247 = vcombine.high %v1206, %v1206
        %v1249 = vunpack.c.l.s4 1934713408
        %v1250 = vunpack.c.0.s8 %v1249
        %v1251 = vlaneseq
        %v1252 = vshrl.u32 %v1251, 7
        %v1253 = vsub.s32 %v1250, %v1252
        %v1254 = vrot.slane %v1246, %v1253
        %v1256 = vunpack.c.l.s4 1934713408
        %v1257 = vunpack.c.0.s8 %v1256
        %v1258 = vlaneseq
        %v1259 = vshrl.u32 %v1258, 7
        %v1260 = vsub.s32 %v1257, %v1259
        %v1261 = vrot.slane %v1247, %v1260
        %v1262 = vcombine.low %v1213, %v1213
        %v1263 = vcombine.high %v1213, %v1213
        %v1265 = vunpack.c.l.s4 1934713408
        %v1266 = vunpack.c.0.s8 %v1265
        %v1267 = vlaneseq
        %v1268 = vshrl.u32 %v1267, 7
        %v1269 = vsub.s32 %v1266, %v1268
        %v1270 = vrot.slane %v1262, %v1269
        %v1272 = vunpack.c.l.s4 1934713408
        %v1273 = vunpack.c.0.s8 %v1272
        %v1274 = vlaneseq
        %v1275 = vshrl.u32 %v1274, 7
        %v1276 = vsub.s32 %v1273, %v1275
        %v1277 = vrot.slane %v1263, %v1276
        %v1278 = vcombine.low %v1222, %v1254
        %v1279 = vcombine.high %v1222, %v1254
        %v1280 = vcombine.low %v1229, %v1261
        %v1281 = vcombine.high %v1229, %v1261
        %v1282 = vcombine.low %v1238, %v1270
        %v1283 = vcombine.high %v1238, %v1270
        %v1284 = vcombine.low %v1245, %v1277
        %v1285 = vcombine.high %v1245, %v1277
        %v1286 = vcombine.low %v176, %v187
        %v1287 = vcombine.high %v176, %v187
        %v1289 = vunpack.c.l.s4 1983009808
        %v1290 = vunpack.c.0.s8 %v1289
        %v1291 = vlaneseq
        %v1292 = vshrl.u32 %v1291, 7
        %v1293 = vsub.s32 %v1290, %v1292
        %v1294 = vrot.slane %v1286, %v1293
        %v1296 = vunpack.c.l.s4 1983009808
        %v1297 = vunpack.c.0.s8 %v1296
        %v1298 = vlaneseq
        %v1299 = vshrl.u32 %v1298, 7
        %v1300 = vsub.s32 %v1297, %v1299
        %v1301 = vrot.slane %v1287, %v1300
        %v1302 = vcombine.low %v198, %v209
        %v1303 = vcombine.high %v198, %v209
        %v1305 = vunpack.c.l.s4 1983009808
        %v1306 = vunpack.c.0.s8 %v1305
        %v1307 = vlaneseq
        %v1308 = vshrl.u32 %v1307, 7
        %v1309 = vsub.s32 %v1306, %v1308
        %v1310 = vrot.slane %v1302, %v1309
        %v1312 = vunpack.c.l.s4 1983009808
        %v1313 = vunpack.c.0.s8 %v1312
        %v1314 = vlaneseq
        %v1315 = vshrl.u32 %v1314, 7
        %v1316 = vsub.s32 %v1313, %v1315
        %v1317 = vrot.slane %v1303, %v1316
        %v1318 = vcombine.low %v1294, %v1294
        %v1319 = vcombine.high %v1294, %v1294
        %v1321 = vunpack.c.l.s4 1934713408
        %v1322 = vunpack.c.0.s8 %v1321
        %v1323 = vlaneseq
        %v1324 = vshrl.u32 %v1323, 7
        %v1325 = vsub.s32 %v1322, %v1324
        %v1326 = vrot.slane %v1318, %v1325
        %v1328 = vunpack.c.l.s4 1934713408
        %v1329 = vunpack.c.0.s8 %v1328
        %v1330 = vlaneseq
        %v1331 = vshrl.u32 %v1330, 7
        %v1332 = vsub.s32 %v1329, %v1331
        %v1333 = vrot.slane %v1319, %v1332
        %v1334 = vcombine.low %v1301, %v1301
        %v1335 = vcombine.high %v1301, %v1301
        %v1337 = vunpack.c.l.s4 1934713408
        %v1338 = vunpack.c.0.s8 %v1337
        %v1339 = vlaneseq
        %v1340 = vshrl.u32 %v1339, 7
        %v1341 = vsub.s32 %v1338, %v1340
        %v1342 = vrot.slane %v1334, %v1341
        %v1344 = vunpack.c.l.s4 1934713408
        %v1345 = vunpack.c.0.s8 %v1344
        %v1346 = vlaneseq
        %v1347 = vshrl.u32 %v1346, 7
        %v1348 = vsub.s32 %v1345, %v1347
        %v1349 = vrot.slane %v1335, %v1348
        %v1350 = vcombine.low %v1310, %v1310
        %v1351 = vcombine.high %v1310, %v1310
        %v1353 = vunpack.c.l.s4 1934713408
        %v1354 = vunpack.c.0.s8 %v1353
        %v1355 = vlaneseq
        %v1356 = vshrl.u32 %v1355, 7
        %v1357 = vsub.s32 %v1354, %v1356
        %v1358 = vrot.slane %v1350, %v1357
        %v1360 = vunpack.c.l.s4 1934713408
        %v1361 = vunpack.c.0.s8 %v1360
        %v1362 = vlaneseq
        %v1363 = vshrl.u32 %v1362, 7
        %v1364 = vsub.s32 %v1361, %v1363
        %v1365 = vrot.slane %v1351, %v1364
        %v1366 = vcombine.low %v1317, %v1317
        %v1367 = vcombine.high %v1317, %v1317
        %v1369 = vunpack.c.l.s4 1934713408
        %v1370 = vunpack.c.0.s8 %v1369
        %v1371 = vlaneseq
        %v1372 = vshrl.u32 %v1371, 7
        %v1373 = vsub.s32 %v1370, %v1372
        %v1374 = vrot.slane %v1366, %v1373
        %v1376 = vunpack.c.l.s4 1934713408
        %v1377 = vunpack.c.0.s8 %v1376
        %v1378 = vlaneseq
        %v1379 = vshrl.u32 %v1378, 7
        %v1380 = vsub.s32 %v1377, %v1379
        %v1381 = vrot.slane %v1367, %v1380
        %v1382 = vcombine.low %v1326, %v1358
        %v1383 = vcombine.high %v1326, %v1358
        %v1384 = vcombine.low %v1333, %v1365
        %v1385 = vcombine.high %v1333, %v1365
        %v1386 = vcombine.low %v1342, %v1374
        %v1387 = vcombine.high %v1342, %v1374
        %v1388 = vcombine.low %v1349, %v1381
        %v1389 = vcombine.high %v1349, %v1381
        %v1390 = vcombine.low %v220, %v231
        %v1391 = vcombine.high %v220, %v231
        %v1393 = vunpack.c.l.s4 1983009808
        %v1394 = vunpack.c.0.s8 %v1393
        %v1395 = vlaneseq
        %v1396 = vshrl.u32 %v1395, 7
        %v1397 = vsub.s32 %v1394, %v1396
        %v1398 = vrot.slane %v1390, %v1397
        %v1400 = vunpack.c.l.s4 1983009808
        %v1401 = vunpack.c.0.s8 %v1400
        %v1402 = vlaneseq
        %v1403 = vshrl.u32 %v1402, 7
        %v1404 = vsub.s32 %v1401, %v1403
        %v1405 = vrot.slane %v1391, %v1404
        %v1406 = vcombine.low %v242, %v253
        %v1407 = vcombine.high %v242, %v253
        %v1409 = vunpack.c.l.s4 1983009808
        %v1410 = vunpack.c.0.s8 %v1409
        %v1411 = vlaneseq
        %v1412 = vshrl.u32 %v1411, 7
        %v1413 = vsub.s32 %v1410, %v1412
        %v1414 = vrot.slane %v1406, %v1413
        %v1416 = vunpack.c.l.s4 1983009808
        %v1417 = vunpack.c.0.s8 %v1416
        %v1418 = vlaneseq
        %v1419 = vshrl.u32 %v1418, 7
        %v1420 = vsub.s32 %v1417, %v1419
        %v1421 = vrot.slane %v1407, %v1420
        %v1422 = vcombine.low %v1398, %v1398
        %v1423 = vcombine.high %v1398, %v1398
        %v1425 = vunpack.c.l.s4 1934713408
        %v1426 = vunpack.c.0.s8 %v1425
        %v1427 = vlaneseq
        %v1428 = vshrl.u32 %v1427, 7
        %v1429 = vsub.s32 %v1426, %v1428
        %v1430 = vrot.slane %v1422, %v1429
        %v1432 = vunpack.c.l.s4 1934713408
        %v1433 = vunpack.c.0.s8 %v1432
        %v1434 = vlaneseq
        %v1435 = vshrl.u32 %v1434, 7
        %v1436 = vsub.s32 %v1433, %v1435
        %v1437 = vrot.slane %v1423, %v1436
        %v1438 = vcombine.low %v1405, %v1405
        %v1439 = vcombine.high %v1405, %v1405
        %v1441 = vunpack.c.l.s4 1934713408
        %v1442 = vunpack.c.0.s8 %v1441
        %v1443 = vlaneseq
        %v1444 = vshrl.u32 %v1443, 7
        %v1445 = vsub.s32 %v1442, %v1444
        %v1446 = vrot.slane %v1438, %v1445
        %v1448 = vunpack.c.l.s4 1934713408
        %v1449 = vunpack.c.0.s8 %v1448
        %v1450 = vlaneseq
        %v1451 = vshrl.u32 %v1450, 7
        %v1452 = vsub.s32 %v1449, %v1451
        %v1453 = vrot.slane %v1439, %v1452
        %v1454 = vcombine.low %v1414, %v1414
        %v1455 = vcombine.high %v1414, %v1414
        %v1457 = vunpack.c.l.s4 1934713408
        %v1458 = vunpack.c.0.s8 %v1457
        %v1459 = vlaneseq
        %v1460 = vshrl.u32 %v1459, 7
        %v1461 = vsub.s32 %v1458, %v1460
        %v1462 = vrot.slane %v1454, %v1461
        %v1464 = vunpack.c.l.s4 1934713408
        %v1465 = vunpack.c.0.s8 %v1464
        %v1466 = vlaneseq
        %v1467 = vshrl.u32 %v1466, 7
        %v1468 = vsub.s32 %v1465, %v1467
        %v1469 = vrot.slane %v1455, %v1468
        %v1470 = vcombine.low %v1421, %v1421
        %v1471 = vcombine.high %v1421, %v1421
        %v1473 = vunpack.c.l.s4 1934713408
        %v1474 = vunpack.c.0.s8 %v1473
        %v1475 = vlaneseq
        %v1476 = vshrl.u32 %v1475, 7
        %v1477 = vsub.s32 %v1474, %v1476
        %v1478 = vrot.slane %v1470, %v1477
        %v1480 = vunpack.c.l.s4 1934713408
        %v1481 = vunpack.c.0.s8 %v1480
        %v1482 = vlaneseq
        %v1483 = vshrl.u32 %v1482, 7
        %v1484 = vsub.s32 %v1481, %v1483
        %v1485 = vrot.slane %v1471, %v1484
        %v1486 = vcombine.low %v1430, %v1462
        %v1487 = vcombine.high %v1430, %v1462
        %v1488 = vcombine.low %v1437, %v1469
        %v1489 = vcombine.high %v1437, %v1469
        %v1490 = vcombine.low %v1446, %v1478
        %v1491 = vcombine.high %v1446, %v1478
        %v1492 = vcombine.low %v1453, %v1485
        %v1493 = vcombine.high %v1453, %v1485
        %v1494 = vcombine.low %v264, %v275
        %v1495 = vcombine.high %v264, %v275
        %v1497 = vunpack.c.l.s4 1983009808
        %v1498 = vunpack.c.0.s8 %v1497
        %v1499 = vlaneseq
        %v1500 = vshrl.u32 %v1499, 7
        %v1501 = vsub.s32 %v1498, %v1500
        %v1502 = vrot.slane %v1494, %v1501
        %v1504 = vunpack.c.l.s4 1983009808
        %v1505 = vunpack.c.0.s8 %v1504
        %v1506 = vlaneseq
        %v1507 = vshrl.u32 %v1506, 7
        %v1508 = vsub.s32 %v1505, %v1507
        %v1509 = vrot.slane %v1495, %v1508
        %v1510 = vcombine.low %v286, %v297
        %v1511 = vcombine.high %v286, %v297
        %v1513 = vunpack.c.l.s4 1983009808
        %v1514 = vunpack.c.0.s8 %v1513
        %v1515 = vlaneseq
        %v1516 = vshrl.u32 %v1515, 7
        %v1517 = vsub.s32 %v1514, %v1516
        %v1518 = vrot.slane %v1510, %v1517
        %v1520 = vunpack.c.l.s4 1983009808
        %v1521 = vunpack.c.0.s8 %v1520
        %v1522 = vlaneseq
        %v1523 = vshrl.u32 %v1522, 7
        %v1524 = vsub.s32 %v1521, %v1523
        %v1525 = vrot.slane %v1511, %v1524
        %v1526 = vcombine.low %v1502, %v1502
        %v1527 = vcombine.high %v1502, %v1502
        %v1529 = vunpack.c.l.s4 1934713408
        %v1530 = vunpack.c.0.s8 %v1529
        %v1531 = vlaneseq
        %v1532 = vshrl.u32 %v1531, 7
        %v1533 = vsub.s32 %v1530, %v1532
        %v1534 = vrot.slane %v1526, %v1533
        %v1536 = vunpack.c.l.s4 1934713408
        %v1537 = vunpack.c.0.s8 %v1536
        %v1538 = vlaneseq
        %v1539 = vshrl.u32 %v1538, 7
        %v1540 = vsub.s32 %v1537, %v1539
        %v1541 = vrot.slane %v1527, %v1540
        %v1542 = vcombine.low %v1509, %v1509
        %v1543 = vcombine.high %v1509, %v1509
        %v1545 = vunpack.c.l.s4 1934713408
        %v1546 = vunpack.c.0.s8 %v1545
        %v1547 = vlaneseq
        %v1548 = vshrl.u32 %v1547, 7
        %v1549 = vsub.s32 %v1546, %v1548
        %v1550 = vrot.slane %v1542, %v1549
        %v1552 = vunpack.c.l.s4 1934713408
        %v1553 = vunpack.c.0.s8 %v1552
        %v1554 = vlaneseq
        %v1555 = vshrl.u32 %v1554, 7
        %v1556 = vsub.s32 %v1553, %v1555
        %v1557 = vrot.slane %v1543, %v1556
        %v1558 = vcombine.low %v1518, %v1518
        %v1559 = vcombine.high %v1518, %v1518
        %v1561 = vunpack.c.l.s4 1934713408
        %v1562 = vunpack.c.0.s8 %v1561
        %v1563 = vlaneseq
        %v1564 = vshrl.u32 %v1563, 7
        %v1565 = vsub.s32 %v1562, %v1564
        %v1566 = vrot.slane %v1558, %v1565
        %v1568 = vunpack.c.l.s4 1934713408
        %v1569 = vunpack.c.0.s8 %v1568
        %v1570 = vlaneseq
        %v1571 = vshrl.u32 %v1570, 7
        %v1572 = vsub.s32 %v1569, %v1571
        %v1573 = vrot.slane %v1559, %v1572
        %v1574 = vcombine.low %v1525, %v1525
        %v1575 = vcombine.high %v1525, %v1525
        %v1577 = vunpack.c.l.s4 1934713408
        %v1578 = vunpack.c.0.s8 %v1577
        %v1579 = vlaneseq
        %v1580 = vshrl.u32 %v1579, 7
        %v1581 = vsub.s32 %v1578, %v1580
        %v1582 = vrot.slane %v1574, %v1581
        %v1584 = vunpack.c.l.s4 1934713408
        %v1585 = vunpack.c.0.s8 %v1584
        %v1586 = vlaneseq
        %v1587 = vshrl.u32 %v1586, 7
        %v1588 = vsub.s32 %v1585, %v1587
        %v1589 = vrot.slane %v1575, %v1588
        %v1590 = vcombine.low %v1534, %v1566
        %v1591 = vcombine.high %v1534, %v1566
        %v1592 = vcombine.low %v1541, %v1573
        %v1593 = vcombine.high %v1541, %v1573
        %v1594 = vcombine.low %v1550, %v1582
        %v1595 = vcombine.high %v1550, %v1582
        %v1596 = vcombine.low %v1557, %v1589
        %v1597 = vcombine.high %v1557, %v1589
        %v1598 = vcombine.low %v308, %v319
        %v1599 = vcombine.high %v308, %v319
        %v1601 = vunpack.c.l.s4 1983009808
        %v1602 = vunpack.c.0.s8 %v1601
        %v1603 = vlaneseq
        %v1604 = vshrl.u32 %v1603, 7
        %v1605 = vsub.s32 %v1602, %v1604
        %v1606 = vrot.slane %v1598, %v1605
        %v1608 = vunpack.c.l.s4 1983009808
        %v1609 = vunpack.c.0.s8 %v1608
        %v1610 = vlaneseq
        %v1611 = vshrl.u32 %v1610, 7
        %v1612 = vsub.s32 %v1609, %v1611
        %v1613 = vrot.slane %v1599, %v1612
        %v1614 = vcombine.low %v330, %v341
        %v1615 = vcombine.high %v330, %v341
        %v1617 = vunpack.c.l.s4 1983009808
        %v1618 = vunpack.c.0.s8 %v1617
        %v1619 = vlaneseq
        %v1620 = vshrl.u32 %v1619, 7
        %v1621 = vsub.s32 %v1618, %v1620
        %v1622 = vrot.slane %v1614, %v1621
        %v1624 = vunpack.c.l.s4 1983009808
        %v1625 = vunpack.c.0.s8 %v1624
        %v1626 = vlaneseq
        %v1627 = vshrl.u32 %v1626, 7
        %v1628 = vsub.s32 %v1625, %v1627
        %v1629 = vrot.slane %v1615, %v1628
        %v1630 = vcombine.low %v1606, %v1606
        %v1631 = vcombine.high %v1606, %v1606
        %v1633 = vunpack.c.l.s4 1934713408
        %v1634 = vunpack.c.0.s8 %v1633
        %v1635 = vlaneseq
        %v1636 = vshrl.u32 %v1635, 7
        %v1637 = vsub.s32 %v1634, %v1636
        %v1638 = vrot.slane %v1630, %v1637
        %v1640 = vunpack.c.l.s4 1934713408
        %v1641 = vunpack.c.0.s8 %v1640
        %v1642 = vlaneseq
        %v1643 = vshrl.u32 %v1642, 7
        %v1644 = vsub.s32 %v1641, %v1643
        %v1645 = vrot.slane %v1631, %v1644
        %v1646 = vcombine.low %v1613, %v1613
        %v1647 = vcombine.high %v1613, %v1613
        %v1649 = vunpack.c.l.s4 1934713408
        %v1650 = vunpack.c.0.s8 %v1649
        %v1651 = vlaneseq
        %v1652 = vshrl.u32 %v1651, 7
        %v1653 = vsub.s32 %v1650, %v1652
        %v1654 = vrot.slane %v1646, %v1653
        %v1656 = vunpack.c.l.s4 1934713408
        %v1657 = vunpack.c.0.s8 %v1656
        %v1658 = vlaneseq
        %v1659 = vshrl.u32 %v1658, 7
        %v1660 = vsub.s32 %v1657, %v1659
        %v1661 = vrot.slane %v1647, %v1660
        %v1662 = vcombine.low %v1622, %v1622
        %v1663 = vcombine.high %v1622, %v1622
        %v1665 = vunpack.c.l.s4 1934713408
        %v1666 = vunpack.c.0.s8 %v1665
        %v1667 = vlaneseq
        %v1668 = vshrl.u32 %v1667, 7
        %v1669 = vsub.s32 %v1666, %v1668
        %v1670 = vrot.slane %v1662, %v1669
        %v1672 = vunpack.c.l.s4 1934713408
        %v1673 = vunpack.c.0.s8 %v1672
        %v1674 = vlaneseq
        %v1675 = vshrl.u32 %v1674, 7
        %v1676 = vsub.s32 %v1673, %v1675
        %v1677 = vrot.slane %v1663, %v1676
        %v1678 = vcombine.low %v1629, %v1629
        %v1679 = vcombine.high %v1629, %v1629
        %v1681 = vunpack.c.l.s4 1934713408
        %v1682 = vunpack.c.0.s8 %v1681
        %v1683 = vlaneseq
        %v1684 = vshrl.u32 %v1683, 7
        %v1685 = vsub.s32 %v1682, %v1684
        %v1686 = vrot.slane %v1678, %v1685
        %v1688 = vunpack.c.l.s4 1934713408
        %v1689 = vunpack.c.0.s8 %v1688
        %v1690 = vlaneseq
        %v1691 = vshrl.u32 %v1690, 7
        %v1692 = vsub.s32 %v1689, %v1691
        %v1693 = vrot.slane %v1679, %v1692
        %v1694 = vcombine.low %v1638, %v1670
        %v1695 = vcombine.high %v1638, %v1670
        %v1696 = vcombine.low %v1645, %v1677
        %v1697 = vcombine.high %v1645, %v1677
        %v1698 = vcombine.low %v1654, %v1686
        %v1699 = vcombine.high %v1654, %v1686
        %v1700 = vcombine.low %v1661, %v1693
        %v1701 = vcombine.high %v1661, %v1693
        %v1702 = vcombine.low %v348, %v359
        %v1703 = vcombine.high %v348, %v359
        %v1705 = vunpack.c.l.s4 1983009808
        %v1706 = vunpack.c.0.s8 %v1705
        %v1707 = vlaneseq
        %v1708 = vshrl.u32 %v1707, 7
        %v1709 = vsub.s32 %v1706, %v1708
        %v1710 = vrot.slane %v1702, %v1709
        %v1712 = vunpack.c.l.s4 1983009808
        %v1713 = vunpack.c.0.s8 %v1712
        %v1714 = vlaneseq
        %v1715 = vshrl.u32 %v1714, 7
        %v1716 = vsub.s32 %v1713, %v1715
        %v1717 = vrot.slane %v1703, %v1716
        %v1718 = vcombine.low %v370, %v381
        %v1719 = vcombine.high %v370, %v381
        %v1721 = vunpack.c.l.s4 1983009808
        %v1722 = vunpack.c.0.s8 %v1721
        %v1723 = vlaneseq
        %v1724 = vshrl.u32 %v1723, 7
        %v1725 = vsub.s32 %v1722, %v1724
        %v1726 = vrot.slane %v1718, %v1725
        %v1728 = vunpack.c.l.s4 1983009808
        %v1729 = vunpack.c.0.s8 %v1728
        %v1730 = vlaneseq
        %v1731 = vshrl.u32 %v1730, 7
        %v1732 = vsub.s32 %v1729, %v1731
        %v1733 = vrot.slane %v1719, %v1732
        %v1734 = vcombine.low %v1710, %v1710
        %v1735 = vcombine.high %v1710, %v1710
        %v1737 = vunpack.c.l.s4 1934713408
        %v1738 = vunpack.c.0.s8 %v1737
        %v1739 = vlaneseq
        %v1740 = vshrl.u32 %v1739, 7
        %v1741 = vsub.s32 %v1738, %v1740
        %v1742 = vrot.slane %v1734, %v1741
        %v1744 = vunpack.c.l.s4 1934713408
        %v1745 = vunpack.c.0.s8 %v1744
        %v1746 = vlaneseq
        %v1747 = vshrl.u32 %v1746, 7
        %v1748 = vsub.s32 %v1745, %v1747
        %v1749 = vrot.slane %v1735, %v1748
        %v1750 = vcombine.low %v1717, %v1717
        %v1751 = vcombine.high %v1717, %v1717
        %v1753 = vunpack.c.l.s4 1934713408
        %v1754 = vunpack.c.0.s8 %v1753
        %v1755 = vlaneseq
        %v1756 = vshrl.u32 %v1755, 7
        %v1757 = vsub.s32 %v1754, %v1756
        %v1758 = vrot.slane %v1750, %v1757
        %v1760 = vunpack.c.l.s4 1934713408
        %v1761 = vunpack.c.0.s8 %v1760
        %v1762 = vlaneseq
        %v1763 = vshrl.u32 %v1762, 7
        %v1764 = vsub.s32 %v1761, %v1763
        %v1765 = vrot.slane %v1751, %v1764
        %v1766 = vcombine.low %v1726, %v1726
        %v1767 = vcombine.high %v1726, %v1726
        %v1769 = vunpack.c.l.s4 1934713408
        %v1770 = vunpack.c.0.s8 %v1769
        %v1771 = vlaneseq
        %v1772 = vshrl.u32 %v1771, 7
        %v1773 = vsub.s32 %v1770, %v1772
        %v1774 = vrot.slane %v1766, %v1773
        %v1776 = vunpack.c.l.s4 1934713408
        %v1777 = vunpack.c.0.s8 %v1776
        %v1778 = vlaneseq
        %v1779 = vshrl.u32 %v1778, 7
        %v1780 = vsub.s32 %v1777, %v1779
        %v1781 = vrot.slane %v1767, %v1780
        %v1782 = vcombine.low %v1733, %v1733
        %v1783 = vcombine.high %v1733, %v1733
        %v1785 = vunpack.c.l.s4 1934713408
        %v1786 = vunpack.c.0.s8 %v1785
        %v1787 = vlaneseq
        %v1788 = vshrl.u32 %v1787, 7
        %v1789 = vsub.s32 %v1786, %v1788
        %v1790 = vrot.slane %v1782, %v1789
        %v1792 = vunpack.c.l.s4 1934713408
        %v1793 = vunpack.c.0.s8 %v1792
        %v1794 = vlaneseq
        %v1795 = vshrl.u32 %v1794, 7
        %v1796 = vsub.s32 %v1793, %v1795
        %v1797 = vrot.slane %v1783, %v1796
        %v1798 = vcombine.low %v1742, %v1774
        %v1799 = vcombine.high %v1742, %v1774
        %v1800 = vcombine.low %v1749, %v1781
        %v1801 = vcombine.high %v1749, %v1781
        %v1802 = vcombine.low %v1758, %v1790
        %v1803 = vcombine.high %v1758, %v1790
        %v1804 = vcombine.low %v1765, %v1797
        %v1805 = vcombine.high %v1765, %v1797
        %v1806 = vcombine.low %v392, %v403
        %v1807 = vcombine.high %v392, %v403
        %v1809 = vunpack.c.l.s4 1983009808
        %v1810 = vunpack.c.0.s8 %v1809
        %v1811 = vlaneseq
        %v1812 = vshrl.u32 %v1811, 7
        %v1813 = vsub.s32 %v1810, %v1812
        %v1814 = vrot.slane %v1806, %v1813
        %v1816 = vunpack.c.l.s4 1983009808
        %v1817 = vunpack.c.0.s8 %v1816
        %v1818 = vlaneseq
        %v1819 = vshrl.u32 %v1818, 7
        %v1820 = vsub.s32 %v1817, %v1819
        %v1821 = vrot.slane %v1807, %v1820
        %v1822 = vcombine.low %v414, %v425
        %v1823 = vcombine.high %v414, %v425
        %v1825 = vunpack.c.l.s4 1983009808
        %v1826 = vunpack.c.0.s8 %v1825
        %v1827 = vlaneseq
        %v1828 = vshrl.u32 %v1827, 7
        %v1829 = vsub.s32 %v1826, %v1828
        %v1830 = vrot.slane %v1822, %v1829
        %v1832 = vunpack.c.l.s4 1983009808
        %v1833 = vunpack.c.0.s8 %v1832
        %v1834 = vlaneseq
        %v1835 = vshrl.u32 %v1834, 7
        %v1836 = vsub.s32 %v1833, %v1835
        %v1837 = vrot.slane %v1823, %v1836
        %v1838 = vcombine.low %v1814, %v1814
        %v1839 = vcombine.high %v1814, %v1814
        %v1841 = vunpack.c.l.s4 1934713408
        %v1842 = vunpack.c.0.s8 %v1841
        %v1843 = vlaneseq
        %v1844 = vshrl.u32 %v1843, 7
        %v1845 = vsub.s32 %v1842, %v1844
        %v1846 = vrot.slane %v1838, %v1845
        %v1848 = vunpack.c.l.s4 1934713408
        %v1849 = vunpack.c.0.s8 %v1848
        %v1850 = vlaneseq
        %v1851 = vshrl.u32 %v1850, 7
        %v1852 = vsub.s32 %v1849, %v1851
        %v1853 = vrot.slane %v1839, %v1852
        %v1854 = vcombine.low %v1821, %v1821
        %v1855 = vcombine.high %v1821, %v1821
        %v1857 = vunpack.c.l.s4 1934713408
        %v1858 = vunpack.c.0.s8 %v1857
        %v1859 = vlaneseq
        %v1860 = vshrl.u32 %v1859, 7
        %v1861 = vsub.s32 %v1858, %v1860
        %v1862 = vrot.slane %v1854, %v1861
        %v1864 = vunpack.c.l.s4 1934713408
        %v1865 = vunpack.c.0.s8 %v1864
        %v1866 = vlaneseq
        %v1867 = vshrl.u32 %v1866, 7
        %v1868 = vsub.s32 %v1865, %v1867
        %v1869 = vrot.slane %v1855, %v1868
        %v1870 = vcombine.low %v1830, %v1830
        %v1871 = vcombine.high %v1830, %v1830
        %v1873 = vunpack.c.l.s4 1934713408
        %v1874 = vunpack.c.0.s8 %v1873
        %v1875 = vlaneseq
        %v1876 = vshrl.u32 %v1875, 7
        %v1877 = vsub.s32 %v1874, %v1876
        %v1878 = vrot.slane %v1870, %v1877
        %v1880 = vunpack.c.l.s4 1934713408
        %v1881 = vunpack.c.0.s8 %v1880
        %v1882 = vlaneseq
        %v1883 = vshrl.u32 %v1882, 7
        %v1884 = vsub.s32 %v1881, %v1883
        %v1885 = vrot.slane %v1871, %v1884
        %v1886 = vcombine.low %v1837, %v1837
        %v1887 = vcombine.high %v1837, %v1837
        %v1889 = vunpack.c.l.s4 1934713408
        %v1890 = vunpack.c.0.s8 %v1889
        %v1891 = vlaneseq
        %v1892 = vshrl.u32 %v1891, 7
        %v1893 = vsub.s32 %v1890, %v1892
        %v1894 = vrot.slane %v1886, %v1893
        %v1896 = vunpack.c.l.s4 1934713408
        %v1897 = vunpack.c.0.s8 %v1896
        %v1898 = vlaneseq
        %v1899 = vshrl.u32 %v1898, 7
        %v1900 = vsub.s32 %v1897, %v1899
        %v1901 = vrot.slane %v1887, %v1900
        %v1902 = vcombine.low %v1846, %v1878
        %v1903 = vcombine.high %v1846, %v1878
        %v1904 = vcombine.low %v1853, %v1885
        %v1905 = vcombine.high %v1853, %v1885
        %v1906 = vcombine.low %v1862, %v1894
        %v1907 = vcombine.high %v1862, %v1894
        %v1908 = vcombine.low %v1869, %v1901
        %v1909 = vcombine.high %v1869, %v1901
        %v1910 = vcombine.low %v436, %v447
        %v1911 = vcombine.high %v436, %v447
        %v1913 = vunpack.c.l.s4 1983009808
        %v1914 = vunpack.c.0.s8 %v1913
        %v1915 = vlaneseq
        %v1916 = vshrl.u32 %v1915, 7
        %v1917 = vsub.s32 %v1914, %v1916
        %v1918 = vrot.slane %v1910, %v1917
        %v1920 = vunpack.c.l.s4 1983009808
        %v1921 = vunpack.c.0.s8 %v1920
        %v1922 = vlaneseq
        %v1923 = vshrl.u32 %v1922, 7
        %v1924 = vsub.s32 %v1921, %v1923
        %v1925 = vrot.slane %v1911, %v1924
        %v1926 = vcombine.low %v458, %v469
        %v1927 = vcombine.high %v458, %v469
        %v1929 = vunpack.c.l.s4 1983009808
        %v1930 = vunpack.c.0.s8 %v1929
        %v1931 = vlaneseq
        %v1932 = vshrl.u32 %v1931, 7
        %v1933 = vsub.s32 %v1930, %v1932
        %v1934 = vrot.slane %v1926, %v1933
        %v1936 = vunpack.c.l.s4 1983009808
        %v1937 = vunpack.c.0.s8 %v1936
        %v1938 = vlaneseq
        %v1939 = vshrl.u32 %v1938, 7
        %v1940 = vsub.s32 %v1937, %v1939
        %v1941 = vrot.slane %v1927, %v1940
        %v1942 = vcombine.low %v1918, %v1918
        %v1943 = vcombine.high %v1918, %v1918
        %v1945 = vunpack.c.l.s4 1934713408
        %v1946 = vunpack.c.0.s8 %v1945
        %v1947 = vlaneseq
        %v1948 = vshrl.u32 %v1947, 7
        %v1949 = vsub.s32 %v1946, %v1948
        %v1950 = vrot.slane %v1942, %v1949
        %v1952 = vunpack.c.l.s4 1934713408
        %v1953 = vunpack.c.0.s8 %v1952
        %v1954 = vlaneseq
        %v1955 = vshrl.u32 %v1954, 7
        %v1956 = vsub.s32 %v1953, %v1955
        %v1957 = vrot.slane %v1943, %v1956
        %v1958 = vcombine.low %v1925, %v1925
        %v1959 = vcombine.high %v1925, %v1925
        %v1961 = vunpack.c.l.s4 1934713408
        %v1962 = vunpack.c.0.s8 %v1961
        %v1963 = vlaneseq
        %v1964 = vshrl.u32 %v1963, 7
        %v1965 = vsub.s32 %v1962, %v1964
        %v1966 = vrot.slane %v1958, %v1965
        %v1968 = vunpack.c.l.s4 1934713408
        %v1969 = vunpack.c.0.s8 %v1968
        %v1970 = vlaneseq
        %v1971 = vshrl.u32 %v1970, 7
        %v1972 = vsub.s32 %v1969, %v1971
        %v1973 = vrot.slane %v1959, %v1972
        %v1974 = vcombine.low %v1934, %v1934
        %v1975 = vcombine.high %v1934, %v1934
        %v1977 = vunpack.c.l.s4 1934713408
        %v1978 = vunpack.c.0.s8 %v1977
        %v1979 = vlaneseq
        %v1980 = vshrl.u32 %v1979, 7
        %v1981 = vsub.s32 %v1978, %v1980
        %v1982 = vrot.slane %v1974, %v1981
        %v1984 = vunpack.c.l.s4 1934713408
        %v1985 = vunpack.c.0.s8 %v1984
        %v1986 = vlaneseq
        %v1987 = vshrl.u32 %v1986, 7
        %v1988 = vsub.s32 %v1985, %v1987
        %v1989 = vrot.slane %v1975, %v1988
        %v1990 = vcombine.low %v1941, %v1941
        %v1991 = vcombine.high %v1941, %v1941
        %v1993 = vunpack.c.l.s4 1934713408
        %v1994 = vunpack.c.0.s8 %v1993
        %v1995 = vlaneseq
        %v1996 = vshrl.u32 %v1995, 7
        %v1997 = vsub.s32 %v1994, %v1996
        %v1998 = vrot.slane %v1990, %v1997
        %v2000 = vunpack.c.l.s4 1934713408
        %v2001 = vunpack.c.0.s8 %v2000
        %v2002 = vlaneseq
        %v2003 = vshrl.u32 %v2002, 7
        %v2004 = vsub.s32 %v2001, %v2003
        %v2005 = vrot.slane %v1991, %v2004
        %v2006 = vcombine.low %v1950, %v1982
        %v2007 = vcombine.high %v1950, %v1982
        %v2008 = vcombine.low %v1957, %v1989
        %v2009 = vcombine.high %v1957, %v1989
        %v2010 = vcombine.low %v1966, %v1998
        %v2011 = vcombine.high %v1966, %v1998
        %v2012 = vcombine.low %v1973, %v2005
        %v2013 = vcombine.high %v1973, %v2005
        %v2014 = vcombine.low %v480, %v491
        %v2015 = vcombine.high %v480, %v491
        %v2017 = vunpack.c.l.s4 1983009808
        %v2018 = vunpack.c.0.s8 %v2017
        %v2019 = vlaneseq
        %v2020 = vshrl.u32 %v2019, 7
        %v2021 = vsub.s32 %v2018, %v2020
        %v2022 = vrot.slane %v2014, %v2021
        %v2024 = vunpack.c.l.s4 1983009808
        %v2025 = vunpack.c.0.s8 %v2024
        %v2026 = vlaneseq
        %v2027 = vshrl.u32 %v2026, 7
        %v2028 = vsub.s32 %v2025, %v2027
        %v2029 = vrot.slane %v2015, %v2028
        %v2030 = vcombine.low %v502, %v513
        %v2031 = vcombine.high %v502, %v513
        %v2033 = vunpack.c.l.s4 1983009808
        %v2034 = vunpack.c.0.s8 %v2033
        %v2035 = vlaneseq
        %v2036 = vshrl.u32 %v2035, 7
        %v2037 = vsub.s32 %v2034, %v2036
        %v2038 = vrot.slane %v2030, %v2037
        %v2040 = vunpack.c.l.s4 1983009808
        %v2041 = vunpack.c.0.s8 %v2040
        %v2042 = vlaneseq
        %v2043 = vshrl.u32 %v2042, 7
        %v2044 = vsub.s32 %v2041, %v2043
        %v2045 = vrot.slane %v2031, %v2044
        %v2046 = vcombine.low %v2022, %v2022
        %v2047 = vcombine.high %v2022, %v2022
        %v2049 = vunpack.c.l.s4 1934713408
        %v2050 = vunpack.c.0.s8 %v2049
        %v2051 = vlaneseq
        %v2052 = vshrl.u32 %v2051, 7
        %v2053 = vsub.s32 %v2050, %v2052
        %v2054 = vrot.slane %v2046, %v2053
        %v2056 = vunpack.c.l.s4 1934713408
        %v2057 = vunpack.c.0.s8 %v2056
        %v2058 = vlaneseq
        %v2059 = vshrl.u32 %v2058, 7
        %v2060 = vsub.s32 %v2057, %v2059
        %v2061 = vrot.slane %v2047, %v2060
        %v2062 = vcombine.low %v2029, %v2029
        %v2063 = vcombine.high %v2029, %v2029
        %v2065 = vunpack.c.l.s4 1934713408
        %v2066 = vunpack.c.0.s8 %v2065
        %v2067 = vlaneseq
        %v2068 = vshrl.u32 %v2067, 7
        %v2069 = vsub.s32 %v2066, %v2068
        %v2070 = vrot.slane %v2062, %v2069
        %v2072 = vunpack.c.l.s4 1934713408
        %v2073 = vunpack.c.0.s8 %v2072
        %v2074 = vlaneseq
        %v2075 = vshrl.u32 %v2074, 7
        %v2076 = vsub.s32 %v2073, %v2075
        %v2077 = vrot.slane %v2063, %v2076
        %v2078 = vcombine.low %v2038, %v2038
        %v2079 = vcombine.high %v2038, %v2038
        %v2081 = vunpack.c.l.s4 1934713408
        %v2082 = vunpack.c.0.s8 %v2081
        %v2083 = vlaneseq
        %v2084 = vshrl.u32 %v2083, 7
        %v2085 = vsub.s32 %v2082, %v2084
        %v2086 = vrot.slane %v2078, %v2085
        %v2088 = vunpack.c.l.s4 1934713408
        %v2089 = vunpack.c.0.s8 %v2088
        %v2090 = vlaneseq
        %v2091 = vshrl.u32 %v2090, 7
        %v2092 = vsub.s32 %v2089, %v2091
        %v2093 = vrot.slane %v2079, %v2092
        %v2094 = vcombine.low %v2045, %v2045
        %v2095 = vcombine.high %v2045, %v2045
        %v2097 = vunpack.c.l.s4 1934713408
        %v2098 = vunpack.c.0.s8 %v2097
        %v2099 = vlaneseq
        %v2100 = vshrl.u32 %v2099, 7
        %v2101 = vsub.s32 %v2098, %v2100
        %v2102 = vrot.slane %v2094, %v2101
        %v2104 = vunpack.c.l.s4 1934713408
        %v2105 = vunpack.c.0.s8 %v2104
        %v2106 = vlaneseq
        %v2107 = vshrl.u32 %v2106, 7
        %v2108 = vsub.s32 %v2105, %v2107
        %v2109 = vrot.slane %v2095, %v2108
        %v2110 = vcombine.low %v2054, %v2086
        %v2111 = vcombine.high %v2054, %v2086
        %v2112 = vcombine.low %v2061, %v2093
        %v2113 = vcombine.high %v2061, %v2093
        %v2114 = vcombine.low %v2070, %v2102
        %v2115 = vcombine.high %v2070, %v2102
        %v2116 = vcombine.low %v2077, %v2109
        %v2117 = vcombine.high %v2077, %v2109
        %v2118 = vcombine.low %v352, %v363
        %v2119 = vcombine.high %v352, %v363
        %v2121 = vunpack.c.l.s4 1983009808
        %v2122 = vunpack.c.0.s8 %v2121
        %v2123 = vlaneseq
        %v2124 = vshrl.u32 %v2123, 7
        %v2125 = vsub.s32 %v2122, %v2124
        %v2126 = vrot.slane %v2118, %v2125
        %v2128 = vunpack.c.l.s4 1983009808
        %v2129 = vunpack.c.0.s8 %v2128
        %v2130 = vlaneseq
        %v2131 = vshrl.u32 %v2130, 7
        %v2132 = vsub.s32 %v2129, %v2131
        %v2133 = vrot.slane %v2119, %v2132
        %v2134 = vcombine.low %v374, %v385
        %v2135 = vcombine.high %v374, %v385
        %v2137 = vunpack.c.l.s4 1983009808
        %v2138 = vunpack.c.0.s8 %v2137
        %v2139 = vlaneseq
        %v2140 = vshrl.u32 %v2139, 7
        %v2141 = vsub.s32 %v2138, %v2140
        %v2142 = vrot.slane %v2134, %v2141
        %v2144 = vunpack.c.l.s4 1983009808
        %v2145 = vunpack.c.0.s8 %v2144
        %v2146 = vlaneseq
        %v2147 = vshrl.u32 %v2146, 7
        %v2148 = vsub.s32 %v2145, %v2147
        %v2149 = vrot.slane %v2135, %v2148
        %v2150 = vcombine.low %v2126, %v2126
        %v2151 = vcombine.high %v2126, %v2126
        %v2153 = vunpack.c.l.s4 1934713408
        %v2154 = vunpack.c.0.s8 %v2153
        %v2155 = vlaneseq
        %v2156 = vshrl.u32 %v2155, 7
        %v2157 = vsub.s32 %v2154, %v2156
        %v2158 = vrot.slane %v2150, %v2157
        %v2160 = vunpack.c.l.s4 1934713408
        %v2161 = vunpack.c.0.s8 %v2160
        %v2162 = vlaneseq
        %v2163 = vshrl.u32 %v2162, 7
        %v2164 = vsub.s32 %v2161, %v2163
        %v2165 = vrot.slane %v2151, %v2164
        %v2166 = vcombine.low %v2133, %v2133
        %v2167 = vcombine.high %v2133, %v2133
        %v2169 = vunpack.c.l.s4 1934713408
        %v2170 = vunpack.c.0.s8 %v2169
        %v2171 = vlaneseq
        %v2172 = vshrl.u32 %v2171, 7
        %v2173 = vsub.s32 %v2170, %v2172
        %v2174 = vrot.slane %v2166, %v2173
        %v2176 = vunpack.c.l.s4 1934713408
        %v2177 = vunpack.c.0.s8 %v2176
        %v2178 = vlaneseq
        %v2179 = vshrl.u32 %v2178, 7
        %v2180 = vsub.s32 %v2177, %v2179
        %v2181 = vrot.slane %v2167, %v2180
        %v2182 = vcombine.low %v2142, %v2142
        %v2183 = vcombine.high %v2142, %v2142
        %v2185 = vunpack.c.l.s4 1934713408
        %v2186 = vunpack.c.0.s8 %v2185
        %v2187 = vlaneseq
        %v2188 = vshrl.u32 %v2187, 7
        %v2189 = vsub.s32 %v2186, %v2188
        %v2190 = vrot.slane %v2182, %v2189
        %v2192 = vunpack.c.l.s4 1934713408
        %v2193 = vunpack.c.0.s8 %v2192
        %v2194 = vlaneseq
        %v2195 = vshrl.u32 %v2194, 7
        %v2196 = vsub.s32 %v2193, %v2195
        %v2197 = vrot.slane %v2183, %v2196
        %v2198 = vcombine.low %v2149, %v2149
        %v2199 = vcombine.high %v2149, %v2149
        %v2201 = vunpack.c.l.s4 1934713408
        %v2202 = vunpack.c.0.s8 %v2201
        %v2203 = vlaneseq
        %v2204 = vshrl.u32 %v2203, 7
        %v2205 = vsub.s32 %v2202, %v2204
        %v2206 = vrot.slane %v2198, %v2205
        %v2208 = vunpack.c.l.s4 1934713408
        %v2209 = vunpack.c.0.s8 %v2208
        %v2210 = vlaneseq
        %v2211 = vshrl.u32 %v2210, 7
        %v2212 = vsub.s32 %v2209, %v2211
        %v2213 = vrot.slane %v2199, %v2212
        %v2214 = vcombine.low %v2158, %v2190
        %v2215 = vcombine.high %v2158, %v2190
        %v2216 = vcombine.low %v2165, %v2197
        %v2217 = vcombine.high %v2165, %v2197
        %v2218 = vcombine.low %v2174, %v2206
        %v2219 = vcombine.high %v2174, %v2206
        %v2220 = vcombine.low %v2181, %v2213
        %v2221 = vcombine.high %v2181, %v2213
        %v2222 = vcombine.low %v396, %v407
        %v2223 = vcombine.high %v396, %v407
        %v2225 = vunpack.c.l.s4 1983009808
        %v2226 = vunpack.c.0.s8 %v2225
        %v2227 = vlaneseq
        %v2228 = vshrl.u32 %v2227, 7
        %v2229 = vsub.s32 %v2226, %v2228
        %v2230 = vrot.slane %v2222, %v2229
        %v2232 = vunpack.c.l.s4 1983009808
        %v2233 = vunpack.c.0.s8 %v2232
        %v2234 = vlaneseq
        %v2235 = vshrl.u32 %v2234, 7
        %v2236 = vsub.s32 %v2233, %v2235
        %v2237 = vrot.slane %v2223, %v2236
        %v2238 = vcombine.low %v418, %v429
        %v2239 = vcombine.high %v418, %v429
        %v2241 = vunpack.c.l.s4 1983009808
        %v2242 = vunpack.c.0.s8 %v2241
        %v2243 = vlaneseq
        %v2244 = vshrl.u32 %v2243, 7
        %v2245 = vsub.s32 %v2242, %v2244
        %v2246 = vrot.slane %v2238, %v2245
        %v2248 = vunpack.c.l.s4 1983009808
        %v2249 = vunpack.c.0.s8 %v2248
        %v2250 = vlaneseq
        %v2251 = vshrl.u32 %v2250, 7
        %v2252 = vsub.s32 %v2249, %v2251
        %v2253 = vrot.slane %v2239, %v2252
        %v2254 = vcombine.low %v2230, %v2230
        %v2255 = vcombine.high %v2230, %v2230
        %v2257 = vunpack.c.l.s4 1934713408
        %v2258 = vunpack.c.0.s8 %v2257
        %v2259 = vlaneseq
        %v2260 = vshrl.u32 %v2259, 7
        %v2261 = vsub.s32 %v2258, %v2260
        %v2262 = vrot.slane %v2254, %v2261
        %v2264 = vunpack.c.l.s4 1934713408
        %v2265 = vunpack.c.0.s8 %v2264
        %v2266 = vlaneseq
        %v2267 = vshrl.u32 %v2266, 7
        %v2268 = vsub.s32 %v2265, %v2267
        %v2269 = vrot.slane %v2255, %v2268
        %v2270 = vcombine.low %v2237, %v2237
        %v2271 = vcombine.high %v2237, %v2237
        %v2273 = vunpack.c.l.s4 1934713408
        %v2274 = vunpack.c.0.s8 %v2273
        %v2275 = vlaneseq
        %v2276 = vshrl.u32 %v2275, 7
        %v2277 = vsub.s32 %v2274, %v2276
        %v2278 = vrot.slane %v2270, %v2277
        %v2280 = vunpack.c.l.s4 1934713408
        %v2281 = vunpack.c.0.s8 %v2280
        %v2282 = vlaneseq
        %v2283 = vshrl.u32 %v2282, 7
        %v2284 = vsub.s32 %v2281, %v2283
        %v2285 = vrot.slane %v2271, %v2284
        %v2286 = vcombine.low %v2246, %v2246
        %v2287 = vcombine.high %v2246, %v2246
        %v2289 = vunpack.c.l.s4 1934713408
        %v2290 = vunpack.c.0.s8 %v2289
        %v2291 = vlaneseq
        %v2292 = vshrl.u32 %v2291, 7
        %v2293 = vsub.s32 %v2290, %v2292
        %v2294 = vrot.slane %v2286, %v2293
        %v2296 = vunpack.c.l.s4 1934713408
        %v2297 = vunpack.c.0.s8 %v2296
        %v2298 = vlaneseq
        %v2299 = vshrl.u32 %v2298, 7
        %v2300 = vsub.s32 %v2297, %v2299
        %v2301 = vrot.slane %v2287, %v2300
        %v2302 = vcombine.low %v2253, %v2253
        %v2303 = vcombine.high %v2253, %v2253
        %v2305 = vunpack.c.l.s4 1934713408
        %v2306 = vunpack.c.0.s8 %v2305
        %v2307 = vlaneseq
        %v2308 = vshrl.u32 %v2307, 7
        %v2309 = vsub.s32 %v2306, %v2308
        %v2310 = vrot.slane %v2302, %v2309
        %v2312 = vunpack.c.l.s4 1934713408
        %v2313 = vunpack.c.0.s8 %v2312
        %v2314 = vlaneseq
        %v2315 = vshrl.u32 %v2314, 7
        %v2316 = vsub.s32 %v2313, %v2315
        %v2317 = vrot.slane %v2303, %v2316
        %v2318 = vcombine.low %v2262, %v2294
        %v2319 = vcombine.high %v2262, %v2294
        %v2320 = vcombine.low %v2269, %v2301
        %v2321 = vcombine.high %v2269, %v2301
        %v2322 = vcombine.low %v2278, %v2310
        %v2323 = vcombine.high %v2278, %v2310
        %v2324 = vcombine.low %v2285, %v2317
        %v2325 = vcombine.high %v2285, %v2317
        %v2326 = vcombine.low %v440, %v451
        %v2327 = vcombine.high %v440, %v451
        %v2329 = vunpack.c.l.s4 1983009808
        %v2330 = vunpack.c.0.s8 %v2329
        %v2331 = vlaneseq
        %v2332 = vshrl.u32 %v2331, 7
        %v2333 = vsub.s32 %v2330, %v2332
        %v2334 = vrot.slane %v2326, %v2333
        %v2336 = vunpack.c.l.s4 1983009808
        %v2337 = vunpack.c.0.s8 %v2336
        %v2338 = vlaneseq
        %v2339 = vshrl.u32 %v2338, 7
        %v2340 = vsub.s32 %v2337, %v2339
        %v2341 = vrot.slane %v2327, %v2340
        %v2342 = vcombine.low %v462, %v473
        %v2343 = vcombine.high %v462, %v473
        %v2345 = vunpack.c.l.s4 1983009808
        %v2346 = vunpack.c.0.s8 %v2345
        %v2347 = vlaneseq
        %v2348 = vshrl.u32 %v2347, 7
        %v2349 = vsub.s32 %v2346, %v2348
        %v2350 = vrot.slane %v2342, %v2349
        %v2352 = vunpack.c.l.s4 1983009808
        %v2353 = vunpack.c.0.s8 %v2352
        %v2354 = vlaneseq
        %v2355 = vshrl.u32 %v2354, 7
        %v2356 = vsub.s32 %v2353, %v2355
        %v2357 = vrot.slane %v2343, %v2356
        %v2358 = vcombine.low %v2334, %v2334
        %v2359 = vcombine.high %v2334, %v2334
        %v2361 = vunpack.c.l.s4 1934713408
        %v2362 = vunpack.c.0.s8 %v2361
        %v2363 = vlaneseq
        %v2364 = vshrl.u32 %v2363, 7
        %v2365 = vsub.s32 %v2362, %v2364
        %v2366 = vrot.slane %v2358, %v2365
        %v2368 = vunpack.c.l.s4 1934713408
        %v2369 = vunpack.c.0.s8 %v2368
        %v2370 = vlaneseq
        %v2371 = vshrl.u32 %v2370, 7
        %v2372 = vsub.s32 %v2369, %v2371
        %v2373 = vrot.slane %v2359, %v2372
        %v2374 = vcombine.low %v2341, %v2341
        %v2375 = vcombine.high %v2341, %v2341
        %v2377 = vunpack.c.l.s4 1934713408
        %v2378 = vunpack.c.0.s8 %v2377
        %v2379 = vlaneseq
        %v2380 = vshrl.u32 %v2379, 7
        %v2381 = vsub.s32 %v2378, %v2380
        %v2382 = vrot.slane %v2374, %v2381
        %v2384 = vunpack.c.l.s4 1934713408
        %v2385 = vunpack.c.0.s8 %v2384
        %v2386 = vlaneseq
        %v2387 = vshrl.u32 %v2386, 7
        %v2388 = vsub.s32 %v2385, %v2387
        %v2389 = vrot.slane %v2375, %v2388
        %v2390 = vcombine.low %v2350, %v2350
        %v2391 = vcombine.high %v2350, %v2350
        %v2393 = vunpack.c.l.s4 1934713408
        %v2394 = vunpack.c.0.s8 %v2393
        %v2395 = vlaneseq
        %v2396 = vshrl.u32 %v2395, 7
        %v2397 = vsub.s32 %v2394, %v2396
        %v2398 = vrot.slane %v2390, %v2397
        %v2400 = vunpack.c.l.s4 1934713408
        %v2401 = vunpack.c.0.s8 %v2400
        %v2402 = vlaneseq
        %v2403 = vshrl.u32 %v2402, 7
        %v2404 = vsub.s32 %v2401, %v2403
        %v2405 = vrot.slane %v2391, %v2404
        %v2406 = vcombine.low %v2357, %v2357
        %v2407 = vcombine.high %v2357, %v2357
        %v2409 = vunpack.c.l.s4 1934713408
        %v2410 = vunpack.c.0.s8 %v2409
        %v2411 = vlaneseq
        %v2412 = vshrl.u32 %v2411, 7
        %v2413 = vsub.s32 %v2410, %v2412
        %v2414 = vrot.slane %v2406, %v2413
        %v2416 = vunpack.c.l.s4 1934713408
        %v2417 = vunpack.c.0.s8 %v2416
        %v2418 = vlaneseq
        %v2419 = vshrl.u32 %v2418, 7
        %v2420 = vsub.s32 %v2417, %v2419
        %v2421 = vrot.slane %v2407, %v2420
        %v2422 = vcombine.low %v2366, %v2398
        %v2423 = vcombine.high %v2366, %v2398
        %v2424 = vcombine.low %v2373, %v2405
        %v2425 = vcombine.high %v2373, %v2405
        %v2426 = vcombine.low %v2382, %v2414
        %v2427 = vcombine.high %v2382, %v2414
        %v2428 = vcombine.low %v2389, %v2421
        %v2429 = vcombine.high %v2389, %v2421
        %v2430 = vcombine.low %v484, %v495
        %v2431 = vcombine.high %v484, %v495
        %v2433 = vunpack.c.l.s4 1983009808
        %v2434 = vunpack.c.0.s8 %v2433
        %v2435 = vlaneseq
        %v2436 = vshrl.u32 %v2435, 7
        %v2437 = vsub.s32 %v2434, %v2436
        %v2438 = vrot.slane %v2430, %v2437
        %v2440 = vunpack.c.l.s4 1983009808
        %v2441 = vunpack.c.0.s8 %v2440
        %v2442 = vlaneseq
        %v2443 = vshrl.u32 %v2442, 7
        %v2444 = vsub.s32 %v2441, %v2443
        %v2445 = vrot.slane %v2431, %v2444
        %v2446 = vcombine.low %v506, %v517
        %v2447 = vcombine.high %v506, %v517
        %v2449 = vunpack.c.l.s4 1983009808
        %v2450 = vunpack.c.0.s8 %v2449
        %v2451 = vlaneseq
        %v2452 = vshrl.u32 %v2451, 7
        %v2453 = vsub.s32 %v2450, %v2452
        %v2454 = vrot.slane %v2446, %v2453
        %v2456 = vunpack.c.l.s4 1983009808
        %v2457 = vunpack.c.0.s8 %v2456
        %v2458 = vlaneseq
        %v2459 = vshrl.u32 %v2458, 7
        %v2460 = vsub.s32 %v2457, %v2459
        %v2461 = vrot.slane %v2447, %v2460
        %v2462 = vcombine.low %v2438, %v2438
        %v2463 = vcombine.high %v2438, %v2438
        %v2465 = vunpack.c.l.s4 1934713408
        %v2466 = vunpack.c.0.s8 %v2465
        %v2467 = vlaneseq
        %v2468 = vshrl.u32 %v2467, 7
        %v2469 = vsub.s32 %v2466, %v2468
        %v2470 = vrot.slane %v2462, %v2469
        %v2472 = vunpack.c.l.s4 1934713408
        %v2473 = vunpack.c.0.s8 %v2472
        %v2474 = vlaneseq
        %v2475 = vshrl.u32 %v2474, 7
        %v2476 = vsub.s32 %v2473, %v2475
        %v2477 = vrot.slane %v2463, %v2476
        %v2478 = vcombine.low %v2445, %v2445
        %v2479 = vcombine.high %v2445, %v2445
        %v2481 = vunpack.c.l.s4 1934713408
        %v2482 = vunpack.c.0.s8 %v2481
        %v2483 = vlaneseq
        %v2484 = vshrl.u32 %v2483, 7
        %v2485 = vsub.s32 %v2482, %v2484
        %v2486 = vrot.slane %v2478, %v2485
        %v2488 = vunpack.c.l.s4 1934713408
        %v2489 = vunpack.c.0.s8 %v2488
        %v2490 = vlaneseq
        %v2491 = vshrl.u32 %v2490, 7
        %v2492 = vsub.s32 %v2489, %v2491
        %v2493 = vrot.slane %v2479, %v2492
        %v2494 = vcombine.low %v2454, %v2454
        %v2495 = vcombine.high %v2454, %v2454
        %v2497 = vunpack.c.l.s4 1934713408
        %v2498 = vunpack.c.0.s8 %v2497
        %v2499 = vlaneseq
        %v2500 = vshrl.u32 %v2499, 7
        %v2501 = vsub.s32 %v2498, %v2500
        %v2502 = vrot.slane %v2494, %v2501
        %v2504 = vunpack.c.l.s4 1934713408
        %v2505 = vunpack.c.0.s8 %v2504
        %v2506 = vlaneseq
        %v2507 = vshrl.u32 %v2506, 7
        %v2508 = vsub.s32 %v2505, %v2507
        %v2509 = vrot.slane %v2495, %v2508
        %v2510 = vcombine.low %v2461, %v2461
        %v2511 = vcombine.high %v2461, %v2461
        %v2513 = vunpack.c.l.s4 1934713408
        %v2514 = vunpack.c.0.s8 %v2513
        %v2515 = vlaneseq
        %v2516 = vshrl.u32 %v2515, 7
        %v2517 = vsub.s32 %v2514, %v2516
        %v2518 = vrot.slane %v2510, %v2517
        %v2520 = vunpack.c.l.s4 1934713408
        %v2521 = vunpack.c.0.s8 %v2520
        %v2522 = vlaneseq
        %v2523 = vshrl.u32 %v2522, 7
        %v2524 = vsub.s32 %v2521, %v2523
        %v2525 = vrot.slane %v2511, %v2524
        %v2526 = vcombine.low %v2470, %v2502
        %v2527 = vcombine.high %v2470, %v2502
        %v2528 = vcombine.low %v2477, %v2509
        %v2529 = vcombine.high %v2477, %v2509
        %v2530 = vcombine.low %v2486, %v2518
        %v2531 = vcombine.high %v2486, %v2518
        %v2532 = vcombine.low %v2493, %v2525
        %v2533 = vcombine.high %v2493, %v2525
        %v2534 = vcombine.low %v524, %v535
        %v2535 = vcombine.high %v524, %v535
        %v2537 = vunpack.c.l.s4 1983009808
        %v2538 = vunpack.c.0.s8 %v2537
        %v2539 = vlaneseq
        %v2540 = vshrl.u32 %v2539, 7
        %v2541 = vsub.s32 %v2538, %v2540
        %v2542 = vrot.slane %v2534, %v2541
        %v2544 = vunpack.c.l.s4 1983009808
        %v2545 = vunpack.c.0.s8 %v2544
        %v2546 = vlaneseq
        %v2547 = vshrl.u32 %v2546, 7
        %v2548 = vsub.s32 %v2545, %v2547
        %v2549 = vrot.slane %v2535, %v2548
        %v2550 = vcombine.low %v546, %v557
        %v2551 = vcombine.high %v546, %v557
        %v2553 = vunpack.c.l.s4 1983009808
        %v2554 = vunpack.c.0.s8 %v2553
        %v2555 = vlaneseq
        %v2556 = vshrl.u32 %v2555, 7
        %v2557 = vsub.s32 %v2554, %v2556
        %v2558 = vrot.slane %v2550, %v2557
        %v2560 = vunpack.c.l.s4 1983009808
        %v2561 = vunpack.c.0.s8 %v2560
        %v2562 = vlaneseq
        %v2563 = vshrl.u32 %v2562, 7
        %v2564 = vsub.s32 %v2561, %v2563
        %v2565 = vrot.slane %v2551, %v2564
        %v2566 = vcombine.low %v2542, %v2542
        %v2567 = vcombine.high %v2542, %v2542
        %v2569 = vunpack.c.l.s4 1934713408
        %v2570 = vunpack.c.0.s8 %v2569
        %v2571 = vlaneseq
        %v2572 = vshrl.u32 %v2571, 7
        %v2573 = vsub.s32 %v2570, %v2572
        %v2574 = vrot.slane %v2566, %v2573
        %v2576 = vunpack.c.l.s4 1934713408
        %v2577 = vunpack.c.0.s8 %v2576
        %v2578 = vlaneseq
        %v2579 = vshrl.u32 %v2578, 7
        %v2580 = vsub.s32 %v2577, %v2579
        %v2581 = vrot.slane %v2567, %v2580
        %v2582 = vcombine.low %v2549, %v2549
        %v2583 = vcombine.high %v2549, %v2549
        %v2585 = vunpack.c.l.s4 1934713408
        %v2586 = vunpack.c.0.s8 %v2585
        %v2587 = vlaneseq
        %v2588 = vshrl.u32 %v2587, 7
        %v2589 = vsub.s32 %v2586, %v2588
        %v2590 = vrot.slane %v2582, %v2589
        %v2592 = vunpack.c.l.s4 1934713408
        %v2593 = vunpack.c.0.s8 %v2592
        %v2594 = vlaneseq
        %v2595 = vshrl.u32 %v2594, 7
        %v2596 = vsub.s32 %v2593, %v2595
        %v2597 = vrot.slane %v2583, %v2596
        %v2598 = vcombine.low %v2558, %v2558
        %v2599 = vcombine.high %v2558, %v2558
        %v2601 = vunpack.c.l.s4 1934713408
        %v2602 = vunpack.c.0.s8 %v2601
        %v2603 = vlaneseq
        %v2604 = vshrl.u32 %v2603, 7
        %v2605 = vsub.s32 %v2602, %v2604
        %v2606 = vrot.slane %v2598, %v2605
        %v2608 = vunpack.c.l.s4 1934713408
        %v2609 = vunpack.c.0.s8 %v2608
        %v2610 = vlaneseq
        %v2611 = vshrl.u32 %v2610, 7
        %v2612 = vsub.s32 %v2609, %v2611
        %v2613 = vrot.slane %v2599, %v2612
        %v2614 = vcombine.low %v2565, %v2565
        %v2615 = vcombine.high %v2565, %v2565
        %v2617 = vunpack.c.l.s4 1934713408
        %v2618 = vunpack.c.0.s8 %v2617
        %v2619 = vlaneseq
        %v2620 = vshrl.u32 %v2619, 7
        %v2621 = vsub.s32 %v2618, %v2620
        %v2622 = vrot.slane %v2614, %v2621
        %v2624 = vunpack.c.l.s4 1934713408
        %v2625 = vunpack.c.0.s8 %v2624
        %v2626 = vlaneseq
        %v2627 = vshrl.u32 %v2626, 7
        %v2628 = vsub.s32 %v2625, %v2627
        %v2629 = vrot.slane %v2615, %v2628
        %v2630 = vcombine.low %v2574, %v2606
        %v2631 = vcombine.high %v2574, %v2606
        %v2632 = vcombine.low %v2581, %v2613
        %v2633 = vcombine.high %v2581, %v2613
        %v2634 = vcombine.low %v2590, %v2622
        %v2635 = vcombine.high %v2590, %v2622
        %v2636 = vcombine.low %v2597, %v2629
        %v2637 = vcombine.high %v2597, %v2629
        %v2638 = vcombine.low %v568, %v579
        %v2639 = vcombine.high %v568, %v579
        %v2641 = vunpack.c.l.s4 1983009808
        %v2642 = vunpack.c.0.s8 %v2641
        %v2643 = vlaneseq
        %v2644 = vshrl.u32 %v2643, 7
        %v2645 = vsub.s32 %v2642, %v2644
        %v2646 = vrot.slane %v2638, %v2645
        %v2648 = vunpack.c.l.s4 1983009808
        %v2649 = vunpack.c.0.s8 %v2648
        %v2650 = vlaneseq
        %v2651 = vshrl.u32 %v2650, 7
        %v2652 = vsub.s32 %v2649, %v2651
        %v2653 = vrot.slane %v2639, %v2652
        %v2654 = vcombine.low %v590, %v601
        %v2655 = vcombine.high %v590, %v601
        %v2657 = vunpack.c.l.s4 1983009808
        %v2658 = vunpack.c.0.s8 %v2657
        %v2659 = vlaneseq
        %v2660 = vshrl.u32 %v2659, 7
        %v2661 = vsub.s32 %v2658, %v2660
        %v2662 = vrot.slane %v2654, %v2661
        %v2664 = vunpack.c.l.s4 1983009808
        %v2665 = vunpack.c.0.s8 %v2664
        %v2666 = vlaneseq
        %v2667 = vshrl.u32 %v2666, 7
        %v2668 = vsub.s32 %v2665, %v2667
        %v2669 = vrot.slane %v2655, %v2668
        %v2670 = vcombine.low %v2646, %v2646
        %v2671 = vcombine.high %v2646, %v2646
        %v2673 = vunpack.c.l.s4 1934713408
        %v2674 = vunpack.c.0.s8 %v2673
        %v2675 = vlaneseq
        %v2676 = vshrl.u32 %v2675, 7
        %v2677 = vsub.s32 %v2674, %v2676
        %v2678 = vrot.slane %v2670, %v2677
        %v2680 = vunpack.c.l.s4 1934713408
        %v2681 = vunpack.c.0.s8 %v2680
        %v2682 = vlaneseq
        %v2683 = vshrl.u32 %v2682, 7
        %v2684 = vsub.s32 %v2681, %v2683
        %v2685 = vrot.slane %v2671, %v2684
        %v2686 = vcombine.low %v2653, %v2653
        %v2687 = vcombine.high %v2653, %v2653
        %v2689 = vunpack.c.l.s4 1934713408
        %v2690 = vunpack.c.0.s8 %v2689
        %v2691 = vlaneseq
        %v2692 = vshrl.u32 %v2691, 7
        %v2693 = vsub.s32 %v2690, %v2692
        %v2694 = vrot.slane %v2686, %v2693
        %v2696 = vunpack.c.l.s4 1934713408
        %v2697 = vunpack.c.0.s8 %v2696
        %v2698 = vlaneseq
        %v2699 = vshrl.u32 %v2698, 7
        %v2700 = vsub.s32 %v2697, %v2699
        %v2701 = vrot.slane %v2687, %v2700
        %v2702 = vcombine.low %v2662, %v2662
        %v2703 = vcombine.high %v2662, %v2662
        %v2705 = vunpack.c.l.s4 1934713408
        %v2706 = vunpack.c.0.s8 %v2705
        %v2707 = vlaneseq
        %v2708 = vshrl.u32 %v2707, 7
        %v2709 = vsub.s32 %v2706, %v2708
        %v2710 = vrot.slane %v2702, %v2709
        %v2712 = vunpack.c.l.s4 1934713408
        %v2713 = vunpack.c.0.s8 %v2712
        %v2714 = vlaneseq
        %v2715 = vshrl.u32 %v2714, 7
        %v2716 = vsub.s32 %v2713, %v2715
        %v2717 = vrot.slane %v2703, %v2716
        %v2718 = vcombine.low %v2669, %v2669
        %v2719 = vcombine.high %v2669, %v2669
        %v2721 = vunpack.c.l.s4 1934713408
        %v2722 = vunpack.c.0.s8 %v2721
        %v2723 = vlaneseq
        %v2724 = vshrl.u32 %v2723, 7
        %v2725 = vsub.s32 %v2722, %v2724
        %v2726 = vrot.slane %v2718, %v2725
        %v2728 = vunpack.c.l.s4 1934713408
        %v2729 = vunpack.c.0.s8 %v2728
        %v2730 = vlaneseq
        %v2731 = vshrl.u32 %v2730, 7
        %v2732 = vsub.s32 %v2729, %v2731
        %v2733 = vrot.slane %v2719, %v2732
        %v2734 = vcombine.low %v2678, %v2710
        %v2735 = vcombine.high %v2678, %v2710
        %v2736 = vcombine.low %v2685, %v2717
        %v2737 = vcombine.high %v2685, %v2717
        %v2738 = vcombine.low %v2694, %v2726
        %v2739 = vcombine.high %v2694, %v2726
        %v2740 = vcombine.low %v2701, %v2733
        %v2741 = vcombine.high %v2701, %v2733
        %v2742 = vcombine.low %v612, %v623
        %v2743 = vcombine.high %v612, %v623
        %v2745 = vunpack.c.l.s4 1983009808
        %v2746 = vunpack.c.0.s8 %v2745
        %v2747 = vlaneseq
        %v2748 = vshrl.u32 %v2747, 7
        %v2749 = vsub.s32 %v2746, %v2748
        %v2750 = vrot.slane %v2742, %v2749
        %v2752 = vunpack.c.l.s4 1983009808
        %v2753 = vunpack.c.0.s8 %v2752
        %v2754 = vlaneseq
        %v2755 = vshrl.u32 %v2754, 7
        %v2756 = vsub.s32 %v2753, %v2755
        %v2757 = vrot.slane %v2743, %v2756
        %v2758 = vcombine.low %v634, %v645
        %v2759 = vcombine.high %v634, %v645
        %v2761 = vunpack.c.l.s4 1983009808
        %v2762 = vunpack.c.0.s8 %v2761
        %v2763 = vlaneseq
        %v2764 = vshrl.u32 %v2763, 7
        %v2765 = vsub.s32 %v2762, %v2764
        %v2766 = vrot.slane %v2758, %v2765
        %v2768 = vunpack.c.l.s4 1983009808
        %v2769 = vunpack.c.0.s8 %v2768
        %v2770 = vlaneseq
        %v2771 = vshrl.u32 %v2770, 7
        %v2772 = vsub.s32 %v2769, %v2771
        %v2773 = vrot.slane %v2759, %v2772
        %v2774 = vcombine.low %v2750, %v2750
        %v2775 = vcombine.high %v2750, %v2750
        %v2777 = vunpack.c.l.s4 1934713408
        %v2778 = vunpack.c.0.s8 %v2777
        %v2779 = vlaneseq
        %v2780 = vshrl.u32 %v2779, 7
        %v2781 = vsub.s32 %v2778, %v2780
        %v2782 = vrot.slane %v2774, %v2781
        %v2784 = vunpack.c.l.s4 1934713408
        %v2785 = vunpack.c.0.s8 %v2784
        %v2786 = vlaneseq
        %v2787 = vshrl.u32 %v2786, 7
        %v2788 = vsub.s32 %v2785, %v2787
        %v2789 = vrot.slane %v2775, %v2788
        %v2790 = vcombine.low %v2757, %v2757
        %v2791 = vcombine.high %v2757, %v2757
        %v2793 = vunpack.c.l.s4 1934713408
        %v2794 = vunpack.c.0.s8 %v2793
        %v2795 = vlaneseq
        %v2796 = vshrl.u32 %v2795, 7
        %v2797 = vsub.s32 %v2794, %v2796
        %v2798 = vrot.slane %v2790, %v2797
        %v2800 = vunpack.c.l.s4 1934713408
        %v2801 = vunpack.c.0.s8 %v2800
        %v2802 = vlaneseq
        %v2803 = vshrl.u32 %v2802, 7
        %v2804 = vsub.s32 %v2801, %v2803
        %v2805 = vrot.slane %v2791, %v2804
        %v2806 = vcombine.low %v2766, %v2766
        %v2807 = vcombine.high %v2766, %v2766
        %v2809 = vunpack.c.l.s4 1934713408
        %v2810 = vunpack.c.0.s8 %v2809
        %v2811 = vlaneseq
        %v2812 = vshrl.u32 %v2811, 7
        %v2813 = vsub.s32 %v2810, %v2812
        %v2814 = vrot.slane %v2806, %v2813
        %v2816 = vunpack.c.l.s4 1934713408
        %v2817 = vunpack.c.0.s8 %v2816
        %v2818 = vlaneseq
        %v2819 = vshrl.u32 %v2818, 7
        %v2820 = vsub.s32 %v2817, %v2819
        %v2821 = vrot.slane %v2807, %v2820
        %v2822 = vcombine.low %v2773, %v2773
        %v2823 = vcombine.high %v2773, %v2773
        %v2825 = vunpack.c.l.s4 1934713408
        %v2826 = vunpack.c.0.s8 %v2825
        %v2827 = vlaneseq
        %v2828 = vshrl.u32 %v2827, 7
        %v2829 = vsub.s32 %v2826, %v2828
        %v2830 = vrot.slane %v2822, %v2829
        %v2832 = vunpack.c.l.s4 1934713408
        %v2833 = vunpack.c.0.s8 %v2832
        %v2834 = vlaneseq
        %v2835 = vshrl.u32 %v2834, 7
        %v2836 = vsub.s32 %v2833, %v2835
        %v2837 = vrot.slane %v2823, %v2836
        %v2838 = vcombine.low %v2782, %v2814
        %v2839 = vcombine.high %v2782, %v2814
        %v2840 = vcombine.low %v2789, %v2821
        %v2841 = vcombine.high %v2789, %v2821
        %v2842 = vcombine.low %v2798, %v2830
        %v2843 = vcombine.high %v2798, %v2830
        %v2844 = vcombine.low %v2805, %v2837
        %v2845 = vcombine.high %v2805, %v2837
        %v2846 = vcombine.low %v656, %v667
        %v2847 = vcombine.high %v656, %v667
        %v2849 = vunpack.c.l.s4 1983009808
        %v2850 = vunpack.c.0.s8 %v2849
        %v2851 = vlaneseq
        %v2852 = vshrl.u32 %v2851, 7
        %v2853 = vsub.s32 %v2850, %v2852
        %v2854 = vrot.slane %v2846, %v2853
        %v2856 = vunpack.c.l.s4 1983009808
        %v2857 = vunpack.c.0.s8 %v2856
        %v2858 = vlaneseq
        %v2859 = vshrl.u32 %v2858, 7
        %v2860 = vsub.s32 %v2857, %v2859
        %v2861 = vrot.slane %v2847, %v2860
        %v2862 = vcombine.low %v678, %v689
        %v2863 = vcombine.high %v678, %v689
        %v2865 = vunpack.c.l.s4 1983009808
        %v2866 = vunpack.c.0.s8 %v2865
        %v2867 = vlaneseq
        %v2868 = vshrl.u32 %v2867, 7
        %v2869 = vsub.s32 %v2866, %v2868
        %v2870 = vrot.slane %v2862, %v2869
        %v2872 = vunpack.c.l.s4 1983009808
        %v2873 = vunpack.c.0.s8 %v2872
        %v2874 = vlaneseq
        %v2875 = vshrl.u32 %v2874, 7
        %v2876 = vsub.s32 %v2873, %v2875
        %v2877 = vrot.slane %v2863, %v2876
        %v2878 = vcombine.low %v2854, %v2854
        %v2879 = vcombine.high %v2854, %v2854
        %v2881 = vunpack.c.l.s4 1934713408
        %v2882 = vunpack.c.0.s8 %v2881
        %v2883 = vlaneseq
        %v2884 = vshrl.u32 %v2883, 7
        %v2885 = vsub.s32 %v2882, %v2884
        %v2886 = vrot.slane %v2878, %v2885
        %v2888 = vunpack.c.l.s4 1934713408
        %v2889 = vunpack.c.0.s8 %v2888
        %v2890 = vlaneseq
        %v2891 = vshrl.u32 %v2890, 7
        %v2892 = vsub.s32 %v2889, %v2891
        %v2893 = vrot.slane %v2879, %v2892
        %v2894 = vcombine.low %v2861, %v2861
        %v2895 = vcombine.high %v2861, %v2861
        %v2897 = vunpack.c.l.s4 1934713408
        %v2898 = vunpack.c.0.s8 %v2897
        %v2899 = vlaneseq
        %v2900 = vshrl.u32 %v2899, 7
        %v2901 = vsub.s32 %v2898, %v2900
        %v2902 = vrot.slane %v2894, %v2901
        %v2904 = vunpack.c.l.s4 1934713408
        %v2905 = vunpack.c.0.s8 %v2904
        %v2906 = vlaneseq
        %v2907 = vshrl.u32 %v2906, 7
        %v2908 = vsub.s32 %v2905, %v2907
        %v2909 = vrot.slane %v2895, %v2908
        %v2910 = vcombine.low %v2870, %v2870
        %v2911 = vcombine.high %v2870, %v2870
        %v2913 = vunpack.c.l.s4 1934713408
        %v2914 = vunpack.c.0.s8 %v2913
        %v2915 = vlaneseq
        %v2916 = vshrl.u32 %v2915, 7
        %v2917 = vsub.s32 %v2914, %v2916
        %v2918 = vrot.slane %v2910, %v2917
        %v2920 = vunpack.c.l.s4 1934713408
        %v2921 = vunpack.c.0.s8 %v2920
        %v2922 = vlaneseq
        %v2923 = vshrl.u32 %v2922, 7
        %v2924 = vsub.s32 %v2921, %v2923
        %v2925 = vrot.slane %v2911, %v2924
        %v2926 = vcombine.low %v2877, %v2877
        %v2927 = vcombine.high %v2877, %v2877
        %v2929 = vunpack.c.l.s4 1934713408
        %v2930 = vunpack.c.0.s8 %v2929
        %v2931 = vlaneseq
        %v2932 = vshrl.u32 %v2931, 7
        %v2933 = vsub.s32 %v2930, %v2932
        %v2934 = vrot.slane %v2926, %v2933
        %v2936 = vunpack.c.l.s4 1934713408
        %v2937 = vunpack.c.0.s8 %v2936
        %v2938 = vlaneseq
        %v2939 = vshrl.u32 %v2938, 7
        %v2940 = vsub.s32 %v2937, %v2939
        %v2941 = vrot.slane %v2927, %v2940
        %v2942 = vcombine.low %v2886, %v2918
        %v2943 = vcombine.high %v2886, %v2918
        %v2944 = vcombine.low %v2893, %v2925
        %v2945 = vcombine.high %v2893, %v2925
        %v2946 = vcombine.low %v2902, %v2934
        %v2947 = vcombine.high %v2902, %v2934
        %v2948 = vcombine.low %v2909, %v2941
        %v2949 = vcombine.high %v2909, %v2941
        %v2950 = vcombine.low %v528, %v539
        %v2951 = vcombine.high %v528, %v539
        %v2953 = vunpack.c.l.s4 1983009808
        %v2954 = vunpack.c.0.s8 %v2953
        %v2955 = vlaneseq
        %v2956 = vshrl.u32 %v2955, 7
        %v2957 = vsub.s32 %v2954, %v2956
        %v2958 = vrot.slane %v2950, %v2957
        %v2960 = vunpack.c.l.s4 1983009808
        %v2961 = vunpack.c.0.s8 %v2960
        %v2962 = vlaneseq
        %v2963 = vshrl.u32 %v2962, 7
        %v2964 = vsub.s32 %v2961, %v2963
        %v2965 = vrot.slane %v2951, %v2964
        %v2966 = vcombine.low %v550, %v561
        %v2967 = vcombine.high %v550, %v561
        %v2969 = vunpack.c.l.s4 1983009808
        %v2970 = vunpack.c.0.s8 %v2969
        %v2971 = vlaneseq
        %v2972 = vshrl.u32 %v2971, 7
        %v2973 = vsub.s32 %v2970, %v2972
        %v2974 = vrot.slane %v2966, %v2973
        %v2976 = vunpack.c.l.s4 1983009808
        %v2977 = vunpack.c.0.s8 %v2976
        %v2978 = vlaneseq
        %v2979 = vshrl.u32 %v2978, 7
        %v2980 = vsub.s32 %v2977, %v2979
        %v2981 = vrot.slane %v2967, %v2980
        %v2982 = vcombine.low %v2958, %v2958
        %v2983 = vcombine.high %v2958, %v2958
        %v2985 = vunpack.c.l.s4 1934713408
        %v2986 = vunpack.c.0.s8 %v2985
        %v2987 = vlaneseq
        %v2988 = vshrl.u32 %v2987, 7
        %v2989 = vsub.s32 %v2986, %v2988
        %v2990 = vrot.slane %v2982, %v2989
        %v2992 = vunpack.c.l.s4 1934713408
        %v2993 = vunpack.c.0.s8 %v2992
        %v2994 = vlaneseq
        %v2995 = vshrl.u32 %v2994, 7
        %v2996 = vsub.s32 %v2993, %v2995
        %v2997 = vrot.slane %v2983, %v2996
        %v2998 = vcombine.low %v2965, %v2965
        %v2999 = vcombine.high %v2965, %v2965
        %v3001 = vunpack.c.l.s4 1934713408
        %v3002 = vunpack.c.0.s8 %v3001
        %v3003 = vlaneseq
        %v3004 = vshrl.u32 %v3003, 7
        %v3005 = vsub.s32 %v3002, %v3004
        %v3006 = vrot.slane %v2998, %v3005
        %v3008 = vunpack.c.l.s4 1934713408
        %v3009 = vunpack.c.0.s8 %v3008
        %v3010 = vlaneseq
        %v3011 = vshrl.u32 %v3010, 7
        %v3012 = vsub.s32 %v3009, %v3011
        %v3013 = vrot.slane %v2999, %v3012
        %v3014 = vcombine.low %v2974, %v2974
        %v3015 = vcombine.high %v2974, %v2974
        %v3017 = vunpack.c.l.s4 1934713408
        %v3018 = vunpack.c.0.s8 %v3017
        %v3019 = vlaneseq
        %v3020 = vshrl.u32 %v3019, 7
        %v3021 = vsub.s32 %v3018, %v3020
        %v3022 = vrot.slane %v3014, %v3021
        %v3024 = vunpack.c.l.s4 1934713408
        %v3025 = vunpack.c.0.s8 %v3024
        %v3026 = vlaneseq
        %v3027 = vshrl.u32 %v3026, 7
        %v3028 = vsub.s32 %v3025, %v3027
        %v3029 = vrot.slane %v3015, %v3028
        %v3030 = vcombine.low %v2981, %v2981
        %v3031 = vcombine.high %v2981, %v2981
        %v3033 = vunpack.c.l.s4 1934713408
        %v3034 = vunpack.c.0.s8 %v3033
        %v3035 = vlaneseq
        %v3036 = vshrl.u32 %v3035, 7
        %v3037 = vsub.s32 %v3034, %v3036
        %v3038 = vrot.slane %v3030, %v3037
        %v3040 = vunpack.c.l.s4 1934713408
        %v3041 = vunpack.c.0.s8 %v3040
        %v3042 = vlaneseq
        %v3043 = vshrl.u32 %v3042, 7
        %v3044 = vsub.s32 %v3041, %v3043
        %v3045 = vrot.slane %v3031, %v3044
        %v3046 = vcombine.low %v2990, %v3022
        %v3047 = vcombine.high %v2990, %v3022
        %v3048 = vcombine.low %v2997, %v3029
        %v3049 = vcombine.high %v2997, %v3029
        %v3050 = vcombine.low %v3006, %v3038
        %v3051 = vcombine.high %v3006, %v3038
        %v3052 = vcombine.low %v3013, %v3045
        %v3053 = vcombine.high %v3013, %v3045
        %v3054 = vcombine.low %v572, %v583
        %v3055 = vcombine.high %v572, %v583
        %v3057 = vunpack.c.l.s4 1983009808
        %v3058 = vunpack.c.0.s8 %v3057
        %v3059 = vlaneseq
        %v3060 = vshrl.u32 %v3059, 7
        %v3061 = vsub.s32 %v3058, %v3060
        %v3062 = vrot.slane %v3054, %v3061
        %v3064 = vunpack.c.l.s4 1983009808
        %v3065 = vunpack.c.0.s8 %v3064
        %v3066 = vlaneseq
        %v3067 = vshrl.u32 %v3066, 7
        %v3068 = vsub.s32 %v3065, %v3067
        %v3069 = vrot.slane %v3055, %v3068
        %v3070 = vcombine.low %v594, %v605
        %v3071 = vcombine.high %v594, %v605
        %v3073 = vunpack.c.l.s4 1983009808
        %v3074 = vunpack.c.0.s8 %v3073
        %v3075 = vlaneseq
        %v3076 = vshrl.u32 %v3075, 7
        %v3077 = vsub.s32 %v3074, %v3076
        %v3078 = vrot.slane %v3070, %v3077
        %v3080 = vunpack.c.l.s4 1983009808
        %v3081 = vunpack.c.0.s8 %v3080
        %v3082 = vlaneseq
        %v3083 = vshrl.u32 %v3082, 7
        %v3084 = vsub.s32 %v3081, %v3083
        %v3085 = vrot.slane %v3071, %v3084
        %v3086 = vcombine.low %v3062, %v3062
        %v3087 = vcombine.high %v3062, %v3062
        %v3089 = vunpack.c.l.s4 1934713408
        %v3090 = vunpack.c.0.s8 %v3089
        %v3091 = vlaneseq
        %v3092 = vshrl.u32 %v3091, 7
        %v3093 = vsub.s32 %v3090, %v3092
        %v3094 = vrot.slane %v3086, %v3093
        %v3096 = vunpack.c.l.s4 1934713408
        %v3097 = vunpack.c.0.s8 %v3096
        %v3098 = vlaneseq
        %v3099 = vshrl.u32 %v3098, 7
        %v3100 = vsub.s32 %v3097, %v3099
        %v3101 = vrot.slane %v3087, %v3100
        %v3102 = vcombine.low %v3069, %v3069
        %v3103 = vcombine.high %v3069, %v3069
        %v3105 = vunpack.c.l.s4 1934713408
        %v3106 = vunpack.c.0.s8 %v3105
        %v3107 = vlaneseq
        %v3108 = vshrl.u32 %v3107, 7
        %v3109 = vsub.s32 %v3106, %v3108
        %v3110 = vrot.slane %v3102, %v3109
        %v3112 = vunpack.c.l.s4 1934713408
        %v3113 = vunpack.c.0.s8 %v3112
        %v3114 = vlaneseq
        %v3115 = vshrl.u32 %v3114, 7
        %v3116 = vsub.s32 %v3113, %v3115
        %v3117 = vrot.slane %v3103, %v3116
        %v3118 = vcombine.low %v3078, %v3078
        %v3119 = vcombine.high %v3078, %v3078
        %v3121 = vunpack.c.l.s4 1934713408
        %v3122 = vunpack.c.0.s8 %v3121
        %v3123 = vlaneseq
        %v3124 = vshrl.u32 %v3123, 7
        %v3125 = vsub.s32 %v3122, %v3124
        %v3126 = vrot.slane %v3118, %v3125
        %v3128 = vunpack.c.l.s4 1934713408
        %v3129 = vunpack.c.0.s8 %v3128
        %v3130 = vlaneseq
        %v3131 = vshrl.u32 %v3130, 7
        %v3132 = vsub.s32 %v3129, %v3131
        %v3133 = vrot.slane %v3119, %v3132
        %v3134 = vcombine.low %v3085, %v3085
        %v3135 = vcombine.high %v3085, %v3085
        %v3137 = vunpack.c.l.s4 1934713408
        %v3138 = vunpack.c.0.s8 %v3137
        %v3139 = vlaneseq
        %v3140 = vshrl.u32 %v3139, 7
        %v3141 = vsub.s32 %v3138, %v3140
        %v3142 = vrot.slane %v3134, %v3141
        %v3144 = vunpack.c.l.s4 1934713408
        %v3145 = vunpack.c.0.s8 %v3144
        %v3146 = vlaneseq
        %v3147 = vshrl.u32 %v3146, 7
        %v3148 = vsub.s32 %v3145, %v3147
        %v3149 = vrot.slane %v3135, %v3148
        %v3150 = vcombine.low %v3094, %v3126
        %v3151 = vcombine.high %v3094, %v3126
        %v3152 = vcombine.low %v3101, %v3133
        %v3153 = vcombine.high %v3101, %v3133
        %v3154 = vcombine.low %v3110, %v3142
        %v3155 = vcombine.high %v3110, %v3142
        %v3156 = vcombine.low %v3117, %v3149
        %v3157 = vcombine.high %v3117, %v3149
        %v3158 = vcombine.low %v616, %v627
        %v3159 = vcombine.high %v616, %v627
        %v3161 = vunpack.c.l.s4 1983009808
        %v3162 = vunpack.c.0.s8 %v3161
        %v3163 = vlaneseq
        %v3164 = vshrl.u32 %v3163, 7
        %v3165 = vsub.s32 %v3162, %v3164
        %v3166 = vrot.slane %v3158, %v3165
        %v3168 = vunpack.c.l.s4 1983009808
        %v3169 = vunpack.c.0.s8 %v3168
        %v3170 = vlaneseq
        %v3171 = vshrl.u32 %v3170, 7
        %v3172 = vsub.s32 %v3169, %v3171
        %v3173 = vrot.slane %v3159, %v3172
        %v3174 = vcombine.low %v638, %v649
        %v3175 = vcombine.high %v638, %v649
        %v3177 = vunpack.c.l.s4 1983009808
        %v3178 = vunpack.c.0.s8 %v3177
        %v3179 = vlaneseq
        %v3180 = vshrl.u32 %v3179, 7
        %v3181 = vsub.s32 %v3178, %v3180
        %v3182 = vrot.slane %v3174, %v3181
        %v3184 = vunpack.c.l.s4 1983009808
        %v3185 = vunpack.c.0.s8 %v3184
        %v3186 = vlaneseq
        %v3187 = vshrl.u32 %v3186, 7
        %v3188 = vsub.s32 %v3185, %v3187
        %v3189 = vrot.slane %v3175, %v3188
        %v3190 = vcombine.low %v3166, %v3166
        %v3191 = vcombine.high %v3166, %v3166
        %v3193 = vunpack.c.l.s4 1934713408
        %v3194 = vunpack.c.0.s8 %v3193
        %v3195 = vlaneseq
        %v3196 = vshrl.u32 %v3195, 7
        %v3197 = vsub.s32 %v3194, %v3196
        %v3198 = vrot.slane %v3190, %v3197
        %v3200 = vunpack.c.l.s4 1934713408
        %v3201 = vunpack.c.0.s8 %v3200
        %v3202 = vlaneseq
        %v3203 = vshrl.u32 %v3202, 7
        %v3204 = vsub.s32 %v3201, %v3203
        %v3205 = vrot.slane %v3191, %v3204
        %v3206 = vcombine.low %v3173, %v3173
        %v3207 = vcombine.high %v3173, %v3173
        %v3209 = vunpack.c.l.s4 1934713408
        %v3210 = vunpack.c.0.s8 %v3209
        %v3211 = vlaneseq
        %v3212 = vshrl.u32 %v3211, 7
        %v3213 = vsub.s32 %v3210, %v3212
        %v3214 = vrot.slane %v3206, %v3213
        %v3216 = vunpack.c.l.s4 1934713408
        %v3217 = vunpack.c.0.s8 %v3216
        %v3218 = vlaneseq
        %v3219 = vshrl.u32 %v3218, 7
        %v3220 = vsub.s32 %v3217, %v3219
        %v3221 = vrot.slane %v3207, %v3220
        %v3222 = vcombine.low %v3182, %v3182
        %v3223 = vcombine.high %v3182, %v3182
        %v3225 = vunpack.c.l.s4 1934713408
        %v3226 = vunpack.c.0.s8 %v3225
        %v3227 = vlaneseq
        %v3228 = vshrl.u32 %v3227, 7
        %v3229 = vsub.s32 %v3226, %v3228
        %v3230 = vrot.slane %v3222, %v3229
        %v3232 = vunpack.c.l.s4 1934713408
        %v3233 = vunpack.c.0.s8 %v3232
        %v3234 = vlaneseq
        %v3235 = vshrl.u32 %v3234, 7
        %v3236 = vsub.s32 %v3233, %v3235
        %v3237 = vrot.slane %v3223, %v3236
        %v3238 = vcombine.low %v3189, %v3189
        %v3239 = vcombine.high %v3189, %v3189
        %v3241 = vunpack.c.l.s4 1934713408
        %v3242 = vunpack.c.0.s8 %v3241
        %v3243 = vlaneseq
        %v3244 = vshrl.u32 %v3243, 7
        %v3245 = vsub.s32 %v3242, %v3244
        %v3246 = vrot.slane %v3238, %v3245
        %v3248 = vunpack.c.l.s4 1934713408
        %v3249 = vunpack.c.0.s8 %v3248
        %v3250 = vlaneseq
        %v3251 = vshrl.u32 %v3250, 7
        %v3252 = vsub.s32 %v3249, %v3251
        %v3253 = vrot.slane %v3239, %v3252
        %v3254 = vcombine.low %v3198, %v3230
        %v3255 = vcombine.high %v3198, %v3230
        %v3256 = vcombine.low %v3205, %v3237
        %v3257 = vcombine.high %v3205, %v3237
        %v3258 = vcombine.low %v3214, %v3246
        %v3259 = vcombine.high %v3214, %v3246
        %v3260 = vcombine.low %v3221, %v3253
        %v3261 = vcombine.high %v3221, %v3253
        %v3262 = vcombine.low %v660, %v671
        %v3263 = vcombine.high %v660, %v671
        %v3265 = vunpack.c.l.s4 1983009808
        %v3266 = vunpack.c.0.s8 %v3265
        %v3267 = vlaneseq
        %v3268 = vshrl.u32 %v3267, 7
        %v3269 = vsub.s32 %v3266, %v3268
        %v3270 = vrot.slane %v3262, %v3269
        %v3272 = vunpack.c.l.s4 1983009808
        %v3273 = vunpack.c.0.s8 %v3272
        %v3274 = vlaneseq
        %v3275 = vshrl.u32 %v3274, 7
        %v3276 = vsub.s32 %v3273, %v3275
        %v3277 = vrot.slane %v3263, %v3276
        %v3278 = vcombine.low %v682, %v693
        %v3279 = vcombine.high %v682, %v693
        %v3281 = vunpack.c.l.s4 1983009808
        %v3282 = vunpack.c.0.s8 %v3281
        %v3283 = vlaneseq
        %v3284 = vshrl.u32 %v3283, 7
        %v3285 = vsub.s32 %v3282, %v3284
        %v3286 = vrot.slane %v3278, %v3285
        %v3288 = vunpack.c.l.s4 1983009808
        %v3289 = vunpack.c.0.s8 %v3288
        %v3290 = vlaneseq
        %v3291 = vshrl.u32 %v3290, 7
        %v3292 = vsub.s32 %v3289, %v3291
        %v3293 = vrot.slane %v3279, %v3292
        %v3294 = vcombine.low %v3270, %v3270
        %v3295 = vcombine.high %v3270, %v3270
        %v3297 = vunpack.c.l.s4 1934713408
        %v3298 = vunpack.c.0.s8 %v3297
        %v3299 = vlaneseq
        %v3300 = vshrl.u32 %v3299, 7
        %v3301 = vsub.s32 %v3298, %v3300
        %v3302 = vrot.slane %v3294, %v3301
        %v3304 = vunpack.c.l.s4 1934713408
        %v3305 = vunpack.c.0.s8 %v3304
        %v3306 = vlaneseq
        %v3307 = vshrl.u32 %v3306, 7
        %v3308 = vsub.s32 %v3305, %v3307
        %v3309 = vrot.slane %v3295, %v3308
        %v3310 = vcombine.low %v3277, %v3277
        %v3311 = vcombine.high %v3277, %v3277
        %v3313 = vunpack.c.l.s4 1934713408
        %v3314 = vunpack.c.0.s8 %v3313
        %v3315 = vlaneseq
        %v3316 = vshrl.u32 %v3315, 7
        %v3317 = vsub.s32 %v3314, %v3316
        %v3318 = vrot.slane %v3310, %v3317
        %v3320 = vunpack.c.l.s4 1934713408
        %v3321 = vunpack.c.0.s8 %v3320
        %v3322 = vlaneseq
        %v3323 = vshrl.u32 %v3322, 7
        %v3324 = vsub.s32 %v3321, %v3323
        %v3325 = vrot.slane %v3311, %v3324
        %v3326 = vcombine.low %v3286, %v3286
        %v3327 = vcombine.high %v3286, %v3286
        %v3329 = vunpack.c.l.s4 1934713408
        %v3330 = vunpack.c.0.s8 %v3329
        %v3331 = vlaneseq
        %v3332 = vshrl.u32 %v3331, 7
        %v3333 = vsub.s32 %v3330, %v3332
        %v3334 = vrot.slane %v3326, %v3333
        %v3336 = vunpack.c.l.s4 1934713408
        %v3337 = vunpack.c.0.s8 %v3336
        %v3338 = vlaneseq
        %v3339 = vshrl.u32 %v3338, 7
        %v3340 = vsub.s32 %v3337, %v3339
        %v3341 = vrot.slane %v3327, %v3340
        %v3342 = vcombine.low %v3293, %v3293
        %v3343 = vcombine.high %v3293, %v3293
        %v3345 = vunpack.c.l.s4 1934713408
        %v3346 = vunpack.c.0.s8 %v3345
        %v3347 = vlaneseq
        %v3348 = vshrl.u32 %v3347, 7
        %v3349 = vsub.s32 %v3346, %v3348
        %v3350 = vrot.slane %v3342, %v3349
        %v3352 = vunpack.c.l.s4 1934713408
        %v3353 = vunpack.c.0.s8 %v3352
        %v3354 = vlaneseq
        %v3355 = vshrl.u32 %v3354, 7
        %v3356 = vsub.s32 %v3353, %v3355
        %v3357 = vrot.slane %v3343, %v3356
        %v3358 = vcombine.low %v3302, %v3334
        %v3359 = vcombine.high %v3302, %v3334
        %v3360 = vcombine.low %v3309, %v3341
        %v3361 = vcombine.high %v3309, %v3341
        %v3362 = vcombine.low %v3318, %v3350
        %v3363 = vcombine.high %v3318, %v3350
        %v3364 = vcombine.low %v3325, %v3357
        %v3365 = vcombine.high %v3325, %v3357
        %v3366 = vcombine.low %v700, %v711
        %v3367 = vcombine.high %v700, %v711
        %v3369 = vunpack.c.l.s4 1983009808
        %v3370 = vunpack.c.0.s8 %v3369
        %v3371 = vlaneseq
        %v3372 = vshrl.u32 %v3371, 7
        %v3373 = vsub.s32 %v3370, %v3372
        %v3374 = vrot.slane %v3366, %v3373
        %v3376 = vunpack.c.l.s4 1983009808
        %v3377 = vunpack.c.0.s8 %v3376
        %v3378 = vlaneseq
        %v3379 = vshrl.u32 %v3378, 7
        %v3380 = vsub.s32 %v3377, %v3379
        %v3381 = vrot.slane %v3367, %v3380
        %v3382 = vcombine.low %v722, %v733
        %v3383 = vcombine.high %v722, %v733
        %v3385 = vunpack.c.l.s4 1983009808
        %v3386 = vunpack.c.0.s8 %v3385
        %v3387 = vlaneseq
        %v3388 = vshrl.u32 %v3387, 7
        %v3389 = vsub.s32 %v3386, %v3388
        %v3390 = vrot.slane %v3382, %v3389
        %v3392 = vunpack.c.l.s4 1983009808
        %v3393 = vunpack.c.0.s8 %v3392
        %v3394 = vlaneseq
        %v3395 = vshrl.u32 %v3394, 7
        %v3396 = vsub.s32 %v3393, %v3395
        %v3397 = vrot.slane %v3383, %v3396
        %v3398 = vcombine.low %v3374, %v3374
        %v3399 = vcombine.high %v3374, %v3374
        %v3401 = vunpack.c.l.s4 1934713408
        %v3402 = vunpack.c.0.s8 %v3401
        %v3403 = vlaneseq
        %v3404 = vshrl.u32 %v3403, 7
        %v3405 = vsub.s32 %v3402, %v3404
        %v3406 = vrot.slane %v3398, %v3405
        %v3408 = vunpack.c.l.s4 1934713408
        %v3409 = vunpack.c.0.s8 %v3408
        %v3410 = vlaneseq
        %v3411 = vshrl.u32 %v3410, 7
        %v3412 = vsub.s32 %v3409, %v3411
        %v3413 = vrot.slane %v3399, %v3412
        %v3414 = vcombine.low %v3381, %v3381
        %v3415 = vcombine.high %v3381, %v3381
        %v3417 = vunpack.c.l.s4 1934713408
        %v3418 = vunpack.c.0.s8 %v3417
        %v3419 = vlaneseq
        %v3420 = vshrl.u32 %v3419, 7
        %v3421 = vsub.s32 %v3418, %v3420
        %v3422 = vrot.slane %v3414, %v3421
        %v3424 = vunpack.c.l.s4 1934713408
        %v3425 = vunpack.c.0.s8 %v3424
        %v3426 = vlaneseq
        %v3427 = vshrl.u32 %v3426, 7
        %v3428 = vsub.s32 %v3425, %v3427
        %v3429 = vrot.slane %v3415, %v3428
        %v3430 = vcombine.low %v3390, %v3390
        %v3431 = vcombine.high %v3390, %v3390
        %v3433 = vunpack.c.l.s4 1934713408
        %v3434 = vunpack.c.0.s8 %v3433
        %v3435 = vlaneseq
        %v3436 = vshrl.u32 %v3435, 7
        %v3437 = vsub.s32 %v3434, %v3436
        %v3438 = vrot.slane %v3430, %v3437
        %v3440 = vunpack.c.l.s4 1934713408
        %v3441 = vunpack.c.0.s8 %v3440
        %v3442 = vlaneseq
        %v3443 = vshrl.u32 %v3442, 7
        %v3444 = vsub.s32 %v3441, %v3443
        %v3445 = vrot.slane %v3431, %v3444
        %v3446 = vcombine.low %v3397, %v3397
        %v3447 = vcombine.high %v3397, %v3397
        %v3449 = vunpack.c.l.s4 1934713408
        %v3450 = vunpack.c.0.s8 %v3449
        %v3451 = vlaneseq
        %v3452 = vshrl.u32 %v3451, 7
        %v3453 = vsub.s32 %v3450, %v3452
        %v3454 = vrot.slane %v3446, %v3453
        %v3456 = vunpack.c.l.s4 1934713408
        %v3457 = vunpack.c.0.s8 %v3456
        %v3458 = vlaneseq
        %v3459 = vshrl.u32 %v3458, 7
        %v3460 = vsub.s32 %v3457, %v3459
        %v3461 = vrot.slane %v3447, %v3460
        %v3462 = vcombine.low %v3406, %v3438
        %v3463 = vcombine.high %v3406, %v3438
        %v3464 = vcombine.low %v3413, %v3445
        %v3465 = vcombine.high %v3413, %v3445
        %v3466 = vcombine.low %v3422, %v3454
        %v3467 = vcombine.high %v3422, %v3454
        %v3468 = vcombine.low %v3429, %v3461
        %v3469 = vcombine.high %v3429, %v3461
        %v3470 = vcombine.low %v744, %v755
        %v3471 = vcombine.high %v744, %v755
        %v3473 = vunpack.c.l.s4 1983009808
        %v3474 = vunpack.c.0.s8 %v3473
        %v3475 = vlaneseq
        %v3476 = vshrl.u32 %v3475, 7
        %v3477 = vsub.s32 %v3474, %v3476
        %v3478 = vrot.slane %v3470, %v3477
        %v3480 = vunpack.c.l.s4 1983009808
        %v3481 = vunpack.c.0.s8 %v3480
        %v3482 = vlaneseq
        %v3483 = vshrl.u32 %v3482, 7
        %v3484 = vsub.s32 %v3481, %v3483
        %v3485 = vrot.slane %v3471, %v3484
        %v3486 = vcombine.low %v766, %v777
        %v3487 = vcombine.high %v766, %v777
        %v3489 = vunpack.c.l.s4 1983009808
        %v3490 = vunpack.c.0.s8 %v3489
        %v3491 = vlaneseq
        %v3492 = vshrl.u32 %v3491, 7
        %v3493 = vsub.s32 %v3490, %v3492
        %v3494 = vrot.slane %v3486, %v3493
        %v3496 = vunpack.c.l.s4 1983009808
        %v3497 = vunpack.c.0.s8 %v3496
        %v3498 = vlaneseq
        %v3499 = vshrl.u32 %v3498, 7
        %v3500 = vsub.s32 %v3497, %v3499
        %v3501 = vrot.slane %v3487, %v3500
        %v3502 = vcombine.low %v3478, %v3478
        %v3503 = vcombine.high %v3478, %v3478
        %v3505 = vunpack.c.l.s4 1934713408
        %v3506 = vunpack.c.0.s8 %v3505
        %v3507 = vlaneseq
        %v3508 = vshrl.u32 %v3507, 7
        %v3509 = vsub.s32 %v3506, %v3508
        %v3510 = vrot.slane %v3502, %v3509
        %v3512 = vunpack.c.l.s4 1934713408
        %v3513 = vunpack.c.0.s8 %v3512
        %v3514 = vlaneseq
        %v3515 = vshrl.u32 %v3514, 7
        %v3516 = vsub.s32 %v3513, %v3515
        %v3517 = vrot.slane %v3503, %v3516
        %v3518 = vcombine.low %v3485, %v3485
        %v3519 = vcombine.high %v3485, %v3485
        %v3521 = vunpack.c.l.s4 1934713408
        %v3522 = vunpack.c.0.s8 %v3521
        %v3523 = vlaneseq
        %v3524 = vshrl.u32 %v3523, 7
        %v3525 = vsub.s32 %v3522, %v3524
        %v3526 = vrot.slane %v3518, %v3525
        %v3528 = vunpack.c.l.s4 1934713408
        %v3529 = vunpack.c.0.s8 %v3528
        %v3530 = vlaneseq
        %v3531 = vshrl.u32 %v3530, 7
        %v3532 = vsub.s32 %v3529, %v3531
        %v3533 = vrot.slane %v3519, %v3532
        %v3534 = vcombine.low %v3494, %v3494
        %v3535 = vcombine.high %v3494, %v3494
        %v3537 = vunpack.c.l.s4 1934713408
        %v3538 = vunpack.c.0.s8 %v3537
        %v3539 = vlaneseq
        %v3540 = vshrl.u32 %v3539, 7
        %v3541 = vsub.s32 %v3538, %v3540
        %v3542 = vrot.slane %v3534, %v3541
        %v3544 = vunpack.c.l.s4 1934713408
        %v3545 = vunpack.c.0.s8 %v3544
        %v3546 = vlaneseq
        %v3547 = vshrl.u32 %v3546, 7
        %v3548 = vsub.s32 %v3545, %v3547
        %v3549 = vrot.slane %v3535, %v3548
        %v3550 = vcombine.low %v3501, %v3501
        %v3551 = vcombine.high %v3501, %v3501
        %v3553 = vunpack.c.l.s4 1934713408
        %v3554 = vunpack.c.0.s8 %v3553
        %v3555 = vlaneseq
        %v3556 = vshrl.u32 %v3555, 7
        %v3557 = vsub.s32 %v3554, %v3556
        %v3558 = vrot.slane %v3550, %v3557
        %v3560 = vunpack.c.l.s4 1934713408
        %v3561 = vunpack.c.0.s8 %v3560
        %v3562 = vlaneseq
        %v3563 = vshrl.u32 %v3562, 7
        %v3564 = vsub.s32 %v3561, %v3563
        %v3565 = vrot.slane %v3551, %v3564
        %v3566 = vcombine.low %v3510, %v3542
        %v3567 = vcombine.high %v3510, %v3542
        %v3568 = vcombine.low %v3517, %v3549
        %v3569 = vcombine.high %v3517, %v3549
        %v3570 = vcombine.low %v3526, %v3558
        %v3571 = vcombine.high %v3526, %v3558
        %v3572 = vcombine.low %v3533, %v3565
        %v3573 = vcombine.high %v3533, %v3565
        %v3574 = vcombine.low %v788, %v799
        %v3575 = vcombine.high %v788, %v799
        %v3577 = vunpack.c.l.s4 1983009808
        %v3578 = vunpack.c.0.s8 %v3577
        %v3579 = vlaneseq
        %v3580 = vshrl.u32 %v3579, 7
        %v3581 = vsub.s32 %v3578, %v3580
        %v3582 = vrot.slane %v3574, %v3581
        %v3584 = vunpack.c.l.s4 1983009808
        %v3585 = vunpack.c.0.s8 %v3584
        %v3586 = vlaneseq
        %v3587 = vshrl.u32 %v3586, 7
        %v3588 = vsub.s32 %v3585, %v3587
        %v3589 = vrot.slane %v3575, %v3588
        %v3590 = vcombine.low %v810, %v821
        %v3591 = vcombine.high %v810, %v821
        %v3593 = vunpack.c.l.s4 1983009808
        %v3594 = vunpack.c.0.s8 %v3593
        %v3595 = vlaneseq
        %v3596 = vshrl.u32 %v3595, 7
        %v3597 = vsub.s32 %v3594, %v3596
        %v3598 = vrot.slane %v3590, %v3597
        %v3600 = vunpack.c.l.s4 1983009808
        %v3601 = vunpack.c.0.s8 %v3600
        %v3602 = vlaneseq
        %v3603 = vshrl.u32 %v3602, 7
        %v3604 = vsub.s32 %v3601, %v3603
        %v3605 = vrot.slane %v3591, %v3604
        %v3606 = vcombine.low %v3582, %v3582
        %v3607 = vcombine.high %v3582, %v3582
        %v3609 = vunpack.c.l.s4 1934713408
        %v3610 = vunpack.c.0.s8 %v3609
        %v3611 = vlaneseq
        %v3612 = vshrl.u32 %v3611, 7
        %v3613 = vsub.s32 %v3610, %v3612
        %v3614 = vrot.slane %v3606, %v3613
        %v3616 = vunpack.c.l.s4 1934713408
        %v3617 = vunpack.c.0.s8 %v3616
        %v3618 = vlaneseq
        %v3619 = vshrl.u32 %v3618, 7
        %v3620 = vsub.s32 %v3617, %v3619
        %v3621 = vrot.slane %v3607, %v3620
        %v3622 = vcombine.low %v3589, %v3589
        %v3623 = vcombine.high %v3589, %v3589
        %v3625 = vunpack.c.l.s4 1934713408
        %v3626 = vunpack.c.0.s8 %v3625
        %v3627 = vlaneseq
        %v3628 = vshrl.u32 %v3627, 7
        %v3629 = vsub.s32 %v3626, %v3628
        %v3630 = vrot.slane %v3622, %v3629
        %v3632 = vunpack.c.l.s4 1934713408
        %v3633 = vunpack.c.0.s8 %v3632
        %v3634 = vlaneseq
        %v3635 = vshrl.u32 %v3634, 7
        %v3636 = vsub.s32 %v3633, %v3635
        %v3637 = vrot.slane %v3623, %v3636
        %v3638 = vcombine.low %v3598, %v3598
        %v3639 = vcombine.high %v3598, %v3598
        %v3641 = vunpack.c.l.s4 1934713408
        %v3642 = vunpack.c.0.s8 %v3641
        %v3643 = vlaneseq
        %v3644 = vshrl.u32 %v3643, 7
        %v3645 = vsub.s32 %v3642, %v3644
        %v3646 = vrot.slane %v3638, %v3645
        %v3648 = vunpack.c.l.s4 1934713408
        %v3649 = vunpack.c.0.s8 %v3648
        %v3650 = vlaneseq
        %v3651 = vshrl.u32 %v3650, 7
        %v3652 = vsub.s32 %v3649, %v3651
        %v3653 = vrot.slane %v3639, %v3652
        %v3654 = vcombine.low %v3605, %v3605
        %v3655 = vcombine.high %v3605, %v3605
        %v3657 = vunpack.c.l.s4 1934713408
        %v3658 = vunpack.c.0.s8 %v3657
        %v3659 = vlaneseq
        %v3660 = vshrl.u32 %v3659, 7
        %v3661 = vsub.s32 %v3658, %v3660
        %v3662 = vrot.slane %v3654, %v3661
        %v3664 = vunpack.c.l.s4 1934713408
        %v3665 = vunpack.c.0.s8 %v3664
        %v3666 = vlaneseq
        %v3667 = vshrl.u32 %v3666, 7
        %v3668 = vsub.s32 %v3665, %v3667
        %v3669 = vrot.slane %v3655, %v3668
        %v3670 = vcombine.low %v3614, %v3646
        %v3671 = vcombine.high %v3614, %v3646
        %v3672 = vcombine.low %v3621, %v3653
        %v3673 = vcombine.high %v3621, %v3653
        %v3674 = vcombine.low %v3630, %v3662
        %v3675 = vcombine.high %v3630, %v3662
        %v3676 = vcombine.low %v3637, %v3669
        %v3677 = vcombine.high %v3637, %v3669
        %v3678 = vcombine.low %v832, %v843
        %v3679 = vcombine.high %v832, %v843
        %v3681 = vunpack.c.l.s4 1983009808
        %v3682 = vunpack.c.0.s8 %v3681
        %v3683 = vlaneseq
        %v3684 = vshrl.u32 %v3683, 7
        %v3685 = vsub.s32 %v3682, %v3684
        %v3686 = vrot.slane %v3678, %v3685
        %v3688 = vunpack.c.l.s4 1983009808
        %v3689 = vunpack.c.0.s8 %v3688
        %v3690 = vlaneseq
        %v3691 = vshrl.u32 %v3690, 7
        %v3692 = vsub.s32 %v3689, %v3691
        %v3693 = vrot.slane %v3679, %v3692
        %v3694 = vcombine.low %v854, %v865
        %v3695 = vcombine.high %v854, %v865
        %v3697 = vunpack.c.l.s4 1983009808
        %v3698 = vunpack.c.0.s8 %v3697
        %v3699 = vlaneseq
        %v3700 = vshrl.u32 %v3699, 7
        %v3701 = vsub.s32 %v3698, %v3700
        %v3702 = vrot.slane %v3694, %v3701
        %v3704 = vunpack.c.l.s4 1983009808
        %v3705 = vunpack.c.0.s8 %v3704
        %v3706 = vlaneseq
        %v3707 = vshrl.u32 %v3706, 7
        %v3708 = vsub.s32 %v3705, %v3707
        %v3709 = vrot.slane %v3695, %v3708
        %v3710 = vcombine.low %v3686, %v3686
        %v3711 = vcombine.high %v3686, %v3686
        %v3713 = vunpack.c.l.s4 1934713408
        %v3714 = vunpack.c.0.s8 %v3713
        %v3715 = vlaneseq
        %v3716 = vshrl.u32 %v3715, 7
        %v3717 = vsub.s32 %v3714, %v3716
        %v3718 = vrot.slane %v3710, %v3717
        %v3720 = vunpack.c.l.s4 1934713408
        %v3721 = vunpack.c.0.s8 %v3720
        %v3722 = vlaneseq
        %v3723 = vshrl.u32 %v3722, 7
        %v3724 = vsub.s32 %v3721, %v3723
        %v3725 = vrot.slane %v3711, %v3724
        %v3726 = vcombine.low %v3693, %v3693
        %v3727 = vcombine.high %v3693, %v3693
        %v3729 = vunpack.c.l.s4 1934713408
        %v3730 = vunpack.c.0.s8 %v3729
        %v3731 = vlaneseq
        %v3732 = vshrl.u32 %v3731, 7
        %v3733 = vsub.s32 %v3730, %v3732
        %v3734 = vrot.slane %v3726, %v3733
        %v3736 = vunpack.c.l.s4 1934713408
        %v3737 = vunpack.c.0.s8 %v3736
        %v3738 = vlaneseq
        %v3739 = vshrl.u32 %v3738, 7
        %v3740 = vsub.s32 %v3737, %v3739
        %v3741 = vrot.slane %v3727, %v3740
        %v3742 = vcombine.low %v3702, %v3702
        %v3743 = vcombine.high %v3702, %v3702
        %v3745 = vunpack.c.l.s4 1934713408
        %v3746 = vunpack.c.0.s8 %v3745
        %v3747 = vlaneseq
        %v3748 = vshrl.u32 %v3747, 7
        %v3749 = vsub.s32 %v3746, %v3748
        %v3750 = vrot.slane %v3742, %v3749
        %v3752 = vunpack.c.l.s4 1934713408
        %v3753 = vunpack.c.0.s8 %v3752
        %v3754 = vlaneseq
        %v3755 = vshrl.u32 %v3754, 7
        %v3756 = vsub.s32 %v3753, %v3755
        %v3757 = vrot.slane %v3743, %v3756
        %v3758 = vcombine.low %v3709, %v3709
        %v3759 = vcombine.high %v3709, %v3709
        %v3761 = vunpack.c.l.s4 1934713408
        %v3762 = vunpack.c.0.s8 %v3761
        %v3763 = vlaneseq
        %v3764 = vshrl.u32 %v3763, 7
        %v3765 = vsub.s32 %v3762, %v3764
        %v3766 = vrot.slane %v3758, %v3765
        %v3768 = vunpack.c.l.s4 1934713408
        %v3769 = vunpack.c.0.s8 %v3768
        %v3770 = vlaneseq
        %v3771 = vshrl.u32 %v3770, 7
        %v3772 = vsub.s32 %v3769, %v3771
        %v3773 = vrot.slane %v3759, %v3772
        %v3774 = vcombine.low %v3718, %v3750
        %v3775 = vcombine.high %v3718, %v3750
        %v3776 = vcombine.low %v3725, %v3757
        %v3777 = vcombine.high %v3725, %v3757
        %v3778 = vcombine.low %v3734, %v3766
        %v3779 = vcombine.high %v3734, %v3766
        %v3780 = vcombine.low %v3741, %v3773
        %v3781 = vcombine.high %v3741, %v3773
        %v3782 = vcombine.low %v704, %v715
        %v3783 = vcombine.high %v704, %v715
        %v3785 = vunpack.c.l.s4 1983009808
        %v3786 = vunpack.c.0.s8 %v3785
        %v3787 = vlaneseq
        %v3788 = vshrl.u32 %v3787, 7
        %v3789 = vsub.s32 %v3786, %v3788
        %v3790 = vrot.slane %v3782, %v3789
        %v3792 = vunpack.c.l.s4 1983009808
        %v3793 = vunpack.c.0.s8 %v3792
        %v3794 = vlaneseq
        %v3795 = vshrl.u32 %v3794, 7
        %v3796 = vsub.s32 %v3793, %v3795
        %v3797 = vrot.slane %v3783, %v3796
        %v3798 = vcombine.low %v726, %v737
        %v3799 = vcombine.high %v726, %v737
        %v3801 = vunpack.c.l.s4 1983009808
        %v3802 = vunpack.c.0.s8 %v3801
        %v3803 = vlaneseq
        %v3804 = vshrl.u32 %v3803, 7
        %v3805 = vsub.s32 %v3802, %v3804
        %v3806 = vrot.slane %v3798, %v3805
        %v3808 = vunpack.c.l.s4 1983009808
        %v3809 = vunpack.c.0.s8 %v3808
        %v3810 = vlaneseq
        %v3811 = vshrl.u32 %v3810, 7
        %v3812 = vsub.s32 %v3809, %v3811
        %v3813 = vrot.slane %v3799, %v3812
        %v3814 = vcombine.low %v3790, %v3790
        %v3815 = vcombine.high %v3790, %v3790
        %v3817 = vunpack.c.l.s4 1934713408
        %v3818 = vunpack.c.0.s8 %v3817
        %v3819 = vlaneseq
        %v3820 = vshrl.u32 %v3819, 7
        %v3821 = vsub.s32 %v3818, %v3820
        %v3822 = vrot.slane %v3814, %v3821
        %v3824 = vunpack.c.l.s4 1934713408
        %v3825 = vunpack.c.0.s8 %v3824
        %v3826 = vlaneseq
        %v3827 = vshrl.u32 %v3826, 7
        %v3828 = vsub.s32 %v3825, %v3827
        %v3829 = vrot.slane %v3815, %v3828
        %v3830 = vcombine.low %v3797, %v3797
        %v3831 = vcombine.high %v3797, %v3797
        %v3833 = vunpack.c.l.s4 1934713408
        %v3834 = vunpack.c.0.s8 %v3833
        %v3835 = vlaneseq
        %v3836 = vshrl.u32 %v3835, 7
        %v3837 = vsub.s32 %v3834, %v3836
        %v3838 = vrot.slane %v3830, %v3837
        %v3840 = vunpack.c.l.s4 1934713408
        %v3841 = vunpack.c.0.s8 %v3840
        %v3842 = vlaneseq
        %v3843 = vshrl.u32 %v3842, 7
        %v3844 = vsub.s32 %v3841, %v3843
        %v3845 = vrot.slane %v3831, %v3844
        %v3846 = vcombine.low %v3806, %v3806
        %v3847 = vcombine.high %v3806, %v3806
        %v3849 = vunpack.c.l.s4 1934713408
        %v3850 = vunpack.c.0.s8 %v3849
        %v3851 = vlaneseq
        %v3852 = vshrl.u32 %v3851, 7
        %v3853 = vsub.s32 %v3850, %v3852
        %v3854 = vrot.slane %v3846, %v3853
        %v3856 = vunpack.c.l.s4 1934713408
        %v3857 = vunpack.c.0.s8 %v3856
        %v3858 = vlaneseq
        %v3859 = vshrl.u32 %v3858, 7
        %v3860 = vsub.s32 %v3857, %v3859
        %v3861 = vrot.slane %v3847, %v3860
        %v3862 = vcombine.low %v3813, %v3813
        %v3863 = vcombine.high %v3813, %v3813
        %v3865 = vunpack.c.l.s4 1934713408
        %v3866 = vunpack.c.0.s8 %v3865
        %v3867 = vlaneseq
        %v3868 = vshrl.u32 %v3867, 7
        %v3869 = vsub.s32 %v3866, %v3868
        %v3870 = vrot.slane %v3862, %v3869
        %v3872 = vunpack.c.l.s4 1934713408
        %v3873 = vunpack.c.0.s8 %v3872
        %v3874 = vlaneseq
        %v3875 = vshrl.u32 %v3874, 7
        %v3876 = vsub.s32 %v3873, %v3875
        %v3877 = vrot.slane %v3863, %v3876
        %v3878 = vcombine.low %v3822, %v3854
        %v3879 = vcombine.high %v3822, %v3854
        %v3880 = vcombine.low %v3829, %v3861
        %v3881 = vcombine.high %v3829, %v3861
        %v3882 = vcombine.low %v3838, %v3870
        %v3883 = vcombine.high %v3838, %v3870
        %v3884 = vcombine.low %v3845, %v3877
        %v3885 = vcombine.high %v3845, %v3877
        %v3886 = vcombine.low %v748, %v759
        %v3887 = vcombine.high %v748, %v759
        %v3889 = vunpack.c.l.s4 1983009808
        %v3890 = vunpack.c.0.s8 %v3889
        %v3891 = vlaneseq
        %v3892 = vshrl.u32 %v3891, 7
        %v3893 = vsub.s32 %v3890, %v3892
        %v3894 = vrot.slane %v3886, %v3893
        %v3896 = vunpack.c.l.s4 1983009808
        %v3897 = vunpack.c.0.s8 %v3896
        %v3898 = vlaneseq
        %v3899 = vshrl.u32 %v3898, 7
        %v3900 = vsub.s32 %v3897, %v3899
        %v3901 = vrot.slane %v3887, %v3900
        %v3902 = vcombine.low %v770, %v781
        %v3903 = vcombine.high %v770, %v781
        %v3905 = vunpack.c.l.s4 1983009808
        %v3906 = vunpack.c.0.s8 %v3905
        %v3907 = vlaneseq
        %v3908 = vshrl.u32 %v3907, 7
        %v3909 = vsub.s32 %v3906, %v3908
        %v3910 = vrot.slane %v3902, %v3909
        %v3912 = vunpack.c.l.s4 1983009808
        %v3913 = vunpack.c.0.s8 %v3912
        %v3914 = vlaneseq
        %v3915 = vshrl.u32 %v3914, 7
        %v3916 = vsub.s32 %v3913, %v3915
        %v3917 = vrot.slane %v3903, %v3916
        %v3918 = vcombine.low %v3894, %v3894
        %v3919 = vcombine.high %v3894, %v3894
        %v3921 = vunpack.c.l.s4 1934713408
        %v3922 = vunpack.c.0.s8 %v3921
        %v3923 = vlaneseq
        %v3924 = vshrl.u32 %v3923, 7
        %v3925 = vsub.s32 %v3922, %v3924
        %v3926 = vrot.slane %v3918, %v3925
        %v3928 = vunpack.c.l.s4 1934713408
        %v3929 = vunpack.c.0.s8 %v3928
        %v3930 = vlaneseq
        %v3931 = vshrl.u32 %v3930, 7
        %v3932 = vsub.s32 %v3929, %v3931
        %v3933 = vrot.slane %v3919, %v3932
        %v3934 = vcombine.low %v3901, %v3901
        %v3935 = vcombine.high %v3901, %v3901
        %v3937 = vunpack.c.l.s4 1934713408
        %v3938 = vunpack.c.0.s8 %v3937
        %v3939 = vlaneseq
        %v3940 = vshrl.u32 %v3939, 7
        %v3941 = vsub.s32 %v3938, %v3940
        %v3942 = vrot.slane %v3934, %v3941
        %v3944 = vunpack.c.l.s4 1934713408
        %v3945 = vunpack.c.0.s8 %v3944
        %v3946 = vlaneseq
        %v3947 = vshrl.u32 %v3946, 7
        %v3948 = vsub.s32 %v3945, %v3947
        %v3949 = vrot.slane %v3935, %v3948
        %v3950 = vcombine.low %v3910, %v3910
        %v3951 = vcombine.high %v3910, %v3910
        %v3953 = vunpack.c.l.s4 1934713408
        %v3954 = vunpack.c.0.s8 %v3953
        %v3955 = vlaneseq
        %v3956 = vshrl.u32 %v3955, 7
        %v3957 = vsub.s32 %v3954, %v3956
        %v3958 = vrot.slane %v3950, %v3957
        %v3960 = vunpack.c.l.s4 1934713408
        %v3961 = vunpack.c.0.s8 %v3960
        %v3962 = vlaneseq
        %v3963 = vshrl.u32 %v3962, 7
        %v3964 = vsub.s32 %v3961, %v3963
        %v3965 = vrot.slane %v3951, %v3964
        %v3966 = vcombine.low %v3917, %v3917
        %v3967 = vcombine.high %v3917, %v3917
        %v3969 = vunpack.c.l.s4 1934713408
        %v3970 = vunpack.c.0.s8 %v3969
        %v3971 = vlaneseq
        %v3972 = vshrl.u32 %v3971, 7
        %v3973 = vsub.s32 %v3970, %v3972
        %v3974 = vrot.slane %v3966, %v3973
        %v3976 = vunpack.c.l.s4 1934713408
        %v3977 = vunpack.c.0.s8 %v3976
        %v3978 = vlaneseq
        %v3979 = vshrl.u32 %v3978, 7
        %v3980 = vsub.s32 %v3977, %v3979
        %v3981 = vrot.slane %v3967, %v3980
        %v3982 = vcombine.low %v3926, %v3958
        %v3983 = vcombine.high %v3926, %v3958
        %v3984 = vcombine.low %v3933, %v3965
        %v3985 = vcombine.high %v3933, %v3965
        %v3986 = vcombine.low %v3942, %v3974
        %v3987 = vcombine.high %v3942, %v3974
        %v3988 = vcombine.low %v3949, %v3981
        %v3989 = vcombine.high %v3949, %v3981
        %v3990 = vcombine.low %v792, %v803
        %v3991 = vcombine.high %v792, %v803
        %v3993 = vunpack.c.l.s4 1983009808
        %v3994 = vunpack.c.0.s8 %v3993
        %v3995 = vlaneseq
        %v3996 = vshrl.u32 %v3995, 7
        %v3997 = vsub.s32 %v3994, %v3996
        %v3998 = vrot.slane %v3990, %v3997
        %v4000 = vunpack.c.l.s4 1983009808
        %v4001 = vunpack.c.0.s8 %v4000
        %v4002 = vlaneseq
        %v4003 = vshrl.u32 %v4002, 7
        %v4004 = vsub.s32 %v4001, %v4003
        %v4005 = vrot.slane %v3991, %v4004
        %v4006 = vcombine.low %v814, %v825
        %v4007 = vcombine.high %v814, %v825
        %v4009 = vunpack.c.l.s4 1983009808
        %v4010 = vunpack.c.0.s8 %v4009
        %v4011 = vlaneseq
        %v4012 = vshrl.u32 %v4011, 7
        %v4013 = vsub.s32 %v4010, %v4012
        %v4014 = vrot.slane %v4006, %v4013
        %v4016 = vunpack.c.l.s4 1983009808
        %v4017 = vunpack.c.0.s8 %v4016
        %v4018 = vlaneseq
        %v4019 = vshrl.u32 %v4018, 7
        %v4020 = vsub.s32 %v4017, %v4019
        %v4021 = vrot.slane %v4007, %v4020
        %v4022 = vcombine.low %v3998, %v3998
        %v4023 = vcombine.high %v3998, %v3998
        %v4025 = vunpack.c.l.s4 1934713408
        %v4026 = vunpack.c.0.s8 %v4025
        %v4027 = vlaneseq
        %v4028 = vshrl.u32 %v4027, 7
        %v4029 = vsub.s32 %v4026, %v4028
        %v4030 = vrot.slane %v4022, %v4029
        %v4032 = vunpack.c.l.s4 1934713408
        %v4033 = vunpack.c.0.s8 %v4032
        %v4034 = vlaneseq
        %v4035 = vshrl.u32 %v4034, 7
        %v4036 = vsub.s32 %v4033, %v4035
        %v4037 = vrot.slane %v4023, %v4036
        %v4038 = vcombine.low %v4005, %v4005
        %v4039 = vcombine.high %v4005, %v4005
        %v4041 = vunpack.c.l.s4 1934713408
        %v4042 = vunpack.c.0.s8 %v4041
        %v4043 = vlaneseq
        %v4044 = vshrl.u32 %v4043, 7
        %v4045 = vsub.s32 %v4042, %v4044
        %v4046 = vrot.slane %v4038, %v4045
        %v4048 = vunpack.c.l.s4 1934713408
        %v4049 = vunpack.c.0.s8 %v4048
        %v4050 = vlaneseq
        %v4051 = vshrl.u32 %v4050, 7
        %v4052 = vsub.s32 %v4049, %v4051
        %v4053 = vrot.slane %v4039, %v4052
        %v4054 = vcombine.low %v4014, %v4014
        %v4055 = vcombine.high %v4014, %v4014
        %v4057 = vunpack.c.l.s4 1934713408
        %v4058 = vunpack.c.0.s8 %v4057
        %v4059 = vlaneseq
        %v4060 = vshrl.u32 %v4059, 7
        %v4061 = vsub.s32 %v4058, %v4060
        %v4062 = vrot.slane %v4054, %v4061
        %v4064 = vunpack.c.l.s4 1934713408
        %v4065 = vunpack.c.0.s8 %v4064
        %v4066 = vlaneseq
        %v4067 = vshrl.u32 %v4066, 7
        %v4068 = vsub.s32 %v4065, %v4067
        %v4069 = vrot.slane %v4055, %v4068
        %v4070 = vcombine.low %v4021, %v4021
        %v4071 = vcombine.high %v4021, %v4021
        %v4073 = vunpack.c.l.s4 1934713408
        %v4074 = vunpack.c.0.s8 %v4073
        %v4075 = vlaneseq
        %v4076 = vshrl.u32 %v4075, 7
        %v4077 = vsub.s32 %v4074, %v4076
        %v4078 = vrot.slane %v4070, %v4077
        %v4080 = vunpack.c.l.s4 1934713408
        %v4081 = vunpack.c.0.s8 %v4080
        %v4082 = vlaneseq
        %v4083 = vshrl.u32 %v4082, 7
        %v4084 = vsub.s32 %v4081, %v4083
        %v4085 = vrot.slane %v4071, %v4084
        %v4086 = vcombine.low %v4030, %v4062
        %v4087 = vcombine.high %v4030, %v4062
        %v4088 = vcombine.low %v4037, %v4069
        %v4089 = vcombine.high %v4037, %v4069
        %v4090 = vcombine.low %v4046, %v4078
        %v4091 = vcombine.high %v4046, %v4078
        %v4092 = vcombine.low %v4053, %v4085
        %v4093 = vcombine.high %v4053, %v4085
        %v4094 = vcombine.low %v836, %v847
        %v4095 = vcombine.high %v836, %v847
        %v4097 = vunpack.c.l.s4 1983009808
        %v4098 = vunpack.c.0.s8 %v4097
        %v4099 = vlaneseq
        %v4100 = vshrl.u32 %v4099, 7
        %v4101 = vsub.s32 %v4098, %v4100
        %v4102 = vrot.slane %v4094, %v4101
        %v4104 = vunpack.c.l.s4 1983009808
        %v4105 = vunpack.c.0.s8 %v4104
        %v4106 = vlaneseq
        %v4107 = vshrl.u32 %v4106, 7
        %v4108 = vsub.s32 %v4105, %v4107
        %v4109 = vrot.slane %v4095, %v4108
        %v4110 = vcombine.low %v858, %v869
        %v4111 = vcombine.high %v858, %v869
        %v4113 = vunpack.c.l.s4 1983009808
        %v4114 = vunpack.c.0.s8 %v4113
        %v4115 = vlaneseq
        %v4116 = vshrl.u32 %v4115, 7
        %v4117 = vsub.s32 %v4114, %v4116
        %v4118 = vrot.slane %v4110, %v4117
        %v4120 = vunpack.c.l.s4 1983009808
        %v4121 = vunpack.c.0.s8 %v4120
        %v4122 = vlaneseq
        %v4123 = vshrl.u32 %v4122, 7
        %v4124 = vsub.s32 %v4121, %v4123
        %v4125 = vrot.slane %v4111, %v4124
        %v4126 = vcombine.low %v4102, %v4102
        %v4127 = vcombine.high %v4102, %v4102
        %v4129 = vunpack.c.l.s4 1934713408
        %v4130 = vunpack.c.0.s8 %v4129
        %v4131 = vlaneseq
        %v4132 = vshrl.u32 %v4131, 7
        %v4133 = vsub.s32 %v4130, %v4132
        %v4134 = vrot.slane %v4126, %v4133
        %v4136 = vunpack.c.l.s4 1934713408
        %v4137 = vunpack.c.0.s8 %v4136
        %v4138 = vlaneseq
        %v4139 = vshrl.u32 %v4138, 7
        %v4140 = vsub.s32 %v4137, %v4139
        %v4141 = vrot.slane %v4127, %v4140
        %v4142 = vcombine.low %v4109, %v4109
        %v4143 = vcombine.high %v4109, %v4109
        %v4145 = vunpack.c.l.s4 1934713408
        %v4146 = vunpack.c.0.s8 %v4145
        %v4147 = vlaneseq
        %v4148 = vshrl.u32 %v4147, 7
        %v4149 = vsub.s32 %v4146, %v4148
        %v4150 = vrot.slane %v4142, %v4149
        %v4152 = vunpack.c.l.s4 1934713408
        %v4153 = vunpack.c.0.s8 %v4152
        %v4154 = vlaneseq
        %v4155 = vshrl.u32 %v4154, 7
        %v4156 = vsub.s32 %v4153, %v4155
        %v4157 = vrot.slane %v4143, %v4156
        %v4158 = vcombine.low %v4118, %v4118
        %v4159 = vcombine.high %v4118, %v4118
        %v4161 = vunpack.c.l.s4 1934713408
        %v4162 = vunpack.c.0.s8 %v4161
        %v4163 = vlaneseq
        %v4164 = vshrl.u32 %v4163, 7
        %v4165 = vsub.s32 %v4162, %v4164
        %v4166 = vrot.slane %v4158, %v4165
        %v4168 = vunpack.c.l.s4 1934713408
        %v4169 = vunpack.c.0.s8 %v4168
        %v4170 = vlaneseq
        %v4171 = vshrl.u32 %v4170, 7
        %v4172 = vsub.s32 %v4169, %v4171
        %v4173 = vrot.slane %v4159, %v4172
        %v4174 = vcombine.low %v4125, %v4125
        %v4175 = vcombine.high %v4125, %v4125
        %v4177 = vunpack.c.l.s4 1934713408
        %v4178 = vunpack.c.0.s8 %v4177
        %v4179 = vlaneseq
        %v4180 = vshrl.u32 %v4179, 7
        %v4181 = vsub.s32 %v4178, %v4180
        %v4182 = vrot.slane %v4174, %v4181
        %v4184 = vunpack.c.l.s4 1934713408
        %v4185 = vunpack.c.0.s8 %v4184
        %v4186 = vlaneseq
        %v4187 = vshrl.u32 %v4186, 7
        %v4188 = vsub.s32 %v4185, %v4187
        %v4189 = vrot.slane %v4175, %v4188
        %v4190 = vcombine.low %v4134, %v4166
        %v4191 = vcombine.high %v4134, %v4166
        %v4192 = vcombine.low %v4141, %v4173
        %v4193 = vcombine.high %v4141, %v4173
        %v4194 = vcombine.low %v4150, %v4182
        %v4195 = vcombine.high %v4150, %v4182
        %v4196 = vcombine.low %v4157, %v4189
        %v4197 = vcombine.high %v4157, %v4189
        %4214 = vrot.lane.b32.xlu0 %v967, 2
        %v4215 = vpop.permute.xlu0 %4214
        %4216 = vrot.lane.b32.xlu0 %v1071, 2
        %v4217 = vpop.permute.xlu0 %4216
        %4218 = vrot.lane.b32.xlu0 %v1175, 2
        %v4219 = vpop.permute.xlu0 %4218
        %4220 = vrot.lane.b32.xlu0 %v1279, 2
        %v4221 = vpop.permute.xlu0 %4220
        %4222 = vrot.lane.b32.xlu0 %v1799, 2
        %v4223 = vpop.permute.xlu0 %4222
        %4224 = vrot.lane.b32.xlu0 %v1903, 2
        %v4225 = vpop.permute.xlu0 %4224
        %4226 = vrot.lane.b32.xlu0 %v2007, 2
        %v4227 = vpop.permute.xlu0 %4226
        %4228 = vrot.lane.b32.xlu0 %v2111, 2
        %v4229 = vpop.permute.xlu0 %4228
        %4230 = vrot.lane.b32.xlu0 %v2631, 2
        %v4231 = vpop.permute.xlu0 %4230
        %4232 = vrot.lane.b32.xlu0 %v2735, 2
        %v4233 = vpop.permute.xlu0 %4232
        %4234 = vrot.lane.b32.xlu0 %v2839, 2
        %v4235 = vpop.permute.xlu0 %4234
        %4236 = vrot.lane.b32.xlu0 %v2943, 2
        %v4237 = vpop.permute.xlu0 %4236
        %4238 = vrot.lane.b32.xlu0 %v3463, 2
        %v4239 = vpop.permute.xlu0 %4238
        %4240 = vrot.lane.b32.xlu0 %v3567, 2
        %v4241 = vpop.permute.xlu0 %4240
        %4242 = vrot.lane.b32.xlu0 %v3671, 2
        %v4243 = vpop.permute.xlu0 %4242
        %4244 = vrot.lane.b32.xlu0 %v3775, 2
        %v4245 = vpop.permute.xlu0 %4244
        %4278 = vrot.lane.b32.xlu0 %v968, 4
        %v4279 = vpop.permute.xlu0 %4278
        %4280 = vrot.lane.b32.xlu0 %v1072, 4
        %v4281 = vpop.permute.xlu0 %4280
        %4282 = vrot.lane.b32.xlu0 %v1176, 4
        %v4283 = vpop.permute.xlu0 %4282
        %4284 = vrot.lane.b32.xlu0 %v1280, 4
        %v4285 = vpop.permute.xlu0 %4284
        %4286 = vrot.lane.b32.xlu0 %v1800, 4
        %v4287 = vpop.permute.xlu0 %4286
        %4288 = vrot.lane.b32.xlu0 %v1904, 4
        %v4289 = vpop.permute.xlu0 %4288
        %4290 = vrot.lane.b32.xlu0 %v2008, 4
        %v4291 = vpop.permute.xlu0 %4290
        %4292 = vrot.lane.b32.xlu0 %v2112, 4
        %v4293 = vpop.permute.xlu0 %4292
        %4294 = vrot.lane.b32.xlu0 %v2632, 4
        %v4295 = vpop.permute.xlu0 %4294
        %4296 = vrot.lane.b32.xlu0 %v2736, 4
        %v4297 = vpop.permute.xlu0 %4296
        %4298 = vrot.lane.b32.xlu0 %v2840, 4
        %v4299 = vpop.permute.xlu0 %4298
        %4300 = vrot.lane.b32.xlu0 %v2944, 4
        %v4301 = vpop.permute.xlu0 %4300
        %4302 = vrot.lane.b32.xlu0 %v3464, 4
        %v4303 = vpop.permute.xlu0 %4302
        %4304 = vrot.lane.b32.xlu0 %v3568, 4
        %v4305 = vpop.permute.xlu0 %4304
        %4306 = vrot.lane.b32.xlu0 %v3672, 4
        %v4307 = vpop.permute.xlu0 %4306
        %4308 = vrot.lane.b32.xlu0 %v3776, 4
        %v4309 = vpop.permute.xlu0 %4308
        %4342 = vrot.lane.b32.xlu0 %v969, 6
        %v4343 = vpop.permute.xlu0 %4342
        %4344 = vrot.lane.b32.xlu0 %v1073, 6
        %v4345 = vpop.permute.xlu0 %4344
        %4346 = vrot.lane.b32.xlu0 %v1177, 6
        %v4347 = vpop.permute.xlu0 %4346
        %4348 = vrot.lane.b32.xlu0 %v1281, 6
        %v4349 = vpop.permute.xlu0 %4348
        %4350 = vrot.lane.b32.xlu0 %v1801, 6
        %v4351 = vpop.permute.xlu0 %4350
        %4352 = vrot.lane.b32.xlu0 %v1905, 6
        %v4353 = vpop.permute.xlu0 %4352
        %4354 = vrot.lane.b32.xlu0 %v2009, 6
        %v4355 = vpop.permute.xlu0 %4354
        %4356 = vrot.lane.b32.xlu0 %v2113, 6
        %v4357 = vpop.permute.xlu0 %4356
        %4358 = vrot.lane.b32.xlu0 %v2633, 6
        %v4359 = vpop.permute.xlu0 %4358
        %4360 = vrot.lane.b32.xlu0 %v2737, 6
        %v4361 = vpop.permute.xlu0 %4360
        %4362 = vrot.lane.b32.xlu0 %v2841, 6
        %v4363 = vpop.permute.xlu0 %4362
        %4364 = vrot.lane.b32.xlu0 %v2945, 6
        %v4365 = vpop.permute.xlu0 %4364
        %4366 = vrot.lane.b32.xlu0 %v3465, 6
        %v4367 = vpop.permute.xlu0 %4366
        %4368 = vrot.lane.b32.xlu0 %v3569, 6
        %v4369 = vpop.permute.xlu0 %4368
        %4370 = vrot.lane.b32.xlu0 %v3673, 6
        %v4371 = vpop.permute.xlu0 %4370
        %4372 = vrot.lane.b32.xlu0 %v3777, 6
        %v4373 = vpop.permute.xlu0 %4372
        %4406 = vrot.lane.b32.xlu0 %v970, 8
        %v4407 = vpop.permute.xlu0 %4406
        %4408 = vrot.lane.b32.xlu0 %v1074, 8
        %v4409 = vpop.permute.xlu0 %4408
        %4410 = vrot.lane.b32.xlu0 %v1178, 8
        %v4411 = vpop.permute.xlu0 %4410
        %4412 = vrot.lane.b32.xlu0 %v1282, 8
        %v4413 = vpop.permute.xlu0 %4412
        %4414 = vrot.lane.b32.xlu0 %v1802, 8
        %v4415 = vpop.permute.xlu0 %4414
        %4416 = vrot.lane.b32.xlu0 %v1906, 8
        %v4417 = vpop.permute.xlu0 %4416
        %4418 = vrot.lane.b32.xlu0 %v2010, 8
        %v4419 = vpop.permute.xlu0 %4418
        %4420 = vrot.lane.b32.xlu0 %v2114, 8
        %v4421 = vpop.permute.xlu0 %4420
        %4422 = vrot.lane.b32.xlu0 %v2634, 8
        %v4423 = vpop.permute.xlu0 %4422
        %4424 = vrot.lane.b32.xlu0 %v2738, 8
        %v4425 = vpop.permute.xlu0 %4424
        %4426 = vrot.lane.b32.xlu0 %v2842, 8
        %v4427 = vpop.permute.xlu0 %4426
        %4428 = vrot.lane.b32.xlu0 %v2946, 8
        %v4429 = vpop.permute.xlu0 %4428
        %4430 = vrot.lane.b32.xlu0 %v3466, 8
        %v4431 = vpop.permute.xlu0 %4430
        %4432 = vrot.lane.b32.xlu0 %v3570, 8
        %v4433 = vpop.permute.xlu0 %4432
        %4434 = vrot.lane.b32.xlu0 %v3674, 8
        %v4435 = vpop.permute.xlu0 %4434
        %4436 = vrot.lane.b32.xlu0 %v3778, 8
        %v4437 = vpop.permute.xlu0 %4436
        %4470 = vrot.lane.b32.xlu0 %v971, 10
        %v4471 = vpop.permute.xlu0 %4470
        %4472 = vrot.lane.b32.xlu0 %v1075, 10
        %v4473 = vpop.permute.xlu0 %4472
        %4474 = vrot.lane.b32.xlu0 %v1179, 10
        %v4475 = vpop.permute.xlu0 %4474
        %4476 = vrot.lane.b32.xlu0 %v1283, 10
        %v4477 = vpop.permute.xlu0 %4476
        %4478 = vrot.lane.b32.xlu0 %v1803, 10
        %v4479 = vpop.permute.xlu0 %4478
        %4480 = vrot.lane.b32.xlu0 %v1907, 10
        %v4481 = vpop.permute.xlu0 %4480
        %4482 = vrot.lane.b32.xlu0 %v2011, 10
        %v4483 = vpop.permute.xlu0 %4482
        %4484 = vrot.lane.b32.xlu0 %v2115, 10
        %v4485 = vpop.permute.xlu0 %4484
        %4486 = vrot.lane.b32.xlu0 %v2635, 10
        %v4487 = vpop.permute.xlu0 %4486
        %4488 = vrot.lane.b32.xlu0 %v2739, 10
        %v4489 = vpop.permute.xlu0 %4488
        %4490 = vrot.lane.b32.xlu0 %v2843, 10
        %v4491 = vpop.permute.xlu0 %4490
        %4492 = vrot.lane.b32.xlu0 %v2947, 10
        %v4493 = vpop.permute.xlu0 %4492
        %4494 = vrot.lane.b32.xlu0 %v3467, 10
        %v4495 = vpop.permute.xlu0 %4494
        %4496 = vrot.lane.b32.xlu0 %v3571, 10
        %v4497 = vpop.permute.xlu0 %4496
        %4498 = vrot.lane.b32.xlu0 %v3675, 10
        %v4499 = vpop.permute.xlu0 %4498
        %4500 = vrot.lane.b32.xlu0 %v3779, 10
        %v4501 = vpop.permute.xlu0 %4500
        %4534 = vrot.lane.b32.xlu0 %v972, 12
        %v4535 = vpop.permute.xlu0 %4534
        %4536 = vrot.lane.b32.xlu0 %v1076, 12
        %v4537 = vpop.permute.xlu0 %4536
        %4538 = vrot.lane.b32.xlu0 %v1180, 12
        %v4539 = vpop.permute.xlu0 %4538
        %4540 = vrot.lane.b32.xlu0 %v1284, 12
        %v4541 = vpop.permute.xlu0 %4540
        %4542 = vrot.lane.b32.xlu0 %v1804, 12
        %v4543 = vpop.permute.xlu0 %4542
        %4544 = vrot.lane.b32.xlu0 %v1908, 12
        %v4545 = vpop.permute.xlu0 %4544
        %4546 = vrot.lane.b32.xlu0 %v2012, 12
        %v4547 = vpop.permute.xlu0 %4546
        %4548 = vrot.lane.b32.xlu0 %v2116, 12
        %v4549 = vpop.permute.xlu0 %4548
        %4550 = vrot.lane.b32.xlu0 %v2636, 12
        %v4551 = vpop.permute.xlu0 %4550
        %4552 = vrot.lane.b32.xlu0 %v2740, 12
        %v4553 = vpop.permute.xlu0 %4552
        %4554 = vrot.lane.b32.xlu0 %v2844, 12
        %v4555 = vpop.permute.xlu0 %4554
        %4556 = vrot.lane.b32.xlu0 %v2948, 12
        %v4557 = vpop.permute.xlu0 %4556
        %4558 = vrot.lane.b32.xlu0 %v3468, 12
        %v4559 = vpop.permute.xlu0 %4558
        %4560 = vrot.lane.b32.xlu0 %v3572, 12
        %v4561 = vpop.permute.xlu0 %4560
        %4562 = vrot.lane.b32.xlu0 %v3676, 12
        %v4563 = vpop.permute.xlu0 %4562
        %4564 = vrot.lane.b32.xlu0 %v3780, 12
        %v4565 = vpop.permute.xlu0 %4564
        %4598 = vrot.lane.b32.xlu0 %v973, 14
        %v4599 = vpop.permute.xlu0 %4598
        %4600 = vrot.lane.b32.xlu0 %v1077, 14
        %v4601 = vpop.permute.xlu0 %4600
        %4602 = vrot.lane.b32.xlu0 %v1181, 14
        %v4603 = vpop.permute.xlu0 %4602
        %4604 = vrot.lane.b32.xlu0 %v1285, 14
        %v4605 = vpop.permute.xlu0 %4604
        %4606 = vrot.lane.b32.xlu0 %v1805, 14
        %v4607 = vpop.permute.xlu0 %4606
        %4608 = vrot.lane.b32.xlu0 %v1909, 14
        %v4609 = vpop.permute.xlu0 %4608
        %4610 = vrot.lane.b32.xlu0 %v2013, 14
        %v4611 = vpop.permute.xlu0 %4610
        %4612 = vrot.lane.b32.xlu0 %v2117, 14
        %v4613 = vpop.permute.xlu0 %4612
        %4614 = vrot.lane.b32.xlu0 %v2637, 14
        %v4615 = vpop.permute.xlu0 %4614
        %4616 = vrot.lane.b32.xlu0 %v2741, 14
        %v4617 = vpop.permute.xlu0 %4616
        %4618 = vrot.lane.b32.xlu0 %v2845, 14
        %v4619 = vpop.permute.xlu0 %4618
        %4620 = vrot.lane.b32.xlu0 %v2949, 14
        %v4621 = vpop.permute.xlu0 %4620
        %4622 = vrot.lane.b32.xlu0 %v3469, 14
        %v4623 = vpop.permute.xlu0 %4622
        %4624 = vrot.lane.b32.xlu0 %v3573, 14
        %v4625 = vpop.permute.xlu0 %4624
        %4626 = vrot.lane.b32.xlu0 %v3677, 14
        %v4627 = vpop.permute.xlu0 %4626
        %4628 = vrot.lane.b32.xlu0 %v3781, 14
        %v4629 = vpop.permute.xlu0 %4628
        %4662 = vrot.lane.b32.xlu0 %v1382, 16
        %v4663 = vpop.permute.xlu0 %4662
        %4664 = vrot.lane.b32.xlu0 %v1486, 16
        %v4665 = vpop.permute.xlu0 %4664
        %4666 = vrot.lane.b32.xlu0 %v1590, 16
        %v4667 = vpop.permute.xlu0 %4666
        %4668 = vrot.lane.b32.xlu0 %v1694, 16
        %v4669 = vpop.permute.xlu0 %4668
        %4670 = vrot.lane.b32.xlu0 %v2214, 16
        %v4671 = vpop.permute.xlu0 %4670
        %4672 = vrot.lane.b32.xlu0 %v2318, 16
        %v4673 = vpop.permute.xlu0 %4672
        %4674 = vrot.lane.b32.xlu0 %v2422, 16
        %v4675 = vpop.permute.xlu0 %4674
        %4676 = vrot.lane.b32.xlu0 %v2526, 16
        %v4677 = vpop.permute.xlu0 %4676
        %4678 = vrot.lane.b32.xlu0 %v3046, 16
        %v4679 = vpop.permute.xlu0 %4678
        %4680 = vrot.lane.b32.xlu0 %v3150, 16
        %v4681 = vpop.permute.xlu0 %4680
        %4682 = vrot.lane.b32.xlu0 %v3254, 16
        %v4683 = vpop.permute.xlu0 %4682
        %4684 = vrot.lane.b32.xlu0 %v3358, 16
        %v4685 = vpop.permute.xlu0 %4684
        %4686 = vrot.lane.b32.xlu0 %v3878, 16
        %v4687 = vpop.permute.xlu0 %4686
        %4688 = vrot.lane.b32.xlu0 %v3982, 16
        %v4689 = vpop.permute.xlu0 %4688
        %4690 = vrot.lane.b32.xlu0 %v4086, 16
        %v4691 = vpop.permute.xlu0 %4690
        %4692 = vrot.lane.b32.xlu0 %v4190, 16
        %v4693 = vpop.permute.xlu0 %4692
        %4726 = vrot.lane.b32.xlu0 %v1383, 18
        %v4727 = vpop.permute.xlu0 %4726
        %4728 = vrot.lane.b32.xlu0 %v1487, 18
        %v4729 = vpop.permute.xlu0 %4728
        %4730 = vrot.lane.b32.xlu0 %v1591, 18
        %v4731 = vpop.permute.xlu0 %4730
        %4732 = vrot.lane.b32.xlu0 %v1695, 18
        %v4733 = vpop.permute.xlu0 %4732
        %4734 = vrot.lane.b32.xlu0 %v2215, 18
        %v4735 = vpop.permute.xlu0 %4734
        %4736 = vrot.lane.b32.xlu0 %v2319, 18
        %v4737 = vpop.permute.xlu0 %4736
        %4738 = vrot.lane.b32.xlu0 %v2423, 18
        %v4739 = vpop.permute.xlu0 %4738
        %4740 = vrot.lane.b32.xlu0 %v2527, 18
        %v4741 = vpop.permute.xlu0 %4740
        %4742 = vrot.lane.b32.xlu0 %v3047, 18
        %v4743 = vpop.permute.xlu0 %4742
        %4744 = vrot.lane.b32.xlu0 %v3151, 18
        %v4745 = vpop.permute.xlu0 %4744
        %4746 = vrot.lane.b32.xlu0 %v3255, 18
        %v4747 = vpop.permute.xlu0 %4746
        %4748 = vrot.lane.b32.xlu0 %v3359, 18
        %v4749 = vpop.permute.xlu0 %4748
        %4750 = vrot.lane.b32.xlu0 %v3879, 18
        %v4751 = vpop.permute.xlu0 %4750
        %4752 = vrot.lane.b32.xlu0 %v3983, 18
        %v4753 = vpop.permute.xlu0 %4752
        %4754 = vrot.lane.b32.xlu0 %v4087, 18
        %v4755 = vpop.permute.xlu0 %4754
        %4756 = vrot.lane.b32.xlu0 %v4191, 18
        %v4757 = vpop.permute.xlu0 %4756
        %4790 = vrot.lane.b32.xlu0 %v1384, 20
        %v4791 = vpop.permute.xlu0 %4790
        %4792 = vrot.lane.b32.xlu0 %v1488, 20
        %v4793 = vpop.permute.xlu0 %4792
        %4794 = vrot.lane.b32.xlu0 %v1592, 20
        %v4795 = vpop.permute.xlu0 %4794
        %4796 = vrot.lane.b32.xlu0 %v1696, 20
        %v4797 = vpop.permute.xlu0 %4796
        %4798 = vrot.lane.b32.xlu0 %v2216, 20
        %v4799 = vpop.permute.xlu0 %4798
        %4800 = vrot.lane.b32.xlu0 %v2320, 20
        %v4801 = vpop.permute.xlu0 %4800
        %4802 = vrot.lane.b32.xlu0 %v2424, 20
        %v4803 = vpop.permute.xlu0 %4802
        %4804 = vrot.lane.b32.xlu0 %v2528, 20
        %v4805 = vpop.permute.xlu0 %4804
        %4806 = vrot.lane.b32.xlu0 %v3048, 20
        %v4807 = vpop.permute.xlu0 %4806
        %4808 = vrot.lane.b32.xlu0 %v3152, 20
        %v4809 = vpop.permute.xlu0 %4808
        %4810 = vrot.lane.b32.xlu0 %v3256, 20
        %v4811 = vpop.permute.xlu0 %4810
        %4812 = vrot.lane.b32.xlu0 %v3360, 20
        %v4813 = vpop.permute.xlu0 %4812
        %4814 = vrot.lane.b32.xlu0 %v3880, 20
        %v4815 = vpop.permute.xlu0 %4814
        %4816 = vrot.lane.b32.xlu0 %v3984, 20
        %v4817 = vpop.permute.xlu0 %4816
        %4818 = vrot.lane.b32.xlu0 %v4088, 20
        %v4819 = vpop.permute.xlu0 %4818
        %4820 = vrot.lane.b32.xlu0 %v4192, 20
        %v4821 = vpop.permute.xlu0 %4820
        %4854 = vrot.lane.b32.xlu0 %v1385, 22
        %v4855 = vpop.permute.xlu0 %4854
        %4856 = vrot.lane.b32.xlu0 %v1489, 22
        %v4857 = vpop.permute.xlu0 %4856
        %4858 = vrot.lane.b32.xlu0 %v1593, 22
        %v4859 = vpop.permute.xlu0 %4858
        %4860 = vrot.lane.b32.xlu0 %v1697, 22
        %v4861 = vpop.permute.xlu0 %4860
        %4862 = vrot.lane.b32.xlu0 %v2217, 22
        %v4863 = vpop.permute.xlu0 %4862
        %4864 = vrot.lane.b32.xlu0 %v2321, 22
        %v4865 = vpop.permute.xlu0 %4864
        %4866 = vrot.lane.b32.xlu0 %v2425, 22
        %v4867 = vpop.permute.xlu0 %4866
        %4868 = vrot.lane.b32.xlu0 %v2529, 22
        %v4869 = vpop.permute.xlu0 %4868
        %4870 = vrot.lane.b32.xlu0 %v3049, 22
        %v4871 = vpop.permute.xlu0 %4870
        %4872 = vrot.lane.b32.xlu0 %v3153, 22
        %v4873 = vpop.permute.xlu0 %4872
        %4874 = vrot.lane.b32.xlu0 %v3257, 22
        %v4875 = vpop.permute.xlu0 %4874
        %4876 = vrot.lane.b32.xlu0 %v3361, 22
        %v4877 = vpop.permute.xlu0 %4876
        %4878 = vrot.lane.b32.xlu0 %v3881, 22
        %v4879 = vpop.permute.xlu0 %4878
        %4880 = vrot.lane.b32.xlu0 %v3985, 22
        %v4881 = vpop.permute.xlu0 %4880
        %4882 = vrot.lane.b32.xlu0 %v4089, 22
        %v4883 = vpop.permute.xlu0 %4882
        %4884 = vrot.lane.b32.xlu0 %v4193, 22
        %v4885 = vpop.permute.xlu0 %4884
        %4918 = vrot.lane.b32.xlu0 %v1386, 24
        %v4919 = vpop.permute.xlu0 %4918
        %4920 = vrot.lane.b32.xlu0 %v1490, 24
        %v4921 = vpop.permute.xlu0 %4920
        %4922 = vrot.lane.b32.xlu0 %v1594, 24
        %v4923 = vpop.permute.xlu0 %4922
        %4924 = vrot.lane.b32.xlu0 %v1698, 24
        %v4925 = vpop.permute.xlu0 %4924
        %4926 = vrot.lane.b32.xlu0 %v2218, 24
        %v4927 = vpop.permute.xlu0 %4926
        %4928 = vrot.lane.b32.xlu0 %v2322, 24
        %v4929 = vpop.permute.xlu0 %4928
        %4930 = vrot.lane.b32.xlu0 %v2426, 24
        %v4931 = vpop.permute.xlu0 %4930
        %4932 = vrot.lane.b32.xlu0 %v2530, 24
        %v4933 = vpop.permute.xlu0 %4932
        %4934 = vrot.lane.b32.xlu0 %v3050, 24
        %v4935 = vpop.permute.xlu0 %4934
        %4936 = vrot.lane.b32.xlu0 %v3154, 24
        %v4937 = vpop.permute.xlu0 %4936
        %4938 = vrot.lane.b32.xlu0 %v3258, 24
        %v4939 = vpop.permute.xlu0 %4938
        %4940 = vrot.lane.b32.xlu0 %v3362, 24
        %v4941 = vpop.permute.xlu0 %4940
        %4942 = vrot.lane.b32.xlu0 %v3882, 24
        %v4943 = vpop.permute.xlu0 %4942
        %4944 = vrot.lane.b32.xlu0 %v3986, 24
        %v4945 = vpop.permute.xlu0 %4944
        %4946 = vrot.lane.b32.xlu0 %v4090, 24
        %v4947 = vpop.permute.xlu0 %4946
        %4948 = vrot.lane.b32.xlu0 %v4194, 24
        %v4949 = vpop.permute.xlu0 %4948
        %4982 = vrot.lane.b32.xlu0 %v1387, 26
        %v4983 = vpop.permute.xlu0 %4982
        %4984 = vrot.lane.b32.xlu0 %v1491, 26
        %v4985 = vpop.permute.xlu0 %4984
        %4986 = vrot.lane.b32.xlu0 %v1595, 26
        %v4987 = vpop.permute.xlu0 %4986
        %4988 = vrot.lane.b32.xlu0 %v1699, 26
        %v4989 = vpop.permute.xlu0 %4988
        %4990 = vrot.lane.b32.xlu0 %v2219, 26
        %v4991 = vpop.permute.xlu0 %4990
        %4992 = vrot.lane.b32.xlu0 %v2323, 26
        %v4993 = vpop.permute.xlu0 %4992
        %4994 = vrot.lane.b32.xlu0 %v2427, 26
        %v4995 = vpop.permute.xlu0 %4994
        %4996 = vrot.lane.b32.xlu0 %v2531, 26
        %v4997 = vpop.permute.xlu0 %4996
        %4998 = vrot.lane.b32.xlu0 %v3051, 26
        %v4999 = vpop.permute.xlu0 %4998
        %5000 = vrot.lane.b32.xlu0 %v3155, 26
        %v5001 = vpop.permute.xlu0 %5000
        %5002 = vrot.lane.b32.xlu0 %v3259, 26
        %v5003 = vpop.permute.xlu0 %5002
        %5004 = vrot.lane.b32.xlu0 %v3363, 26
        %v5005 = vpop.permute.xlu0 %5004
        %5006 = vrot.lane.b32.xlu0 %v3883, 26
        %v5007 = vpop.permute.xlu0 %5006
        %5008 = vrot.lane.b32.xlu0 %v3987, 26
        %v5009 = vpop.permute.xlu0 %5008
        %5010 = vrot.lane.b32.xlu0 %v4091, 26
        %v5011 = vpop.permute.xlu0 %5010
        %5012 = vrot.lane.b32.xlu0 %v4195, 26
        %v5013 = vpop.permute.xlu0 %5012
        %5046 = vrot.lane.b32.xlu0 %v1388, 28
        %v5047 = vpop.permute.xlu0 %5046
        %5048 = vrot.lane.b32.xlu0 %v1492, 28
        %v5049 = vpop.permute.xlu0 %5048
        %5050 = vrot.lane.b32.xlu0 %v1596, 28
        %v5051 = vpop.permute.xlu0 %5050
        %5052 = vrot.lane.b32.xlu0 %v1700, 28
        %v5053 = vpop.permute.xlu0 %5052
        %5054 = vrot.lane.b32.xlu0 %v2220, 28
        %v5055 = vpop.permute.xlu0 %5054
        %5056 = vrot.lane.b32.xlu0 %v2324, 28
        %v5057 = vpop.permute.xlu0 %5056
        %5058 = vrot.lane.b32.xlu0 %v2428, 28
        %v5059 = vpop.permute.xlu0 %5058
        %5060 = vrot.lane.b32.xlu0 %v2532, 28
        %v5061 = vpop.permute.xlu0 %5060
        %5062 = vrot.lane.b32.xlu0 %v3052, 28
        %v5063 = vpop.permute.xlu0 %5062
        %5064 = vrot.lane.b32.xlu0 %v3156, 28
        %v5065 = vpop.permute.xlu0 %5064
        %5066 = vrot.lane.b32.xlu0 %v3260, 28
        %v5067 = vpop.permute.xlu0 %5066
        %5068 = vrot.lane.b32.xlu0 %v3364, 28
        %v5069 = vpop.permute.xlu0 %5068
        %5070 = vrot.lane.b32.xlu0 %v3884, 28
        %v5071 = vpop.permute.xlu0 %5070
        %5072 = vrot.lane.b32.xlu0 %v3988, 28
        %v5073 = vpop.permute.xlu0 %5072
        %5074 = vrot.lane.b32.xlu0 %v4092, 28
        %v5075 = vpop.permute.xlu0 %5074
        %5076 = vrot.lane.b32.xlu0 %v4196, 28
        %v5077 = vpop.permute.xlu0 %5076
        %5110 = vrot.lane.b32.xlu0 %v1389, 30
        %v5111 = vpop.permute.xlu0 %5110
        %5112 = vrot.lane.b32.xlu0 %v1493, 30
        %v5113 = vpop.permute.xlu0 %5112
        %5114 = vrot.lane.b32.xlu0 %v1597, 30
        %v5115 = vpop.permute.xlu0 %5114
        %5116 = vrot.lane.b32.xlu0 %v1701, 30
        %v5117 = vpop.permute.xlu0 %5116
        %5118 = vrot.lane.b32.xlu0 %v2221, 30
        %v5119 = vpop.permute.xlu0 %5118
        %5120 = vrot.lane.b32.xlu0 %v2325, 30
        %v5121 = vpop.permute.xlu0 %5120
        %5122 = vrot.lane.b32.xlu0 %v2429, 30
        %v5123 = vpop.permute.xlu0 %5122
        %5124 = vrot.lane.b32.xlu0 %v2533, 30
        %v5125 = vpop.permute.xlu0 %5124
        %5126 = vrot.lane.b32.xlu0 %v3053, 30
        %v5127 = vpop.permute.xlu0 %5126
        %5128 = vrot.lane.b32.xlu0 %v3157, 30
        %v5129 = vpop.permute.xlu0 %5128
        %5130 = vrot.lane.b32.xlu0 %v3261, 30
        %v5131 = vpop.permute.xlu0 %5130
        %5132 = vrot.lane.b32.xlu0 %v3365, 30
        %v5133 = vpop.permute.xlu0 %5132
        %5134 = vrot.lane.b32.xlu0 %v3885, 30
        %v5135 = vpop.permute.xlu0 %5134
        %5136 = vrot.lane.b32.xlu0 %v3989, 30
        %v5137 = vpop.permute.xlu0 %5136
        %5138 = vrot.lane.b32.xlu0 %v4093, 30
        %v5139 = vpop.permute.xlu0 %5138
        %5140 = vrot.lane.b32.xlu0 %v4197, 30
        %v5141 = vpop.permute.xlu0 %5140
        %vm5158 = vcmask 15360
        %v5159 = vsel %vm5158, %v966, %v4215
        %v5160 = vsel %vm5158, %v1070, %v4217
        %v5161 = vsel %vm5158, %v1174, %v4219
        %v5162 = vsel %vm5158, %v1278, %v4221
        %v5163 = vsel %vm5158, %v1798, %v4223
        %v5164 = vsel %vm5158, %v1902, %v4225
        %v5165 = vsel %vm5158, %v2006, %v4227
        %v5166 = vsel %vm5158, %v2110, %v4229
        %v5167 = vsel %vm5158, %v2630, %v4231
        %v5168 = vsel %vm5158, %v2734, %v4233
        %v5169 = vsel %vm5158, %v2838, %v4235
        %v5170 = vsel %vm5158, %v2942, %v4237
        %v5171 = vsel %vm5158, %v3462, %v4239
        %v5172 = vsel %vm5158, %v3566, %v4241
        %v5173 = vsel %vm5158, %v3670, %v4243
        %v5174 = vsel %vm5158, %v3774, %v4245
        %vm5175 = vcmask 31744
        %v5176 = vsel %vm5175, %v5159, %v4279
        %v5177 = vsel %vm5175, %v5160, %v4281
        %v5178 = vsel %vm5175, %v5161, %v4283
        %v5179 = vsel %vm5175, %v5162, %v4285
        %v5180 = vsel %vm5175, %v5163, %v4287
        %v5181 = vsel %vm5175, %v5164, %v4289
        %v5182 = vsel %vm5175, %v5165, %v4291
        %v5183 = vsel %vm5175, %v5166, %v4293
        %v5184 = vsel %vm5175, %v5167, %v4295
        %v5185 = vsel %vm5175, %v5168, %v4297
        %v5186 = vsel %vm5175, %v5169, %v4299
        %v5187 = vsel %vm5175, %v5170, %v4301
        %v5188 = vsel %vm5175, %v5171, %v4303
        %v5189 = vsel %vm5175, %v5172, %v4305
        %v5190 = vsel %vm5175, %v5173, %v4307
        %v5191 = vsel %vm5175, %v5174, %v4309
        %vm5192 = vcmask 48128
        %v5193 = vsel %vm5192, %v5176, %v4343
        %v5194 = vsel %vm5192, %v5177, %v4345
        %v5195 = vsel %vm5192, %v5178, %v4347
        %v5196 = vsel %vm5192, %v5179, %v4349
        %v5197 = vsel %vm5192, %v5180, %v4351
        %v5198 = vsel %vm5192, %v5181, %v4353
        %v5199 = vsel %vm5192, %v5182, %v4355
        %v5200 = vsel %vm5192, %v5183, %v4357
        %v5201 = vsel %vm5192, %v5184, %v4359
        %v5202 = vsel %vm5192, %v5185, %v4361
        %v5203 = vsel %vm5192, %v5186, %v4363
        %v5204 = vsel %vm5192, %v5187, %v4365
        %v5205 = vsel %vm5192, %v5188, %v4367
        %v5206 = vsel %vm5192, %v5189, %v4369
        %v5207 = vsel %vm5192, %v5190, %v4371
        %v5208 = vsel %vm5192, %v5191, %v4373
        %vm5209 = vcmask 64512
        %v5210 = vsel %vm5209, %v5193, %v4407
        %v5211 = vsel %vm5209, %v5194, %v4409
        %v5212 = vsel %vm5209, %v5195, %v4411
        %v5213 = vsel %vm5209, %v5196, %v4413
        %v5214 = vsel %vm5209, %v5197, %v4415
        %v5215 = vsel %vm5209, %v5198, %v4417
        %v5216 = vsel %vm5209, %v5199, %v4419
        %v5217 = vsel %vm5209, %v5200, %v4421
        %v5218 = vsel %vm5209, %v5201, %v4423
        %v5219 = vsel %vm5209, %v5202, %v4425
        %v5220 = vsel %vm5209, %v5203, %v4427
        %v5221 = vsel %vm5209, %v5204, %v4429
        %v5222 = vsel %vm5209, %v5205, %v4431
        %v5223 = vsel %vm5209, %v5206, %v4433
        %v5224 = vsel %vm5209, %v5207, %v4435
        %v5225 = vsel %vm5209, %v5208, %v4437
        %vm5226 = vcmask 80896
        %v5227 = vsel %vm5226, %v5210, %v4471
        %v5228 = vsel %vm5226, %v5211, %v4473
        %v5229 = vsel %vm5226, %v5212, %v4475
        %v5230 = vsel %vm5226, %v5213, %v4477
        %v5231 = vsel %vm5226, %v5214, %v4479
        %v5232 = vsel %vm5226, %v5215, %v4481
        %v5233 = vsel %vm5226, %v5216, %v4483
        %v5234 = vsel %vm5226, %v5217, %v4485
        %v5235 = vsel %vm5226, %v5218, %v4487
        %v5236 = vsel %vm5226, %v5219, %v4489
        %v5237 = vsel %vm5226, %v5220, %v4491
        %v5238 = vsel %vm5226, %v5221, %v4493
        %v5239 = vsel %vm5226, %v5222, %v4495
        %v5240 = vsel %vm5226, %v5223, %v4497
        %v5241 = vsel %vm5226, %v5224, %v4499
        %v5242 = vsel %vm5226, %v5225, %v4501
        %vm5243 = vcmask 97280
        %v5244 = vsel %vm5243, %v5227, %v4535
        %v5245 = vsel %vm5243, %v5228, %v4537
        %v5246 = vsel %vm5243, %v5229, %v4539
        %v5247 = vsel %vm5243, %v5230, %v4541
        %v5248 = vsel %vm5243, %v5231, %v4543
        %v5249 = vsel %vm5243, %v5232, %v4545
        %v5250 = vsel %vm5243, %v5233, %v4547
        %v5251 = vsel %vm5243, %v5234, %v4549
        %v5252 = vsel %vm5243, %v5235, %v4551
        %v5253 = vsel %vm5243, %v5236, %v4553
        %v5254 = vsel %vm5243, %v5237, %v4555
        %v5255 = vsel %vm5243, %v5238, %v4557
        %v5256 = vsel %vm5243, %v5239, %v4559
        %v5257 = vsel %vm5243, %v5240, %v4561
        %v5258 = vsel %vm5243, %v5241, %v4563
        %v5259 = vsel %vm5243, %v5242, %v4565
        %vm5260 = vcmask 113664
        %v5261 = vsel %vm5260, %v5244, %v4599
        %v5262 = vsel %vm5260, %v5245, %v4601
        %v5263 = vsel %vm5260, %v5246, %v4603
        %v5264 = vsel %vm5260, %v5247, %v4605
        %v5265 = vsel %vm5260, %v5248, %v4607
        %v5266 = vsel %vm5260, %v5249, %v4609
        %v5267 = vsel %vm5260, %v5250, %v4611
        %v5268 = vsel %vm5260, %v5251, %v4613
        %v5269 = vsel %vm5260, %v5252, %v4615
        %v5270 = vsel %vm5260, %v5253, %v4617
        %v5271 = vsel %vm5260, %v5254, %v4619
        %v5272 = vsel %vm5260, %v5255, %v4621
        %v5273 = vsel %vm5260, %v5256, %v4623
        %v5274 = vsel %vm5260, %v5257, %v4625
        %v5275 = vsel %vm5260, %v5258, %v4627
        %v5276 = vsel %vm5260, %v5259, %v4629
        %vm5277 = vcmask 130048
        %v5278 = vsel %vm5277, %v5261, %v4663
        %v5279 = vsel %vm5277, %v5262, %v4665
        %v5280 = vsel %vm5277, %v5263, %v4667
        %v5281 = vsel %vm5277, %v5264, %v4669
        %v5282 = vsel %vm5277, %v5265, %v4671
        %v5283 = vsel %vm5277, %v5266, %v4673
        %v5284 = vsel %vm5277, %v5267, %v4675
        %v5285 = vsel %vm5277, %v5268, %v4677
        %v5286 = vsel %vm5277, %v5269, %v4679
        %v5287 = vsel %vm5277, %v5270, %v4681
        %v5288 = vsel %vm5277, %v5271, %v4683
        %v5289 = vsel %vm5277, %v5272, %v4685
        %v5290 = vsel %vm5277, %v5273, %v4687
        %v5291 = vsel %vm5277, %v5274, %v4689
        %v5292 = vsel %vm5277, %v5275, %v4691
        %v5293 = vsel %vm5277, %v5276, %v4693
        %vm5294 = vcmask 146432
        %v5295 = vsel %vm5294, %v5278, %v4727
        %v5296 = vsel %vm5294, %v5279, %v4729
        %v5297 = vsel %vm5294, %v5280, %v4731
        %v5298 = vsel %vm5294, %v5281, %v4733
        %v5299 = vsel %vm5294, %v5282, %v4735
        %v5300 = vsel %vm5294, %v5283, %v4737
        %v5301 = vsel %vm5294, %v5284, %v4739
        %v5302 = vsel %vm5294, %v5285, %v4741
        %v5303 = vsel %vm5294, %v5286, %v4743
        %v5304 = vsel %vm5294, %v5287, %v4745
        %v5305 = vsel %vm5294, %v5288, %v4747
        %v5306 = vsel %vm5294, %v5289, %v4749
        %v5307 = vsel %vm5294, %v5290, %v4751
        %v5308 = vsel %vm5294, %v5291, %v4753
        %v5309 = vsel %vm5294, %v5292, %v4755
        %v5310 = vsel %vm5294, %v5293, %v4757
        %vm5311 = vcmask 162816
        %v5312 = vsel %vm5311, %v5295, %v4791
        %v5313 = vsel %vm5311, %v5296, %v4793
        %v5314 = vsel %vm5311, %v5297, %v4795
        %v5315 = vsel %vm5311, %v5298, %v4797
        %v5316 = vsel %vm5311, %v5299, %v4799
        %v5317 = vsel %vm5311, %v5300, %v4801
        %v5318 = vsel %vm5311, %v5301, %v4803
        %v5319 = vsel %vm5311, %v5302, %v4805
        %v5320 = vsel %vm5311, %v5303, %v4807
        %v5321 = vsel %vm5311, %v5304, %v4809
        %v5322 = vsel %vm5311, %v5305, %v4811
        %v5323 = vsel %vm5311, %v5306, %v4813
        %v5324 = vsel %vm5311, %v5307, %v4815
        %v5325 = vsel %vm5311, %v5308, %v4817
        %v5326 = vsel %vm5311, %v5309, %v4819
        %v5327 = vsel %vm5311, %v5310, %v4821
        %vm5328 = vcmask 179200
        %v5329 = vsel %vm5328, %v5312, %v4855
        %v5330 = vsel %vm5328, %v5313, %v4857
        %v5331 = vsel %vm5328, %v5314, %v4859
        %v5332 = vsel %vm5328, %v5315, %v4861
        %v5333 = vsel %vm5328, %v5316, %v4863
        %v5334 = vsel %vm5328, %v5317, %v4865
        %v5335 = vsel %vm5328, %v5318, %v4867
        %v5336 = vsel %vm5328, %v5319, %v4869
        %v5337 = vsel %vm5328, %v5320, %v4871
        %v5338 = vsel %vm5328, %v5321, %v4873
        %v5339 = vsel %vm5328, %v5322, %v4875
        %v5340 = vsel %vm5328, %v5323, %v4877
        %v5341 = vsel %vm5328, %v5324, %v4879
        %v5342 = vsel %vm5328, %v5325, %v4881
        %v5343 = vsel %vm5328, %v5326, %v4883
        %v5344 = vsel %vm5328, %v5327, %v4885
        %vm5345 = vcmask 195584
        %v5346 = vsel %vm5345, %v5329, %v4919
        %v5347 = vsel %vm5345, %v5330, %v4921
        %v5348 = vsel %vm5345, %v5331, %v4923
        %v5349 = vsel %vm5345, %v5332, %v4925
        %v5350 = vsel %vm5345, %v5333, %v4927
        %v5351 = vsel %vm5345, %v5334, %v4929
        %v5352 = vsel %vm5345, %v5335, %v4931
        %v5353 = vsel %vm5345, %v5336, %v4933
        %v5354 = vsel %vm5345, %v5337, %v4935
        %v5355 = vsel %vm5345, %v5338, %v4937
        %v5356 = vsel %vm5345, %v5339, %v4939
        %v5357 = vsel %vm5345, %v5340, %v4941
        %v5358 = vsel %vm5345, %v5341, %v4943
        %v5359 = vsel %vm5345, %v5342, %v4945
        %v5360 = vsel %vm5345, %v5343, %v4947
        %v5361 = vsel %vm5345, %v5344, %v4949
        %vm5362 = vcmask 211968
        %v5363 = vsel %vm5362, %v5346, %v4983
        %v5364 = vsel %vm5362, %v5347, %v4985
        %v5365 = vsel %vm5362, %v5348, %v4987
        %v5366 = vsel %vm5362, %v5349, %v4989
        %v5367 = vsel %vm5362, %v5350, %v4991
        %v5368 = vsel %vm5362, %v5351, %v4993
        %v5369 = vsel %vm5362, %v5352, %v4995
        %v5370 = vsel %vm5362, %v5353, %v4997
        %v5371 = vsel %vm5362, %v5354, %v4999
        %v5372 = vsel %vm5362, %v5355, %v5001
        %v5373 = vsel %vm5362, %v5356, %v5003
        %v5374 = vsel %vm5362, %v5357, %v5005
        %v5375 = vsel %vm5362, %v5358, %v5007
        %v5376 = vsel %vm5362, %v5359, %v5009
        %v5377 = vsel %vm5362, %v5360, %v5011
        %v5378 = vsel %vm5362, %v5361, %v5013
        %vm5379 = vcmask 228352
        %v5380 = vsel %vm5379, %v5363, %v5047
        %v5381 = vsel %vm5379, %v5364, %v5049
        %v5382 = vsel %vm5379, %v5365, %v5051
        %v5383 = vsel %vm5379, %v5366, %v5053
        %v5384 = vsel %vm5379, %v5367, %v5055
        %v5385 = vsel %vm5379, %v5368, %v5057
        %v5386 = vsel %vm5379, %v5369, %v5059
        %v5387 = vsel %vm5379, %v5370, %v5061
        %v5388 = vsel %vm5379, %v5371, %v5063
        %v5389 = vsel %vm5379, %v5372, %v5065
        %v5390 = vsel %vm5379, %v5373, %v5067
        %v5391 = vsel %vm5379, %v5374, %v5069
        %v5392 = vsel %vm5379, %v5375, %v5071
        %v5393 = vsel %vm5379, %v5376, %v5073
        %v5394 = vsel %vm5379, %v5377, %v5075
        %v5395 = vsel %vm5379, %v5378, %v5077
        %vm5396 = vcmask 244736
        %v5397 = vsel %vm5396, %v5380, %v5111
        %v5398 = vsel %vm5396, %v5381, %v5113
        %v5399 = vsel %vm5396, %v5382, %v5115
        %v5400 = vsel %vm5396, %v5383, %v5117
        %v5401 = vsel %vm5396, %v5384, %v5119
        %v5402 = vsel %vm5396, %v5385, %v5121
        %v5403 = vsel %vm5396, %v5386, %v5123
        %v5404 = vsel %vm5396, %v5387, %v5125
        %v5405 = vsel %vm5396, %v5388, %v5127
        %v5406 = vsel %vm5396, %v5389, %v5129
        %v5407 = vsel %vm5396, %v5390, %v5131
        %v5408 = vsel %vm5396, %v5391, %v5133
        %v5409 = vsel %vm5396, %v5392, %v5135
        %v5410 = vsel %vm5396, %v5393, %v5137
        %v5411 = vsel %vm5396, %v5394, %v5139
        %v5412 = vsel %vm5396, %v5395, %v5141
        %vm5413 = vcmask 261120
        %5414 = vst.msk [vmem:[%s153] sm:$0xff] %vm5413, %v5397
        %5415 = vst.msk [vmem:[%s153 + $0x8] sm:$0xff] %vm5413, %v5398
        %5416 = vst.msk [vmem:[%s153 + $0x10] sm:$0xff] %vm5413, %v5399
        %5417 = vst.msk [vmem:[%s153 + $0x18] sm:$0xff] %vm5413, %v5400
        %5418 = vst.msk [vmem:[%s153 + $0x20] sm:$0xff] %vm5413, %v5401
        %5419 = vst.msk [vmem:[%s153 + $0x28] sm:$0xff] %vm5413, %v5402
        %5420 = vst.msk [vmem:[%s153 + $0x30] sm:$0xff] %vm5413, %v5403
        %5421 = vst.msk [vmem:[%s153 + $0x38] sm:$0xff] %vm5413, %v5404
        %5422 = vst.msk [vmem:[%s153 + $0x40] sm:$0xff] %vm5413, %v5405
        %5423 = vst.msk [vmem:[%s153 + $0x48] sm:$0xff] %vm5413, %v5406
        %5424 = vst.msk [vmem:[%s153 + $0x50] sm:$0xff] %vm5413, %v5407
        %5425 = vst.msk [vmem:[%s153 + $0x58] sm:$0xff] %vm5413, %v5408
        %5426 = vst.msk [vmem:[%s153 + $0x60] sm:$0xff] %vm5413, %v5409
        %5427 = vst.msk [vmem:[%s153 + $0x68] sm:$0xff] %vm5413, %v5410
        %5428 = vst.msk [vmem:[%s153 + $0x70] sm:$0xff] %vm5413, %v5411
        %5429 = vst.msk [vmem:[%s153 + $0x78] sm:$0xff] %vm5413, %v5412
        %s5430 = sand.u32 %s68, 1
        %s5431 = scalar_lea.sflag [#allocation4], %s5430
        %s5432 = sand.u32 %s68, 1
        %s5433 = smul.addr %s5432, 128
        %s5434 = scalar_lea.vmem [#allocation5], %s5433
        // Predicated region
        $region29: #{tpu_custom_call.1} parent=23 // pred_check
          %p5435 = pneg %p78
        $region30: #{tpu_custom_call.1} parent=23 // pred_check_branch
          %5437 = sbr.rel (%p5435) target = $region32
        $region31: #{tpu_custom_call.1} parent=23 // pred_region
          %s5438 = smul.u32 4, %s22
          %s5439 = smul.u32 4, %s23
          %s5441 = ssub.s32 2048, 2048
          %5442 = vsyncadd %s5431, %s5441
          %s5443 = smul.addr %s5438, 4
          %s5444 = sadd.s32 %s5439, %s5443
          %s5445 = smul.addr %s5444, 128
          %s5446 = scalar_lea.hbm %s1, %s5445
          %s5447 = sshll.u32 %s5434, 4
          %s5448 = int_to_ptr.vmem [resolvable:$true] %s5447
          %5453 = dma.vmem_to_hbm [thread:$0]  %s5448, 2048, %s5446, %s5431, 128, 128, 8
        $region32: #{tpu_custom_call.1} parent=23 // pred_fallthru
          _
      $region24: #{tpu_custom_call.1} parent=5 // pred_fallthru
        _
      %p5454 = scmp.le.s32.totalorder 2, %s13
      // Predicated region
      $region33: #{tpu_custom_call.1} parent=5 // pred_check
        %p5455 = pneg %p5454
      $region34: #{tpu_custom_call.1} parent=5 // pred_check_branch
        %5457 = sbr.rel (%p5455) target = $region36
      $region35: #{tpu_custom_call.1} parent=5 // pred_region
        %s5458 = ssub.s32 %s13, 2
        // Predicated region
        $region37: #{tpu_custom_call.1} parent=35 // pred_check
          %p5459 = pneg %p84
        $region38: #{tpu_custom_call.1} parent=35 // pred_check_branch
          %5461 = sbr.rel (%p5459) target = $region40
        $region39: #{tpu_custom_call.1} parent=35 // pred_region
          %s5462 = sand.u32 %s69, 1
          %s5463 = scalar_lea.sflag [#allocation4], %s5462
          %s5464 = sand.u32 %s69, 1
          %s5465 = smul.addr %s5464, 128
          %s5466 = scalar_lea.vmem [#allocation5], %s5465
          %5467 = dma.done %s5463, 2048
        $region40: #{tpu_custom_call.1} parent=35 // pred_fallthru
          _
      $region36: #{tpu_custom_call.1} parent=5 // pred_fallthru
        _
    $region6: #{tpu_custom_call.1} parent=1 // loop_footer
      %s17 = sadd.s32 1, %s13
    $region7: #{tpu_custom_call.1} parent=1 // loop_footer_branch
      %12 = sbr.rel target = $region3
    $region8: #{tpu_custom_call.1} parent=1 // loop_exit
      _
    %5468 = vsyncpa [#allocation3], 1
    %s5469 = scalar_lea.sflag [#allocation3], 1
    %5470 = vsyncpa %s5469, 1
    %5471 = vsyncpa [#allocation4], 1
    %s5472 = scalar_lea.sflag [#allocation4], 1
    %5473 = vsyncpa %s5472, 1

</llo_original>
